<compile_context>
chip_gen: v5e
topology: v5e:2x2
jax: 0.10.0
libtpu: 0.0.40
codegen_flags: <defaults>
</compile_context>

<pallas_src>
import functools

import jax
import jax.numpy as jnp
from jax import lax
from jax.experimental import pallas as pl
from jax.experimental.pallas import tpu as pltpu


# ----------------------------------------------------------------------------
# Fused preprocessing: bilinear upsample (align_corners=False, matching
# torch.nn.Upsample) + ReflectionPad2d + NCHW->NHWC + per-row-tile halo layout,
# emitted in a single gather pass as (N*HT, TILE_H_IN, WP_T, Cin).
# ----------------------------------------------------------------------------
def _bilinear_src_indices(padded_idx, pad, in_size, up_size):
    """Padded-upsampled index -> (lo, hi, frac) source indices of the original axis."""
    o = padded_idx - pad
    # ReflectionPad2d
    o = jnp.where(o < 0, -o, o)
    o = jnp.where(o >= up_size, 2 * (up_size - 1) - o, o)
    # torch.nn.Upsample(mode='bilinear', align_corners=False)
    pos = (o.astype(jnp.float32) + 0.5) * (in_size / up_size) - 0.5
    pos = jnp.maximum(pos, 0.0)
    lo = jnp.minimum(jnp.floor(pos).astype(jnp.int32), in_size - 1)
    hi = jnp.minimum(lo + 1, in_size - 1)
    frac = pos - lo.astype(jnp.float32)
    return lo, hi, frac


def _build_input_tiles(x_nchw, scale, pad, kh, kw, stride, tile_h, ho, wo, compute_dtype):
    n, c, h, w = x_nchw.shape
    hu, wu = h * scale, w * scale
    ht = ho // tile_h
    th_in = (tile_h - 1) * stride + kh          # input rows per tile (incl. halo)
    wp_t = (wo - 1) * stride + kw               # input cols actually consumed by the conv

    # One small transpose of the *pre-upsample* tensor; everything after is NHWC.
    x_nhwc = jnp.transpose(x_nchw, (0, 2, 3, 1))

    rows = (jnp.arange(ht, dtype=jnp.int32) * (tile_h * stride))[:, None] + \
        jnp.arange(th_in, dtype=jnp.int32)[None, :]                       # (HT, TH_IN)
    cols = jnp.arange(wp_t, dtype=jnp.int32)                              # (WP_T,)

    h0, h1, fh = _bilinear_src_indices(rows, pad, h, hu)
    w0, w1, fw = _bilinear_src_indices(cols, pad, w, wu)

    top = jnp.take(x_nhwc, h0, axis=1)                                    # (N, HT, TH_IN, W, C)
    bot = jnp.take(x_nhwc, h1, axis=1)
    fh_b = fh[None, :, :, None, None]
    rows_v = top * (1.0 - fh_b) + bot * fh_b

    left = jnp.take(rows_v, w0, axis=3)                                   # (N, HT, TH_IN, WP_T, C)
    right = jnp.take(rows_v, w1, axis=3)
    fw_b = fw[None, None, None, :, None]
    tiles = left * (1.0 - fw_b) + right * fw_b

    return tiles.reshape(n * ht, th_in, wp_t, c).astype(compute_dtype)


# ----------------------------------------------------------------------------
# Pallas conv kernels (operate on one halo'd NHWC row-tile per grid step).
# ----------------------------------------------------------------------------
def _conv_tile_kernel_fused(x_ref, w_ref, b_ref, o_ref, *, kh, kw, th, wo, cin, stride):
    # x_ref: (1, TH_IN, WP_T, Cin)  halo'd input tile
    # w_ref: (KH*KW*Cin, Cout)      packed im2col weights
    # b_ref: (1, Cout)
    # o_ref: (1, Cout, TH*Wo)       NCHW output tile, lane-dense minor dim
    x = x_ref[0]
    taps = []
    for i in range(kh):
        for j in range(kw):
            if stride == 1:
                taps.append(x[i:i + th, j:j + wo, :])
            else:
                # TODO(synk): for stride > 1 the decimation should move into the
                # wrapper gather; in-kernel strided slicing is the simple path.
                taps.append(lax.slice(
                    x, (i, j, 0),
                    (i + (th - 1) * stride + 1, j + (wo - 1) * stride + 1, cin),
                    (stride, stride, 1)))
    patches = jnp.concatenate(taps, axis=-1)             # (TH, Wo, KH*KW*Cin)
    patches = patches.reshape(th * wo, kh * kw * cin)    # leading-dim collapse only
    acc = jnp.dot(patches, w_ref[...], preferred_element_type=jnp.float32)
    acc = acc + b_ref[...].astype(jnp.float32)           # (TH*Wo, Cout)
    o_ref[0] = jnp.transpose(acc).astype(o_ref.dtype)    # (Cout, TH*Wo)


def _conv_tile_kernel_compat(x_ref, w_ref, b_ref, o_ref, *, kh, kw, th, wo, cin, cout, stride):
    # Portability fallback: per-tap matmuls, NHWC-flat store.
    x = x_ref[0]
    acc = jnp.zeros((th * wo, cout), dtype=jnp.float32)
    for i in range(kh):
        for j in range(kw):
            if stride == 1:
                sl = x[i:i + th, j:j + wo, :]
            else:
                sl = lax.slice(
                    x, (i, j, 0),
                    (i + (th - 1) * stride + 1, j + (wo - 1) * stride + 1, cin),
                    (stride, stride, 1))
            t = i * kw + j
            acc = acc + jnp.dot(sl.reshape(th * wo, cin),
                                w_ref[t * cin:(t + 1) * cin, :],
                                preferred_element_type=jnp.float32)
    acc = acc + b_ref[...].astype(jnp.float32)
    o_ref[0] = acc.astype(o_ref.dtype)                   # (TH*Wo, Cout)


def _conv_tiles_pallas(x_tiles, w2d, bias2d, *, n, ht, kh, kw, stride, ho, wo, cout,
                       tile_h, fused):
    _, th_in, wp_t, cin = x_tiles.shape
    k = kh * kw * cin
    th = tile_h

    in_specs = [
        pl.BlockSpec((1, th_in, wp_t, cin), lambda b, h: (b * ht + h, 0, 0, 0)),
        pl.BlockSpec((k, cout), lambda b, h: (0, 0)),
        pl.BlockSpec((1, cout), lambda b, h: (0, 0)),
    ]

    if fused:
        kernel = functools.partial(_conv_tile_kernel_fused, kh=kh, kw=kw, th=th,
                                   wo=wo, cin=cin, stride=stride)
        out_shape = jax.ShapeDtypeStruct((n, cout, ho * wo), jnp.float32)
        out_specs = pl.BlockSpec((1, cout, th * wo), lambda b, h: (b, 0, h))
    else:
        kernel = functools.partial(_conv_tile_kernel_compat, kh=kh, kw=kw, th=th,
                                   wo=wo, cin=cin, cout=cout, stride=stride)
        out_shape = jax.ShapeDtypeStruct((n, ho * wo, cout), jnp.float32)
        out_specs = pl.BlockSpec((1, th * wo, cout), lambda b, h: (b, h, 0))

    out = pl.pallas_call(
        kernel,
        out_shape=out_shape,
        grid_spec=pltpu.PrefetchScalarGridSpec(
            num_scalar_prefetch=0,
            grid=(n, ht),
            in_specs=in_specs,
            out_specs=out_specs,
        ),
        compiler_params=pltpu.CompilerParams(
            dimension_semantics=("parallel", "parallel"),
            vmem_limit_bytes=32 * 1024 * 1024,
        ),
    )(x_tiles, w2d, bias2d)

    if fused:
        return out.reshape(n, cout, ho, wo)                          # already NCHW
    return jnp.transpose(out.reshape(n, ho, wo, cout), (0, 3, 1, 2))


def _choose_tile_h(ho, wo, kh, kw, wp_t, cin, cout, itemsize, stride,
                   max_tile_h=None, vmem_budget_bytes=12 * 1024 * 1024):
    """Largest legal H tile whose double-buffered footprint fits the VMEM budget.

    The default 12 MiB budget is v7x-safe (64 MiB physical / 32 MiB scoped); on
    v6e/v5e (128 MiB VMEM) a larger budget can be passed to the layer.
    """
    cands = [t for t in range(8, ho + 1, 8)
             if ho % t == 0 and (t * wo) % 128 == 0]
    if ho not in cands:
        cands.append(ho)     # whole-image tile is always layout-legal
    if max_tile_h is not None:
        limited = [t for t in cands if t <= max_tile_h]
        if limited:
            cands = limited

    def footprint(t):
        th_in = (t - 1) * stride + kh
        m = t * wo
        in_b = th_in * wp_t * cin * itemsize
        out_b = m * cout * 4
        patches_b = m * kh * kw * cin * itemsize
        acc_b = m * max(cout, 128) * 4
        # 2x input/output double buffering + in-kernel temporaries.
        return 2 * (in_b + out_b) + patches_b + 2 * acc_b

    for t in sorted(cands, reverse=True):
        if footprint(t) <= vmem_budget_bytes:
            return t
    return min(cands)


# ----------------------------------------------------------------------------
# Module equivalent
# ----------------------------------------------------------------------------
class UpsampleConvLayerPallas:
    """JAX/Pallas equivalent of UpsampleConvLayer. Input/output are NCHW float32."""

    def __init__(self, in_channels, out_channels, kernel_size, stride, upsample=None,
                 *, key=None, compute_dtype=jnp.float32, max_tile_h=None,
                 vmem_budget_bytes=12 * 1024 * 1024):
        self.in_channels = in_channels
        self.out_channels = out_channels
        self.kernel_size = kernel_size
        self.stride = stride
        self.upsample = upsample
        self.reflection_padding = kernel_size // 2
        self.compute_dtype = compute_dtype
        self.max_tile_h = max_tile_h
        self.vmem_budget_bytes = vmem_budget_bytes

        if key is None:
            key = jax.random.PRNGKey(0)
        k_w, k_b = jax.random.split(key)
        fan_in = in_channels * kernel_size * kernel_size
        bound = 1.0 / float(fan_in) ** 0.5
        # PyTorch Conv2d layout (Cout, Cin, KH, KW), kept in f32 for reference use.
        self.w_oihw = jax.random.uniform(
            k_w, (out_channels, in_channels, kernel_size, kernel_size),
            minval=-bound, maxval=bound, dtype=jnp.float32)
        self.bias = jax.random.uniform(
            k_b, (out_channels,), minval=-bound, maxval=bound, dtype=jnp.float32)
        # Packed (KH*KW*Cin, Cout) weight matching the kernel's im2col tap ordering.
        self.w2d = jnp.transpose(self.w_oihw, (2, 3, 1, 0)).reshape(
            kernel_size * kernel_size * in_channels, out_channels).astype(compute_dtype)
        self.bias2d = self.bias.reshape(1, out_channels)

    def __call__(self, x):
        n, cin, h, w = x.shape
        assert cin == self.in_channels
        s = int(self.upsample) if self.upsample else 1
        p = self.reflection_padding
        kh = kw = self.kernel_size
        stride = self.stride
        hu, wu = h * s, w * s
        hp, wp = hu + 2 * p, wu + 2 * p
        ho = (hp - kh) // stride + 1
        wo = (wp - kw) // stride + 1
        wp_t = (wo - 1) * stride + kw
        itemsize = jnp.dtype(self.compute_dtype).itemsize

        tile_h = _choose_tile_h(ho, wo, kh, kw, wp_t, cin, self.out_channels,
                                itemsize, stride, self.max_tile_h,
                                self.vmem_budget_bytes)
        assert ho % tile_h == 0
        ht = ho // tile_h

        x_tiles = _build_input_tiles(x, s, p, kh, kw, stride, tile_h, ho, wo,
                                     self.compute_dtype)

        kwargs = dict(n=n, ht=ht, kh=kh, kw=kw, stride=stride, ho=ho, wo=wo,
                      cout=self.out_channels, tile_h=tile_h)
        try:
            return _conv_tiles_pallas(x_tiles, self.w2d, self.bias2d, fused=True, **kwargs)
        except Exception:
            # Portability fallback (older Mosaic: minor-dim concat / 2-D transpose).
            return _conv_tiles_pallas(x_tiles, self.w2d, self.bias2d, fused=False, **kwargs)


# ----------------------------------------------------------------------------
# Test-only reference path (independent of the fused gather / Pallas kernel).
# ----------------------------------------------------------------------------
def _reference_bilinear_upsample_nchw(x, scale):
    n, c, h, w = x.shape
    ho, wo = int(h * scale), int(w * scale)

    def coords(out_size, in_size):
        idx = (jnp.arange(out_size, dtype=jnp.float32) + 0.5) * (in_size / out_size) - 0.5
        idx = jnp.maximum(idx, 0.0)
        i0 = jnp.minimum(jnp.floor(idx).astype(jnp.int32), in_size - 1)
        i1 = jnp.minimum(i0 + 1, in_size - 1)
        frac = idx - i0.astype(jnp.float32)
        return i0, i1, frac

    h0, h1, fh = coords(ho, h)
    w0, w1, fw = coords(wo, w)
    top = x[:, :, h0, :]
    bot = x[:, :, h1, :]
    rows = top * (1.0 - fh)[None, None, :, None] + bot * fh[None, None, :, None]
    left = rows[:, :, :, w0]
    right = rows[:, :, :, w1]
    return left * (1.0 - fw) + right * fw


def _reference_forward(x, layer, scale):
    x_in = _reference_bilinear_upsample_nchw(x, scale) if scale and scale != 1 else x
    p = layer.reflection_padding
    x_pad = jnp.pad(x_in, ((0, 0), (0, 0), (p, p), (p, p)), mode="reflect")
    out = lax.conv_general_dilated(
        x_pad, layer.w_oihw, (layer.stride, layer.stride), "VALID",
        dimension_numbers=("NCHW", "OIHW", "NCHW"))
    return out + layer.bias[None, :, None, None]


if __name__ == "__main__":
    key = jax.random.PRNGKey(0)
    k_x, k_p = jax.random.split(key)
    x = jax.random.normal(k_x, (2, 4, 16, 16), dtype=jnp.float32)

    # f32 path, forced multi-tile (2 row tiles of the 32-row output -> halo exercised).
    layer = UpsampleConvLayerPallas(4, 8, 3, 1, upsample=2, key=k_p, max_tile_h=16)
    out = jax.block_until_ready(layer(x))
    assert out.shape == (2, 8, 32, 32), out.shape
    assert bool(jnp.isfinite(out).all())

    ref = _reference_forward(x, layer, 2)
    assert jnp.allclose(out, ref, atol=2e-4, rtol=2e-4), float(jnp.abs(out - ref).max())

    # bf16-compute path (f32 accumulation), same parameters / same key.
    layer_bf16 = UpsampleConvLayerPallas(4, 8, 3, 1, upsample=2, key=k_p,
                                         compute_dtype=jnp.bfloat16, max_tile_h=16)
    out_bf16 = jax.block_until_ready(layer_bf16(x))
    assert out_bf16.shape == (2, 8, 32, 32)
    assert jnp.allclose(out_bf16, ref, atol=1e-1, rtol=1e-1)

    # No-upsample configuration (reflection pad + conv only), single-tile path.
    layer_nu = UpsampleConvLayerPallas(4, 8, 3, 1, upsample=None, key=k_p)
    out_nu = jax.block_until_ready(layer_nu(x))
    assert out_nu.shape == (2, 8, 16, 16), out_nu.shape
    ref_nu = _reference_forward(x, layer_nu, None)
    assert jnp.allclose(out_nu, ref_nu, atol=2e-4, rtol=2e-4)

    print("KERNEL_OK")
</pallas_src>

<mosaic_0001>
module attributes {stable_mosaic.version = 11 : i64} {
  func.func @_conv_tile_kernel_fused(%arg0: i32, %arg1: i32, %arg2: memref<1x18x34x4xf32, #tpu.memory_space<vmem>>, %arg3: memref<36x8xf32, #tpu.memory_space<vmem>>, %arg4: memref<1x8xf32, #tpu.memory_space<vmem>>, %arg5: memref<1x8x512xf32, #tpu.memory_space<vmem>>) attributes {dimension_semantics = [#tpu.dimension_semantics<parallel>, #tpu.dimension_semantics<parallel>], iteration_bounds = array<i64: 2, 2>, scalar_prefetch = 0 : i64, scratch_operands = 0 : i64, tpu.core_type = #tpu.core_type<tc>, window_params = [{transform_indices = @transform_0, window_bounds = array<i64: 1, 18, 34, 4>}, {pipeline_mode = #tpu.pipeline_mode<synchronous>, transform_indices = @transform_1, window_bounds = array<i64: 36, 8>}, {pipeline_mode = #tpu.pipeline_mode<synchronous>, transform_indices = @transform_2, window_bounds = array<i64: 1, 8>}, {transform_indices = @transform_3, window_bounds = array<i64: 1, 8, 512>}]} {
    %c0 = arith.constant 0 : index
    %c0_0 = arith.constant 0 : index
    %c0_1 = arith.constant 0 : index
    %c0_2 = arith.constant 0 : index
    %0 = vector.load %arg2[%c0, %c0_0, %c0_1, %c0_2] : memref<1x18x34x4xf32, #tpu.memory_space<vmem>>, vector<1x18x34x4xf32>
    %1 = vector.shape_cast %0 : vector<1x18x34x4xf32> to vector<18x34x4xf32>
    %2 = vector.extract_strided_slice %1 {offsets = [0, 0, 0], sizes = [16, 32, 4], strides = [1, 1, 1]} : vector<18x34x4xf32> to vector<16x32x4xf32>
    %3 = vector.extract_strided_slice %1 {offsets = [0, 1, 0], sizes = [16, 32, 4], strides = [1, 1, 1]} : vector<18x34x4xf32> to vector<16x32x4xf32>
    %4 = vector.extract_strided_slice %1 {offsets = [0, 2, 0], sizes = [16, 32, 4], strides = [1, 1, 1]} : vector<18x34x4xf32> to vector<16x32x4xf32>
    %5 = vector.extract_strided_slice %1 {offsets = [1, 0, 0], sizes = [16, 32, 4], strides = [1, 1, 1]} : vector<18x34x4xf32> to vector<16x32x4xf32>
    %6 = vector.extract_strided_slice %1 {offsets = [1, 1, 0], sizes = [16, 32, 4], strides = [1, 1, 1]} : vector<18x34x4xf32> to vector<16x32x4xf32>
    %7 = vector.extract_strided_slice %1 {offsets = [1, 2, 0], sizes = [16, 32, 4], strides = [1, 1, 1]} : vector<18x34x4xf32> to vector<16x32x4xf32>
    %8 = vector.extract_strided_slice %1 {offsets = [2, 0, 0], sizes = [16, 32, 4], strides = [1, 1, 1]} : vector<18x34x4xf32> to vector<16x32x4xf32>
    %9 = vector.extract_strided_slice %1 {offsets = [2, 1, 0], sizes = [16, 32, 4], strides = [1, 1, 1]} : vector<18x34x4xf32> to vector<16x32x4xf32>
    %10 = vector.extract_strided_slice %1 {offsets = [2, 2, 0], sizes = [16, 32, 4], strides = [1, 1, 1]} : vector<18x34x4xf32> to vector<16x32x4xf32>
    %11 = tpu.concatenate %2, %3, %4, %5, %6, %7, %8, %9, %10 in 2 : vector<16x32x4xf32>, vector<16x32x4xf32>, vector<16x32x4xf32>, vector<16x32x4xf32>, vector<16x32x4xf32>, vector<16x32x4xf32>, vector<16x32x4xf32>, vector<16x32x4xf32>, vector<16x32x4xf32> -> vector<16x32x36xf32>
    %12 = vector.shape_cast %11 : vector<16x32x36xf32> to vector<512x36xf32>
    %c0_3 = arith.constant 0 : index
    %c0_4 = arith.constant 0 : index
    %13 = vector.load %arg3[%c0_3, %c0_4] : memref<36x8xf32, #tpu.memory_space<vmem>>, vector<36x8xf32>
    %cst = arith.constant dense<0.000000e+00> : vector<512x8xf32>
    %14 = tpu.matmul %12, %13, %cst {dimension_numbers = #tpu.dot_dimension_numbers<[1], [0], [0], [1], [0, 0, 1, 1], [], []>} : vector<512x36xf32>, vector<36x8xf32>, vector<512x8xf32> -> vector<512x8xf32>
    %c0_5 = arith.constant 0 : index
    %c0_6 = arith.constant 0 : index
    %15 = vector.load %arg4[%c0_5, %c0_6] : memref<1x8xf32, #tpu.memory_space<vmem>>, vector<1x8xf32>
    %16 = vector.broadcast %15 : vector<1x8xf32> to vector<512x8xf32>
    %17 = arith.addf %14, %16 : vector<512x8xf32>
    %18 = tpu.transpose %17, [1, 0] : vector<512x8xf32> -> vector<8x512xf32>
    %c0_7 = arith.constant 0 : index
    %c0_8 = arith.constant 0 : index
    %c0_9 = arith.constant 0 : index
    %19 = vector.load %arg5[%c0_7, %c0_8, %c0_9] : memref<1x8x512xf32, #tpu.memory_space<vmem>>, vector<1x8x512xf32>
    %20 = vector.shape_cast %19 : vector<1x8x512xf32> to vector<8x512xf32>
    %21 = vector.shape_cast %18 : vector<8x512xf32> to vector<1x8x512xf32>
    tpu.vector_store %arg5[%c0_7, %c0_8, %c0_9], %21 {strides = array<i32>} : memref<1x8x512xf32, #tpu.memory_space<vmem>>, vector<1x8x512xf32>,
    return
  }
  func.func @transform_0(%arg0: i32, %arg1: i32) -> (i32, i32, i32, i32) {
    %c2_i32 = arith.constant 2 : i32
    %0 = arith.muli %arg0, %c2_i32 : i32
    %1 = arith.addi %0, %arg1 : i32
    %c0_i32 = arith.constant 0 : i32
    %c0_i32_0 = arith.constant 0 : i32
    %c0_i32_1 = arith.constant 0 : i32
    %c0_i32_2 = arith.constant 0 : i32
    return %1, %c0_i32, %c0_i32_0, %c0_i32_1 : i32, i32, i32, i32
  }
  func.func @transform_1(%arg0: i32, %arg1: i32) -> (i32, i32) {
    %c0_i32 = arith.constant 0 : i32
    %c0_i32_0 = arith.constant 0 : i32
    %c0_i32_1 = arith.constant 0 : i32
    return %c0_i32, %c0_i32_0 : i32, i32
  }
  func.func @transform_2(%arg0: i32, %arg1: i32) -> (i32, i32) {
    %c0_i32 = arith.constant 0 : i32
    %c0_i32_0 = arith.constant 0 : i32
    %c0_i32_1 = arith.constant 0 : i32
    return %c0_i32, %c0_i32_0 : i32, i32
  }
  func.func @transform_3(%arg0: i32, %arg1: i32) -> (i32, i32, i32) {
    %c0_i32 = arith.constant 0 : i32
    %c0_i32_0 = arith.constant 0 : i32
    return %arg0, %c0_i32, %arg1 : i32, i32, i32
  }
}

module attributes {stable_mosaic.version = 11 : i64} {
  func.func @_conv_tile_kernel_compat(%arg0: i32, %arg1: i32, %arg2: memref<1x18x34x4xf32, #tpu.memory_space<vmem>>, %arg3: memref<36x8xf32, #tpu.memory_space<vmem>>, %arg4: memref<1x8xf32, #tpu.memory_space<vmem>>, %arg5: memref<1x512x8xf32, #tpu.memory_space<vmem>>) attributes {dimension_semantics = [#tpu.dimension_semantics<parallel>, #tpu.dimension_semantics<parallel>], iteration_bounds = array<i64: 2, 2>, scalar_prefetch = 0 : i64, scratch_operands = 0 : i64, tpu.core_type = #tpu.core_type<tc>, window_params = [{transform_indices = @transform_0, window_bounds = array<i64: 1, 18, 34, 4>}, {pipeline_mode = #tpu.pipeline_mode<synchronous>, transform_indices = @transform_1, window_bounds = array<i64: 36, 8>}, {pipeline_mode = #tpu.pipeline_mode<synchronous>, transform_indices = @transform_2, window_bounds = array<i64: 1, 8>}, {transform_indices = @transform_3, window_bounds = array<i64: 1, 512, 8>}]} {
    %c0 = arith.constant 0 : index
    %c0_0 = arith.constant 0 : index
    %c0_1 = arith.constant 0 : index
    %c0_2 = arith.constant 0 : index
    %0 = vector.load %arg2[%c0, %c0_0, %c0_1, %c0_2] : memref<1x18x34x4xf32, #tpu.memory_space<vmem>>, vector<1x18x34x4xf32>
    %1 = vector.shape_cast %0 : vector<1x18x34x4xf32> to vector<18x34x4xf32>
    %cst = arith.constant 0.000000e+00 : f32
    %2 = vector.broadcast %cst : f32 to vector<512x8xf32>
    %3 = vector.extract_strided_slice %1 {offsets = [0, 0, 0], sizes = [16, 32, 4], strides = [1, 1, 1]} : vector<18x34x4xf32> to vector<16x32x4xf32>
    %4 = vector.shape_cast %3 : vector<16x32x4xf32> to vector<512x4xf32>
    %c0_3 = arith.constant 0 : index
    %c0_4 = arith.constant 0 : index
    %5 = vector.load %arg3[%c0_3, %c0_4] : memref<36x8xf32, #tpu.memory_space<vmem>>, vector<4x8xf32>
    %cst_5 = arith.constant dense<0.000000e+00> : vector<512x8xf32>
    %6 = tpu.matmul %4, %5, %cst_5 {dimension_numbers = #tpu.dot_dimension_numbers<[1], [0], [0], [1], [0, 0, 1, 1], [], []>} : vector<512x4xf32>, vector<4x8xf32>, vector<512x8xf32> -> vector<512x8xf32>
    %7 = arith.addf %2, %6 : vector<512x8xf32>
    %8 = vector.extract_strided_slice %1 {offsets = [0, 1, 0], sizes = [16, 32, 4], strides = [1, 1, 1]} : vector<18x34x4xf32> to vector<16x32x4xf32>
    %9 = vector.shape_cast %8 : vector<16x32x4xf32> to vector<512x4xf32>
    %c4 = arith.constant 4 : index
    %c0_6 = arith.constant 0 : index
    %10 = vector.load %arg3[%c4, %c0_6] : memref<36x8xf32, #tpu.memory_space<vmem>>, vector<4x8xf32>
    %cst_7 = arith.constant dense<0.000000e+00> : vector<512x8xf32>
    %11 = tpu.matmul %9, %10, %cst_7 {dimension_numbers = #tpu.dot_dimension_numbers<[1], [0], [0], [1], [0, 0, 1, 1], [], []>} : vector<512x4xf32>, vector<4x8xf32>, vector<512x8xf32> -> vector<512x8xf32>
    %12 = arith.addf %7, %11 : vector<512x8xf32>
    %13 = vector.extract_strided_slice %1 {offsets = [0, 2, 0], sizes = [16, 32, 4], strides = [1, 1, 1]} : vector<18x34x4xf32> to vector<16x32x4xf32>
    %14 = vector.shape_cast %13 : vector<16x32x4xf32> to vector<512x4xf32>
    %c8 = arith.constant 8 : index
    %c0_8 = arith.constant 0 : index
    %15 = vector.load %arg3[%c8, %c0_8] : memref<36x8xf32, #tpu.memory_space<vmem>>, vector<4x8xf32>
    %cst_9 = arith.constant dense<0.000000e+00> : vector<512x8xf32>
    %16 = tpu.matmul %14, %15, %cst_9 {dimension_numbers = #tpu.dot_dimension_numbers<[1], [0], [0], [1], [0, 0, 1, 1], [], []>} : vector<512x4xf32>, vector<4x8xf32>, vector<512x8xf32> -> vector<512x8xf32>
    %17 = arith.addf %12, %16 : vector<512x8xf32>
    %18 = vector.extract_strided_slice %1 {offsets = [1, 0, 0], sizes = [16, 32, 4], strides = [1, 1, 1]} : vector<18x34x4xf32> to vector<16x32x4xf32>
    %19 = vector.shape_cast %18 : vector<16x32x4xf32> to vector<512x4xf32>
    %c12 = arith.constant 12 : index
    %c0_10 = arith.constant 0 : index
    %20 = vector.load %arg3[%c12, %c0_10] : memref<36x8xf32, #tpu.memory_space<vmem>>, vector<4x8xf32>
    %cst_11 = arith.constant dense<0.000000e+00> : vector<512x8xf32>
    %21 = tpu.matmul %19, %20, %cst_11 {dimension_numbers = #tpu.dot_dimension_numbers<[1], [0], [0], [1], [0, 0, 1, 1], [], []>} : vector<512x4xf32>, vector<4x8xf32>, vector<512x8xf32> -> vector<512x8xf32>
    %22 = arith.addf %17, %21 : vector<512x8xf32>
    %23 = vector.extract_strided_slice %1 {offsets = [1, 1, 0], sizes = [16, 32, 4], strides = [1, 1, 1]} : vector<18x34x4xf32> to vector<16x32x4xf32>
    %24 = vector.shape_cast %23 : vector<16x32x4xf32> to vector<512x4xf32>
    %c16 = arith.constant 16 : index
    %c0_12 = arith.constant 0 : index
    %25 = vector.load %arg3[%c16, %c0_12] : memref<36x8xf32, #tpu.memory_space<vmem>>, vector<4x8xf32>
    %cst_13 = arith.constant dense<0.000000e+00> : vector<512x8xf32>
    %26 = tpu.matmul %24, %25, %cst_13 {dimension_numbers = #tpu.dot_dimension_numbers<[1], [0], [0], [1], [0, 0, 1, 1], [], []>} : vector<512x4xf32>, vector<4x8xf32>, vector<512x8xf32> -> vector<512x8xf32>
    %27 = arith.addf %22, %26 : vector<512x8xf32>
    %28 = vector.extract_strided_slice %1 {offsets = [1, 2, 0], sizes = [16, 32, 4], strides = [1, 1, 1]} : vector<18x34x4xf32> to vector<16x32x4xf32>
    %29 = vector.shape_cast %28 : vector<16x32x4xf32> to vector<512x4xf32>
    %c20 = arith.constant 20 : index
    %c0_14 = arith.constant 0 : index
    %30 = vector.load %arg3[%c20, %c0_14] : memref<36x8xf32, #tpu.memory_space<vmem>>, vector<4x8xf32>
    %cst_15 = arith.constant dense<0.000000e+00> : vector<512x8xf32>
    %31 = tpu.matmul %29, %30, %cst_15 {dimension_numbers = #tpu.dot_dimension_numbers<[1], [0], [0], [1], [0, 0, 1, 1], [], []>} : vector<512x4xf32>, vector<4x8xf32>, vector<512x8xf32> -> vector<512x8xf32>
    %32 = arith.addf %27, %31 : vector<512x8xf32>
    %33 = vector.extract_strided_slice %1 {offsets = [2, 0, 0], sizes = [16, 32, 4], strides = [1, 1, 1]} : vector<18x34x4xf32> to vector<16x32x4xf32>
    %34 = vector.shape_cast %33 : vector<16x32x4xf32> to vector<512x4xf32>
    %c24 = arith.constant 24 : index
    %c0_16 = arith.constant 0 : index
    %35 = vector.load %arg3[%c24, %c0_16] : memref<36x8xf32, #tpu.memory_space<vmem>>, vector<4x8xf32>
    %cst_17 = arith.constant dense<0.000000e+00> : vector<512x8xf32>
    %36 = tpu.matmul %34, %35, %cst_17 {dimension_numbers = #tpu.dot_dimension_numbers<[1], [0], [0], [1], [0, 0, 1, 1], [], []>} : vector<512x4xf32>, vector<4x8xf32>, vector<512x8xf32> -> vector<512x8xf32>
    %37 = arith.addf %32, %36 : vector<512x8xf32>
    %38 = vector.extract_strided_slice %1 {offsets = [2, 1, 0], sizes = [16, 32, 4], strides = [1, 1, 1]} : vector<18x34x4xf32> to vector<16x32x4xf32>
    %39 = vector.shape_cast %38 : vector<16x32x4xf32> to vector<512x4xf32>
    %c28 = arith.constant 28 : index
    %c0_18 = arith.constant 0 : index
    %40 = vector.load %arg3[%c28, %c0_18] : memref<36x8xf32, #tpu.memory_space<vmem>>, vector<4x8xf32>
    %cst_19 = arith.constant dense<0.000000e+00> : vector<512x8xf32>
    %41 = tpu.matmul %39, %40, %cst_19 {dimension_numbers = #tpu.dot_dimension_numbers<[1], [0], [0], [1], [0, 0, 1, 1], [], []>} : vector<512x4xf32>, vector<4x8xf32>, vector<512x8xf32> -> vector<512x8xf32>
    %42 = arith.addf %37, %41 : vector<512x8xf32>
    %43 = vector.extract_strided_slice %1 {offsets = [2, 2, 0], sizes = [16, 32, 4], strides = [1, 1, 1]} : vector<18x34x4xf32> to vector<16x32x4xf32>
    %44 = vector.shape_cast %43 : vector<16x32x4xf32> to vector<512x4xf32>
    %c32 = arith.constant 32 : index
    %c0_20 = arith.constant 0 : index
    %45 = vector.load %arg3[%c32, %c0_20] : memref<36x8xf32, #tpu.memory_space<vmem>>, vector<4x8xf32>
    %cst_21 = arith.constant dense<0.000000e+00> : vector<512x8xf32>
    %46 = tpu.matmul %44, %45, %cst_21 {dimension_numbers = #tpu.dot_dimension_numbers<[1], [0], [0], [1], [0, 0, 1, 1], [], []>} : vector<512x4xf32>, vector<4x8xf32>, vector<512x8xf32> -> vector<512x8xf32>
    %47 = arith.addf %42, %46 : vector<512x8xf32>
    %c0_22 = arith.constant 0 : index
    %c0_23 = arith.constant 0 : index
    %48 = vector.load %arg4[%c0_22, %c0_23] : memref<1x8xf32, #tpu.memory_space<vmem>>, vector<1x8xf32>
    %49 = vector.broadcast %48 : vector<1x8xf32> to vector<512x8xf32>
    %50 = arith.addf %47, %49 : vector<512x8xf32>
    %c0_24 = arith.constant 0 : index
    %c0_25 = arith.constant 0 : index
    %c0_26 = arith.constant 0 : index
    %51 = vector.load %arg5[%c0_24, %c0_25, %c0_26] : memref<1x512x8xf32, #tpu.memory_space<vmem>>, vector<1x512x8xf32>
    %52 = vector.shape_cast %51 : vector<1x512x8xf32> to vector<512x8xf32>
    %53 = vector.shape_cast %50 : vector<512x8xf32> to vector<1x512x8xf32>
    tpu.vector_store %arg5[%c0_24, %c0_25, %c0_26], %53 {strides = array<i32>} : memref<1x512x8xf32, #tpu.memory_space<vmem>>, vector<1x512x8xf32>,
    return
  }
  func.func @transform_0(%arg0: i32, %arg1: i32) -> (i32, i32, i32, i32) {
    %c2_i32 = arith.constant 2 : i32
    %0 = arith.muli %arg0, %c2_i32 : i32
    %1 = arith.addi %0, %arg1 : i32
    %c0_i32 = arith.constant 0 : i32
    %c0_i32_0 = arith.constant 0 : i32
    %c0_i32_1 = arith.constant 0 : i32
    %c0_i32_2 = arith.constant 0 : i32
    return %1, %c0_i32, %c0_i32_0, %c0_i32_1 : i32, i32, i32, i32
  }
  func.func @transform_1(%arg0: i32, %arg1: i32) -> (i32, i32) {
    %c0_i32 = arith.constant 0 : i32
    %c0_i32_0 = arith.constant 0 : i32
    %c0_i32_1 = arith.constant 0 : i32
    return %c0_i32, %c0_i32_0 : i32, i32
  }
  func.func @transform_2(%arg0: i32, %arg1: i32) -> (i32, i32) {
    %c0_i32 = arith.constant 0 : i32
    %c0_i32_0 = arith.constant 0 : i32
    %c0_i32_1 = arith.constant 0 : i32
    return %c0_i32, %c0_i32_0 : i32, i32
  }
  func.func @transform_3(%arg0: i32, %arg1: i32) -> (i32, i32, i32) {
    %c0_i32 = arith.constant 0 : i32
    %c0_i32_0 = arith.constant 0 : i32
    return %arg0, %arg1, %c0_i32 : i32, i32, i32
  }
}

</mosaic_0001>

<llo_original>
// kernel: tpu_custom_call.1
$region0: #{tpu_custom_call.1}
  #allocation0 [shape = 'u32[]', space=smem, size = 0x4, offset = 0x4, fixed_abs, tag = 'smem constant byte address 0x4 - core index']
  #allocation1 [shape = 'u32[72,128]{1,0:T(1,128)}', space=vmem, size = 0x9000, scoped, tag = 'internal scratch']
  %s0 = inlined_call_operand.vmem [shape: f32[4,18,34,4], index: 0, kind: input, shape index: {}]
  %s1 = inlined_call_operand.vmem [shape: f32[36,8], index: 1, kind: input, shape index: {}]
  %s2 = inlined_call_operand.vmem [shape: f32[1,8], index: 2, kind: input, shape index: {}]
  %s3 = inlined_call_operand.hbm [shape: f32[2,8,1024], index: 3, kind: output, shape index: {}]
  %s4 = sld [smem:[#allocation0]]
  $region45: #{tpu_custom_call.1} parent=0
    _
  %s6 = ssub.s32 1, %s4
  %s7 = scalar_select 0, %s6, %s4
  $region1: #{tpu_custom_call.1} parent=0
    #allocation2 [shape = 'u8[32768]{0}', space=vmem, size = 0x8000, scoped, tag = 'output window, operand 0']
    #allocation3 [shape = 's32[2]{0}', space=sflag, size = 0x8, scoped, tag = 'scoped memory for tpu_custom_call.1']
    %8 = vsyncpa [#allocation3], 0
    %s9 = scalar_lea.sflag [#allocation3], 1
    %10 = vsyncpa %s9, 0
    loop: start=0, step=1, limit=6
    $region2: #{tpu_custom_call.1} parent=1 // loop_pre_header
      _
    $region3: #{tpu_custom_call.1} parent=1 // loop_header
      %s12 = sphi 0, %s16
      %p13 = scmp.ge.s32.totalorder %s12, 6
      %s19 = sphi 0, %s31
      %s20 = sphi 0, %s27
      %s21 = sphi 0, %s19
      %s22 = sphi 0, %s20
      %s23 = sphi 0, %s21
      %s24 = sphi 0, %s22
      %s38 = sphi 0, %s40
      %s41 = sphi 0, %s38
      %s42 = sphi 0, %s41
      %s58 = sphi 0, %s42
      %s62 = sphi 0, %s62
      %s64 = sphi 0, %s62
      %s65 = sphi 0, %s64
      %s79 = sphi 0, %s65
      %s83 = sphi 0, %s83
      %s85 = sphi 0, %s83
      %s86 = sphi 0, %s85
      %s100 = sphi 0, %s86
      %s108 = sphi 0, %s110
      %s111 = sphi 0, %s108
      %s112 = sphi 0, %s111
      %s128 = sphi 0, %s112
    $region4: #{tpu_custom_call.1} parent=1 // loop_header_branch
      %15 = sbr.rel (%p13) target = $region8
    $region5: #{tpu_custom_call.1} parent=1 // loop_body
      %s17 = ssub.s32 %s12, 1
      %s18 = ssub.s32 %s12, 2
      %s25 = sadd.s32 1, %s20
      %p26 = scmp.ge.s32.totalorder %s25, 2
      %s27 = scalar_select %p26, 0, %s25
      %s28 = sadd.s32 1, %s19
      %s29 = scalar_select %p26, %s28, %s19
      %p30 = scmp.ge.s32.totalorder %s29, 2
      %s31 = scalar_select %p30, 0, %s29
      %s32 = smul.u32 %s19, 2
      %s33 = sadd.s32 %s32, %s20
      %s34 = smul.u32 %s31, 2
      %s35 = sadd.s32 %s34, %s27
      %s36 = ssub.s32 %s33, %s35
      %p37 = scmp.eq.s32.totalorder %s36, 0
      %s39 = sadd.s32 %s38, 1
      %s40 = scalar_select %p37, %s38, %s39
      %p43 = pneg %p37
      %p44 = scmp.eq.s32.totalorder %s12, 3
      %p45 = por %p43, %p44
      %p46 = scmp.ne.s32.totalorder %s38, %s41
      %p47 = scmp.eq.s32.totalorder %s12, 0
      %p48 = por %p46, %p47
      %p49 = scmp.ne.s32.totalorder %s38, %s41
      %p50 = scmp.eq.s32.totalorder %s17, 3
      %p51 = por %p49, %p50
      %p52 = scmp.ne.s32.totalorder %s41, %s42
      %p53 = scmp.eq.s32.totalorder %s17, 0
      %p54 = por %p52, %p53
      %p55 = scmp.ne.s32.totalorder %s41, %s42
      %p56 = scmp.eq.s32.totalorder %s18, 3
      %p57 = por %p55, %p56
      %p59 = scmp.ne.s32.totalorder %s42, %s58
      %p60 = scmp.eq.s32.totalorder %s18, 0
      %p61 = por %p59, %p60
      %s63 = sadd.s32 %s62, 1
      %p66 = scmp.eq.s32.totalorder %s12, 3
      %p67 = scmp.ne.s32.totalorder %s62, %s64
      %p68 = scmp.eq.s32.totalorder %s12, 0
      %p69 = por %p67, %p68
      %p70 = scmp.ne.s32.totalorder %s62, %s64
      %p71 = scmp.eq.s32.totalorder %s17, 3
      %p72 = por %p70, %p71
      %p73 = scmp.ne.s32.totalorder %s64, %s65
      %p74 = scmp.eq.s32.totalorder %s17, 0
      %p75 = por %p73, %p74
      %p76 = scmp.ne.s32.totalorder %s64, %s65
      %p77 = scmp.eq.s32.totalorder %s18, 3
      %p78 = por %p76, %p77
      %p80 = scmp.ne.s32.totalorder %s65, %s79
      %p81 = scmp.eq.s32.totalorder %s18, 0
      %p82 = por %p80, %p81
      %s84 = sadd.s32 %s83, 1
      %p87 = scmp.eq.s32.totalorder %s12, 3
      %p88 = scmp.ne.s32.totalorder %s83, %s85
      %p89 = scmp.eq.s32.totalorder %s12, 0
      %p90 = por %p88, %p89
      %p91 = scmp.ne.s32.totalorder %s83, %s85
      %p92 = scmp.eq.s32.totalorder %s17, 3
      %p93 = por %p91, %p92
      %p94 = scmp.ne.s32.totalorder %s85, %s86
      %p95 = scmp.eq.s32.totalorder %s17, 0
      %p96 = por %p94, %p95
      %p97 = scmp.ne.s32.totalorder %s85, %s86
      %p98 = scmp.eq.s32.totalorder %s18, 3
      %p99 = por %p97, %p98
      %p101 = scmp.ne.s32.totalorder %s86, %s100
      %p102 = scmp.eq.s32.totalorder %s18, 0
      %p103 = por %p101, %p102
      %s104 = ssub.s32 %s19, %s31
      %s105 = ssub.s32 %s20, %s27
      %s106 = sor.u32 %s104, %s105
      %p107 = scmp.eq.s32.totalorder %s106, 0
      %s109 = sadd.s32 %s108, 1
      %s110 = scalar_select %p107, %s108, %s109
      %p113 = pneg %p107
      %p114 = scmp.eq.s32.totalorder %s12, 3
      %p115 = por %p113, %p114
      %p116 = scmp.ne.s32.totalorder %s108, %s111
      %p117 = scmp.eq.s32.totalorder %s12, 0
      %p118 = por %p116, %p117
      %p119 = scmp.ne.s32.totalorder %s108, %s111
      %p120 = scmp.eq.s32.totalorder %s17, 3
      %p121 = por %p119, %p120
      %p122 = scmp.ne.s32.totalorder %s111, %s112
      %p123 = scmp.eq.s32.totalorder %s17, 0
      %p124 = por %p122, %p123
      %p125 = scmp.ne.s32.totalorder %s111, %s112
      %p126 = scmp.eq.s32.totalorder %s18, 3
      %p127 = por %p125, %p126
      %p129 = scmp.ne.s32.totalorder %s112, %s128
      %p130 = scmp.eq.s32.totalorder %s18, 0
      %p131 = por %p129, %p130
      %p132 = scmp.le.s32.totalorder 1, %s12
      %p133 = scmp.lt.s32.totalorder %s12, 5
      %p134 = pnand %p132, %p133
      %p135 = pneg %p134
      // Predicated region
      $region9: #{tpu_custom_call.1} parent=5 // pred_check
        _
      $region10: #{tpu_custom_call.1} parent=5 // pred_check_branch
        %137 = sbr.rel (%p134) target = $region12
      $region11: #{tpu_custom_call.1} parent=5 // pred_region
        %s138 = ssub.s32 %s12, 1
        // Predicated region
        $region13: #{tpu_custom_call.1} parent=11 // pred_check
          %p139 = pneg %p75
        $region14: #{tpu_custom_call.1} parent=11 // pred_check_branch
          %141 = sbr.rel (%p139) target = $region16
        $region15: #{tpu_custom_call.1} parent=11 // pred_region
          _
        $region16: #{tpu_custom_call.1} parent=11 // pred_fallthru
          _
        // Predicated region
        $region17: #{tpu_custom_call.1} parent=11 // pred_check
          %p142 = pneg %p96
        $region18: #{tpu_custom_call.1} parent=11 // pred_check_branch
          %144 = sbr.rel (%p142) target = $region20
        $region19: #{tpu_custom_call.1} parent=11 // pred_region
          _
        $region20: #{tpu_custom_call.1} parent=11 // pred_fallthru
          _
      $region12: #{tpu_custom_call.1} parent=5 // pred_fallthru
        _
      %p145 = scmp.lt.s32.totalorder %s12, 4
      // Predicated region
      $region21: #{tpu_custom_call.1} parent=5 // pred_check
        %p146 = pneg %p145
      $region22: #{tpu_custom_call.1} parent=5 // pred_check_branch
        %148 = sbr.rel (%p146) target = $region24
      $region23: #{tpu_custom_call.1} parent=5 // pred_region
        // Predicated region
        $region25: #{tpu_custom_call.1} parent=23 // pred_check
          %p149 = pneg %p48
        $region26: #{tpu_custom_call.1} parent=23 // pred_check_branch
          %151 = sbr.rel (%p149) target = $region28
        $region27: #{tpu_custom_call.1} parent=23 // pred_region
          %s152 = smul.u32 %s19, 2
          %s153 = sadd.s32 %s152, %s20
          %p154 = scmp.lt.s32.totalorder %s153, 3
          %s155 = scalar_select %p154, %s153, 3
          %s156 = smul.addr %s155, 90
          %s157 = smul.addr %s156, 8
          %s158 = scalar_lea.vmem %s0, %s157
          %s159 = smul.u32 %s19, 2
          %s160 = sadd.s32 %s159, %s20
        $region28: #{tpu_custom_call.1} parent=23 // pred_fallthru
          _
      $region24: #{tpu_custom_call.1} parent=5 // pred_fallthru
        _
      %p161 = scmp.le.s32.totalorder 1, %s12
      %p162 = scmp.lt.s32.totalorder %s12, 5
      %p163 = pnand %p161, %p162
      %p164 = pneg %p163
      // Predicated region
      $region29: #{tpu_custom_call.1} parent=5 // pred_check
        _
      $region30: #{tpu_custom_call.1} parent=5 // pred_check_branch
        %166 = sbr.rel (%p163) target = $region32
      $region31: #{tpu_custom_call.1} parent=5 // pred_region
        %s167 = ssub.s32 %s12, 1
        %s168 = smul.u32 %s21, 2
        %s169 = sadd.s32 %s168, %s22
        %p170 = scmp.lt.s32.totalorder %s169, 3
        %s171 = scalar_select %p170, %s169, 3
        %s172 = smul.addr %s171, 90
        %s173 = smul.addr %s172, 8
        %s174 = scalar_lea.vmem %s0, %s173
        %p175 = pneg %p54
        %p176 = pneg %p51
        %p177 = pneg %p75
        %p178 = pneg %p72
        %p179 = pneg %p96
        %p180 = pneg %p93
        %p181 = pneg %p124
        %p182 = pneg %p121
        %s183 = sand.u32 %s111, 1
        %s184 = scalar_lea.sflag [#allocation3], %s183
        %s185 = sand.u32 %s111, 1
        %s186 = smul.addr %s185, 32
        %s187 = scalar_lea.vmem [#allocation2], %s186
        %s188 = smul.u32 %s21, 2
        %s189 = sadd.s32 %s188, %s22
        %p190 = scmp.lt.s32.totalorder %s189, 3
        %s191 = scalar_select %p190, %s189, 3
        %s192 = smul.addr %s191, 90
        %s193 = smul.addr %s192, 8
        %s194 = scalar_lea.vmem %s0, %s193
        %s195 = smul.u32 %s21, 2
        %s196 = sadd.s32 %s195, %s22
        %s197 = smul.u32 4, %s22
        %v198 = vld [vmem:[%s194] sm:$0xff]
        %v199 = vld [vmem:[%s194 + $0x8] sm:$0xff]
        %v200 = vld [vmem:[%s194 + $0x10] sm:$0xff]
        %v201 = vld [vmem:[%s194 + $0x18] sm:$0xff]
        %v202 = vld [vmem:[%s194 + $0x20] sm:$0x3]
        %v203 = vld [vmem:[%s194 + $0x28] sm:$0xff]
        %v204 = vld [vmem:[%s194 + $0x30] sm:$0xff]
        %v205 = vld [vmem:[%s194 + $0x38] sm:$0xff]
        %v206 = vld [vmem:[%s194 + $0x40] sm:$0xff]
        %v207 = vld [vmem:[%s194 + $0x48] sm:$0x3]
        %v208 = vld [vmem:[%s194 + $0x50] sm:$0xff]
        %v209 = vld [vmem:[%s194 + $0x58] sm:$0xff]
        %v210 = vld [vmem:[%s194 + $0x60] sm:$0xff]
        %v211 = vld [vmem:[%s194 + $0x68] sm:$0xff]
        %v212 = vld [vmem:[%s194 + $0x70] sm:$0x3]
        %v213 = vld [vmem:[%s194 + $0x78] sm:$0xff]
        %v214 = vld [vmem:[%s194 + $0x80] sm:$0xff]
        %v215 = vld [vmem:[%s194 + $0x88] sm:$0xff]
        %v216 = vld [vmem:[%s194 + $0x90] sm:$0xff]
        %v217 = vld [vmem:[%s194 + $0x98] sm:$0x3]
        %v218 = vld [vmem:[%s194 + $0xa0] sm:$0xff]
        %v219 = vld [vmem:[%s194 + $0xa8] sm:$0xff]
        %v220 = vld [vmem:[%s194 + $0xb0] sm:$0xff]
        %v221 = vld [vmem:[%s194 + $0xb8] sm:$0xff]
        %v222 = vld [vmem:[%s194 + $0xc0] sm:$0x3]
        %v223 = vld [vmem:[%s194 + $0xc8] sm:$0xff]
        %v224 = vld [vmem:[%s194 + $0xd0] sm:$0xff]
        %v225 = vld [vmem:[%s194 + $0xd8] sm:$0xff]
        %v226 = vld [vmem:[%s194 + $0xe0] sm:$0xff]
        %v227 = vld [vmem:[%s194 + $0xe8] sm:$0x3]
        %v228 = vld [vmem:[%s194 + $0xf0] sm:$0xff]
        %v229 = vld [vmem:[%s194 + $0xf8] sm:$0xff]
        %v230 = vld [vmem:[%s194 + $0x100] sm:$0xff]
        %v231 = vld [vmem:[%s194 + $0x108] sm:$0xff]
        %v232 = vld [vmem:[%s194 + $0x110] sm:$0x3]
        %v233 = vld [vmem:[%s194 + $0x118] sm:$0xff]
        %v234 = vld [vmem:[%s194 + $0x120] sm:$0xff]
        %v235 = vld [vmem:[%s194 + $0x128] sm:$0xff]
        %v236 = vld [vmem:[%s194 + $0x130] sm:$0xff]
        %v237 = vld [vmem:[%s194 + $0x138] sm:$0x3]
        %v238 = vld [vmem:[%s194 + $0x140] sm:$0xff]
        %v239 = vld [vmem:[%s194 + $0x148] sm:$0xff]
        %v240 = vld [vmem:[%s194 + $0x150] sm:$0xff]
        %v241 = vld [vmem:[%s194 + $0x158] sm:$0xff]
        %v242 = vld [vmem:[%s194 + $0x160] sm:$0x3]
        %v243 = vld [vmem:[%s194 + $0x168] sm:$0xff]
        %v244 = vld [vmem:[%s194 + $0x170] sm:$0xff]
        %v245 = vld [vmem:[%s194 + $0x178] sm:$0xff]
        %v246 = vld [vmem:[%s194 + $0x180] sm:$0xff]
        %v247 = vld [vmem:[%s194 + $0x188] sm:$0x3]
        %v248 = vld [vmem:[%s194 + $0x190] sm:$0xff]
        %v249 = vld [vmem:[%s194 + $0x198] sm:$0xff]
        %v250 = vld [vmem:[%s194 + $0x1a0] sm:$0xff]
        %v251 = vld [vmem:[%s194 + $0x1a8] sm:$0xff]
        %v252 = vld [vmem:[%s194 + $0x1b0] sm:$0x3]
        %v253 = vld [vmem:[%s194 + $0x1b8] sm:$0xff]
        %v254 = vld [vmem:[%s194 + $0x1c0] sm:$0xff]
        %v255 = vld [vmem:[%s194 + $0x1c8] sm:$0xff]
        %v256 = vld [vmem:[%s194 + $0x1d0] sm:$0xff]
        %v257 = vld [vmem:[%s194 + $0x1d8] sm:$0x3]
        %v258 = vld [vmem:[%s194 + $0x1e0] sm:$0xff]
        %v259 = vld [vmem:[%s194 + $0x1e8] sm:$0xff]
        %v260 = vld [vmem:[%s194 + $0x1f0] sm:$0xff]
        %v261 = vld [vmem:[%s194 + $0x1f8] sm:$0xff]
        %v262 = vld [vmem:[%s194 + $0x200] sm:$0x3]
        %v263 = vld [vmem:[%s194 + $0x208] sm:$0xff]
        %v264 = vld [vmem:[%s194 + $0x210] sm:$0xff]
        %v265 = vld [vmem:[%s194 + $0x218] sm:$0xff]
        %v266 = vld [vmem:[%s194 + $0x220] sm:$0xff]
        %v267 = vld [vmem:[%s194 + $0x228] sm:$0x3]
        %v268 = vld [vmem:[%s194 + $0x230] sm:$0xff]
        %v269 = vld [vmem:[%s194 + $0x238] sm:$0xff]
        %v270 = vld [vmem:[%s194 + $0x240] sm:$0xff]
        %v271 = vld [vmem:[%s194 + $0x248] sm:$0xff]
        %v272 = vld [vmem:[%s194 + $0x250] sm:$0x3]
        %v273 = vld [vmem:[%s194 + $0x258] sm:$0xff]
        %v274 = vld [vmem:[%s194 + $0x260] sm:$0xff]
        %v275 = vld [vmem:[%s194 + $0x268] sm:$0xff]
        %v276 = vld [vmem:[%s194 + $0x270] sm:$0xff]
        %v277 = vld [vmem:[%s194 + $0x278] sm:$0x3]
        %v278 = vld [vmem:[%s194 + $0x280] sm:$0xff]
        %v279 = vld [vmem:[%s194 + $0x288] sm:$0xff]
        %v280 = vld [vmem:[%s194 + $0x290] sm:$0xff]
        %v281 = vld [vmem:[%s194 + $0x298] sm:$0xff]
        %v282 = vld [vmem:[%s194 + $0x2a0] sm:$0x3]
        %v283 = vld [vmem:[%s194 + $0x2a8] sm:$0xff]
        %v284 = vld [vmem:[%s194 + $0x2b0] sm:$0xff]
        %v285 = vld [vmem:[%s194 + $0x2b8] sm:$0xff]
        %v286 = vld [vmem:[%s194 + $0x2c0] sm:$0xff]
        %v287 = vld [vmem:[%s194 + $0x2c8] sm:$0x3]
        %vm368 = vcmask 1046528
        %v369 = vrot.slane %v198, 1
        %v370 = vrot.slane %v199, 1
        %v371 = vsel %vm368, %v369, %v370
        %v372 = vrot.slane %v200, 1
        %v373 = vsel %vm368, %v370, %v372
        %v374 = vrot.slane %v201, 1
        %v375 = vsel %vm368, %v372, %v374
        %v376 = vrot.slane %v202, 1
        %v377 = vsel %vm368, %v374, %v376
        %v378 = vrot.slane %v203, 1
        %v379 = vrot.slane %v204, 1
        %v380 = vsel %vm368, %v378, %v379
        %v381 = vrot.slane %v205, 1
        %v382 = vsel %vm368, %v379, %v381
        %v383 = vrot.slane %v206, 1
        %v384 = vsel %vm368, %v381, %v383
        %v385 = vrot.slane %v207, 1
        %v386 = vsel %vm368, %v383, %v385
        %v387 = vrot.slane %v208, 1
        %v388 = vrot.slane %v209, 1
        %v389 = vsel %vm368, %v387, %v388
        %v390 = vrot.slane %v210, 1
        %v391 = vsel %vm368, %v388, %v390
        %v392 = vrot.slane %v211, 1
        %v393 = vsel %vm368, %v390, %v392
        %v394 = vrot.slane %v212, 1
        %v395 = vsel %vm368, %v392, %v394
        %v396 = vrot.slane %v213, 1
        %v397 = vrot.slane %v214, 1
        %v398 = vsel %vm368, %v396, %v397
        %v399 = vrot.slane %v215, 1
        %v400 = vsel %vm368, %v397, %v399
        %v401 = vrot.slane %v216, 1
        %v402 = vsel %vm368, %v399, %v401
        %v403 = vrot.slane %v217, 1
        %v404 = vsel %vm368, %v401, %v403
        %v405 = vrot.slane %v218, 1
        %v406 = vrot.slane %v219, 1
        %v407 = vsel %vm368, %v405, %v406
        %v408 = vrot.slane %v220, 1
        %v409 = vsel %vm368, %v406, %v408
        %v410 = vrot.slane %v221, 1
        %v411 = vsel %vm368, %v408, %v410
        %v412 = vrot.slane %v222, 1
        %v413 = vsel %vm368, %v410, %v412
        %v414 = vrot.slane %v223, 1
        %v415 = vrot.slane %v224, 1
        %v416 = vsel %vm368, %v414, %v415
        %v417 = vrot.slane %v225, 1
        %v418 = vsel %vm368, %v415, %v417
        %v419 = vrot.slane %v226, 1
        %v420 = vsel %vm368, %v417, %v419
        %v421 = vrot.slane %v227, 1
        %v422 = vsel %vm368, %v419, %v421
        %v423 = vrot.slane %v228, 1
        %v424 = vrot.slane %v229, 1
        %v425 = vsel %vm368, %v423, %v424
        %v426 = vrot.slane %v230, 1
        %v427 = vsel %vm368, %v424, %v426
        %v428 = vrot.slane %v231, 1
        %v429 = vsel %vm368, %v426, %v428
        %v430 = vrot.slane %v232, 1
        %v431 = vsel %vm368, %v428, %v430
        %v432 = vrot.slane %v233, 1
        %v433 = vrot.slane %v234, 1
        %v434 = vsel %vm368, %v432, %v433
        %v435 = vrot.slane %v235, 1
        %v436 = vsel %vm368, %v433, %v435
        %v437 = vrot.slane %v236, 1
        %v438 = vsel %vm368, %v435, %v437
        %v439 = vrot.slane %v237, 1
        %v440 = vsel %vm368, %v437, %v439
        %v441 = vrot.slane %v238, 1
        %v442 = vrot.slane %v239, 1
        %v443 = vsel %vm368, %v441, %v442
        %v444 = vrot.slane %v240, 1
        %v445 = vsel %vm368, %v442, %v444
        %v446 = vrot.slane %v241, 1
        %v447 = vsel %vm368, %v444, %v446
        %v448 = vrot.slane %v242, 1
        %v449 = vsel %vm368, %v446, %v448
        %v450 = vrot.slane %v243, 1
        %v451 = vrot.slane %v244, 1
        %v452 = vsel %vm368, %v450, %v451
        %v453 = vrot.slane %v245, 1
        %v454 = vsel %vm368, %v451, %v453
        %v455 = vrot.slane %v246, 1
        %v456 = vsel %vm368, %v453, %v455
        %v457 = vrot.slane %v247, 1
        %v458 = vsel %vm368, %v455, %v457
        %v459 = vrot.slane %v248, 1
        %v460 = vrot.slane %v249, 1
        %v461 = vsel %vm368, %v459, %v460
        %v462 = vrot.slane %v250, 1
        %v463 = vsel %vm368, %v460, %v462
        %v464 = vrot.slane %v251, 1
        %v465 = vsel %vm368, %v462, %v464
        %v466 = vrot.slane %v252, 1
        %v467 = vsel %vm368, %v464, %v466
        %v468 = vrot.slane %v253, 1
        %v469 = vrot.slane %v254, 1
        %v470 = vsel %vm368, %v468, %v469
        %v471 = vrot.slane %v255, 1
        %v472 = vsel %vm368, %v469, %v471
        %v473 = vrot.slane %v256, 1
        %v474 = vsel %vm368, %v471, %v473
        %v475 = vrot.slane %v257, 1
        %v476 = vsel %vm368, %v473, %v475
        %v477 = vrot.slane %v258, 1
        %v478 = vrot.slane %v259, 1
        %v479 = vsel %vm368, %v477, %v478
        %v480 = vrot.slane %v260, 1
        %v481 = vsel %vm368, %v478, %v480
        %v482 = vrot.slane %v261, 1
        %v483 = vsel %vm368, %v480, %v482
        %v484 = vrot.slane %v262, 1
        %v485 = vsel %vm368, %v482, %v484
        %v486 = vrot.slane %v263, 1
        %v487 = vrot.slane %v264, 1
        %v488 = vsel %vm368, %v486, %v487
        %v489 = vrot.slane %v265, 1
        %v490 = vsel %vm368, %v487, %v489
        %v491 = vrot.slane %v266, 1
        %v492 = vsel %vm368, %v489, %v491
        %v493 = vrot.slane %v267, 1
        %v494 = vsel %vm368, %v491, %v493
        %v495 = vrot.slane %v268, 1
        %v496 = vrot.slane %v269, 1
        %v497 = vsel %vm368, %v495, %v496
        %v498 = vrot.slane %v270, 1
        %v499 = vsel %vm368, %v496, %v498
        %v500 = vrot.slane %v271, 1
        %v501 = vsel %vm368, %v498, %v500
        %v502 = vrot.slane %v272, 1
        %v503 = vsel %vm368, %v500, %v502
        %v504 = vrot.slane %v273, 1
        %v505 = vrot.slane %v274, 1
        %v506 = vsel %vm368, %v504, %v505
        %v507 = vrot.slane %v275, 1
        %v508 = vsel %vm368, %v505, %v507
        %v509 = vrot.slane %v276, 1
        %v510 = vsel %vm368, %v507, %v509
        %v511 = vrot.slane %v277, 1
        %v512 = vsel %vm368, %v509, %v511
        %513 = vrot.lane.b32.xlu0 %v371, 4
        %v514 = vpop.permute.xlu0 %513
        %515 = vrot.lane.b32.xlu0 %v373, 4
        %v516 = vpop.permute.xlu0 %515
        %517 = vrot.lane.b32.xlu0 %v375, 4
        %v518 = vpop.permute.xlu0 %517
        %519 = vrot.lane.b32.xlu0 %v377, 4
        %v520 = vpop.permute.xlu0 %519
        %521 = vrot.lane.b32.xlu0 %v380, 4
        %v522 = vpop.permute.xlu0 %521
        %523 = vrot.lane.b32.xlu0 %v382, 4
        %v524 = vpop.permute.xlu0 %523
        %525 = vrot.lane.b32.xlu0 %v384, 4
        %v526 = vpop.permute.xlu0 %525
        %527 = vrot.lane.b32.xlu0 %v386, 4
        %v528 = vpop.permute.xlu0 %527
        %529 = vrot.lane.b32.xlu0 %v389, 4
        %v530 = vpop.permute.xlu0 %529
        %531 = vrot.lane.b32.xlu0 %v391, 4
        %v532 = vpop.permute.xlu0 %531
        %533 = vrot.lane.b32.xlu0 %v393, 4
        %v534 = vpop.permute.xlu0 %533
        %535 = vrot.lane.b32.xlu0 %v395, 4
        %v536 = vpop.permute.xlu0 %535
        %537 = vrot.lane.b32.xlu0 %v398, 4
        %v538 = vpop.permute.xlu0 %537
        %539 = vrot.lane.b32.xlu0 %v400, 4
        %v540 = vpop.permute.xlu0 %539
        %541 = vrot.lane.b32.xlu0 %v402, 4
        %v542 = vpop.permute.xlu0 %541
        %543 = vrot.lane.b32.xlu0 %v404, 4
        %v544 = vpop.permute.xlu0 %543
        %545 = vrot.lane.b32.xlu0 %v407, 4
        %v546 = vpop.permute.xlu0 %545
        %547 = vrot.lane.b32.xlu0 %v409, 4
        %v548 = vpop.permute.xlu0 %547
        %549 = vrot.lane.b32.xlu0 %v411, 4
        %v550 = vpop.permute.xlu0 %549
        %551 = vrot.lane.b32.xlu0 %v413, 4
        %v552 = vpop.permute.xlu0 %551
        %553 = vrot.lane.b32.xlu0 %v416, 4
        %v554 = vpop.permute.xlu0 %553
        %555 = vrot.lane.b32.xlu0 %v418, 4
        %v556 = vpop.permute.xlu0 %555
        %557 = vrot.lane.b32.xlu0 %v420, 4
        %v558 = vpop.permute.xlu0 %557
        %559 = vrot.lane.b32.xlu0 %v422, 4
        %v560 = vpop.permute.xlu0 %559
        %561 = vrot.lane.b32.xlu0 %v425, 4
        %v562 = vpop.permute.xlu0 %561
        %563 = vrot.lane.b32.xlu0 %v427, 4
        %v564 = vpop.permute.xlu0 %563
        %565 = vrot.lane.b32.xlu0 %v429, 4
        %v566 = vpop.permute.xlu0 %565
        %567 = vrot.lane.b32.xlu0 %v431, 4
        %v568 = vpop.permute.xlu0 %567
        %569 = vrot.lane.b32.xlu0 %v434, 4
        %v570 = vpop.permute.xlu0 %569
        %571 = vrot.lane.b32.xlu0 %v436, 4
        %v572 = vpop.permute.xlu0 %571
        %573 = vrot.lane.b32.xlu0 %v438, 4
        %v574 = vpop.permute.xlu0 %573
        %575 = vrot.lane.b32.xlu0 %v440, 4
        %v576 = vpop.permute.xlu0 %575
        %577 = vrot.lane.b32.xlu0 %v443, 4
        %v578 = vpop.permute.xlu0 %577
        %579 = vrot.lane.b32.xlu0 %v445, 4
        %v580 = vpop.permute.xlu0 %579
        %581 = vrot.lane.b32.xlu0 %v447, 4
        %v582 = vpop.permute.xlu0 %581
        %583 = vrot.lane.b32.xlu0 %v449, 4
        %v584 = vpop.permute.xlu0 %583
        %585 = vrot.lane.b32.xlu0 %v452, 4
        %v586 = vpop.permute.xlu0 %585
        %587 = vrot.lane.b32.xlu0 %v454, 4
        %v588 = vpop.permute.xlu0 %587
        %589 = vrot.lane.b32.xlu0 %v456, 4
        %v590 = vpop.permute.xlu0 %589
        %591 = vrot.lane.b32.xlu0 %v458, 4
        %v592 = vpop.permute.xlu0 %591
        %593 = vrot.lane.b32.xlu0 %v461, 4
        %v594 = vpop.permute.xlu0 %593
        %595 = vrot.lane.b32.xlu0 %v463, 4
        %v596 = vpop.permute.xlu0 %595
        %597 = vrot.lane.b32.xlu0 %v465, 4
        %v598 = vpop.permute.xlu0 %597
        %599 = vrot.lane.b32.xlu0 %v467, 4
        %v600 = vpop.permute.xlu0 %599
        %601 = vrot.lane.b32.xlu0 %v470, 4
        %v602 = vpop.permute.xlu0 %601
        %603 = vrot.lane.b32.xlu0 %v472, 4
        %v604 = vpop.permute.xlu0 %603
        %605 = vrot.lane.b32.xlu0 %v474, 4
        %v606 = vpop.permute.xlu0 %605
        %607 = vrot.lane.b32.xlu0 %v476, 4
        %v608 = vpop.permute.xlu0 %607
        %609 = vrot.lane.b32.xlu0 %v479, 4
        %v610 = vpop.permute.xlu0 %609
        %611 = vrot.lane.b32.xlu0 %v481, 4
        %v612 = vpop.permute.xlu0 %611
        %613 = vrot.lane.b32.xlu0 %v483, 4
        %v614 = vpop.permute.xlu0 %613
        %615 = vrot.lane.b32.xlu0 %v485, 4
        %v616 = vpop.permute.xlu0 %615
        %617 = vrot.lane.b32.xlu0 %v488, 4
        %v618 = vpop.permute.xlu0 %617
        %619 = vrot.lane.b32.xlu0 %v490, 4
        %v620 = vpop.permute.xlu0 %619
        %621 = vrot.lane.b32.xlu0 %v492, 4
        %v622 = vpop.permute.xlu0 %621
        %623 = vrot.lane.b32.xlu0 %v494, 4
        %v624 = vpop.permute.xlu0 %623
        %625 = vrot.lane.b32.xlu0 %v497, 4
        %v626 = vpop.permute.xlu0 %625
        %627 = vrot.lane.b32.xlu0 %v499, 4
        %v628 = vpop.permute.xlu0 %627
        %629 = vrot.lane.b32.xlu0 %v501, 4
        %v630 = vpop.permute.xlu0 %629
        %631 = vrot.lane.b32.xlu0 %v503, 4
        %v632 = vpop.permute.xlu0 %631
        %633 = vrot.lane.b32.xlu0 %v506, 4
        %v634 = vpop.permute.xlu0 %633
        %635 = vrot.lane.b32.xlu0 %v508, 4
        %v636 = vpop.permute.xlu0 %635
        %637 = vrot.lane.b32.xlu0 %v510, 4
        %v638 = vpop.permute.xlu0 %637
        %639 = vrot.lane.b32.xlu0 %v512, 4
        %v640 = vpop.permute.xlu0 %639
        %vm705 = vcmask 1045504
        %v706 = vrot.slane %v198, 2
        %v707 = vrot.slane %v199, 2
        %v708 = vsel %vm705, %v706, %v707
        %v709 = vrot.slane %v200, 2
        %v710 = vsel %vm705, %v707, %v709
        %v711 = vrot.slane %v201, 2
        %v712 = vsel %vm705, %v709, %v711
        %v713 = vrot.slane %v202, 2
        %v714 = vsel %vm705, %v711, %v713
        %v715 = vrot.slane %v203, 2
        %v716 = vrot.slane %v204, 2
        %v717 = vsel %vm705, %v715, %v716
        %v718 = vrot.slane %v205, 2
        %v719 = vsel %vm705, %v716, %v718
        %v720 = vrot.slane %v206, 2
        %v721 = vsel %vm705, %v718, %v720
        %v722 = vrot.slane %v207, 2
        %v723 = vsel %vm705, %v720, %v722
        %v724 = vrot.slane %v208, 2
        %v725 = vrot.slane %v209, 2
        %v726 = vsel %vm705, %v724, %v725
        %v727 = vrot.slane %v210, 2
        %v728 = vsel %vm705, %v725, %v727
        %v729 = vrot.slane %v211, 2
        %v730 = vsel %vm705, %v727, %v729
        %v731 = vrot.slane %v212, 2
        %v732 = vsel %vm705, %v729, %v731
        %v733 = vrot.slane %v213, 2
        %v734 = vrot.slane %v214, 2
        %v735 = vsel %vm705, %v733, %v734
        %v736 = vrot.slane %v215, 2
        %v737 = vsel %vm705, %v734, %v736
        %v738 = vrot.slane %v216, 2
        %v739 = vsel %vm705, %v736, %v738
        %v740 = vrot.slane %v217, 2
        %v741 = vsel %vm705, %v738, %v740
        %v742 = vrot.slane %v218, 2
        %v743 = vrot.slane %v219, 2
        %v744 = vsel %vm705, %v742, %v743
        %v745 = vrot.slane %v220, 2
        %v746 = vsel %vm705, %v743, %v745
        %v747 = vrot.slane %v221, 2
        %v748 = vsel %vm705, %v745, %v747
        %v749 = vrot.slane %v222, 2
        %v750 = vsel %vm705, %v747, %v749
        %v751 = vrot.slane %v223, 2
        %v752 = vrot.slane %v224, 2
        %v753 = vsel %vm705, %v751, %v752
        %v754 = vrot.slane %v225, 2
        %v755 = vsel %vm705, %v752, %v754
        %v756 = vrot.slane %v226, 2
        %v757 = vsel %vm705, %v754, %v756
        %v758 = vrot.slane %v227, 2
        %v759 = vsel %vm705, %v756, %v758
        %v760 = vrot.slane %v228, 2
        %v761 = vrot.slane %v229, 2
        %v762 = vsel %vm705, %v760, %v761
        %v763 = vrot.slane %v230, 2
        %v764 = vsel %vm705, %v761, %v763
        %v765 = vrot.slane %v231, 2
        %v766 = vsel %vm705, %v763, %v765
        %v767 = vrot.slane %v232, 2
        %v768 = vsel %vm705, %v765, %v767
        %v769 = vrot.slane %v233, 2
        %v770 = vrot.slane %v234, 2
        %v771 = vsel %vm705, %v769, %v770
        %v772 = vrot.slane %v235, 2
        %v773 = vsel %vm705, %v770, %v772
        %v774 = vrot.slane %v236, 2
        %v775 = vsel %vm705, %v772, %v774
        %v776 = vrot.slane %v237, 2
        %v777 = vsel %vm705, %v774, %v776
        %v778 = vrot.slane %v238, 2
        %v779 = vrot.slane %v239, 2
        %v780 = vsel %vm705, %v778, %v779
        %v781 = vrot.slane %v240, 2
        %v782 = vsel %vm705, %v779, %v781
        %v783 = vrot.slane %v241, 2
        %v784 = vsel %vm705, %v781, %v783
        %v785 = vrot.slane %v242, 2
        %v786 = vsel %vm705, %v783, %v785
        %v787 = vrot.slane %v243, 2
        %v788 = vrot.slane %v244, 2
        %v789 = vsel %vm705, %v787, %v788
        %v790 = vrot.slane %v245, 2
        %v791 = vsel %vm705, %v788, %v790
        %v792 = vrot.slane %v246, 2
        %v793 = vsel %vm705, %v790, %v792
        %v794 = vrot.slane %v247, 2
        %v795 = vsel %vm705, %v792, %v794
        %v796 = vrot.slane %v248, 2
        %v797 = vrot.slane %v249, 2
        %v798 = vsel %vm705, %v796, %v797
        %v799 = vrot.slane %v250, 2
        %v800 = vsel %vm705, %v797, %v799
        %v801 = vrot.slane %v251, 2
        %v802 = vsel %vm705, %v799, %v801
        %v803 = vrot.slane %v252, 2
        %v804 = vsel %vm705, %v801, %v803
        %v805 = vrot.slane %v253, 2
        %v806 = vrot.slane %v254, 2
        %v807 = vsel %vm705, %v805, %v806
        %v808 = vrot.slane %v255, 2
        %v809 = vsel %vm705, %v806, %v808
        %v810 = vrot.slane %v256, 2
        %v811 = vsel %vm705, %v808, %v810
        %v812 = vrot.slane %v257, 2
        %v813 = vsel %vm705, %v810, %v812
        %v814 = vrot.slane %v258, 2
        %v815 = vrot.slane %v259, 2
        %v816 = vsel %vm705, %v814, %v815
        %v817 = vrot.slane %v260, 2
        %v818 = vsel %vm705, %v815, %v817
        %v819 = vrot.slane %v261, 2
        %v820 = vsel %vm705, %v817, %v819
        %v821 = vrot.slane %v262, 2
        %v822 = vsel %vm705, %v819, %v821
        %v823 = vrot.slane %v263, 2
        %v824 = vrot.slane %v264, 2
        %v825 = vsel %vm705, %v823, %v824
        %v826 = vrot.slane %v265, 2
        %v827 = vsel %vm705, %v824, %v826
        %v828 = vrot.slane %v266, 2
        %v829 = vsel %vm705, %v826, %v828
        %v830 = vrot.slane %v267, 2
        %v831 = vsel %vm705, %v828, %v830
        %v832 = vrot.slane %v268, 2
        %v833 = vrot.slane %v269, 2
        %v834 = vsel %vm705, %v832, %v833
        %v835 = vrot.slane %v270, 2
        %v836 = vsel %vm705, %v833, %v835
        %v837 = vrot.slane %v271, 2
        %v838 = vsel %vm705, %v835, %v837
        %v839 = vrot.slane %v272, 2
        %v840 = vsel %vm705, %v837, %v839
        %v841 = vrot.slane %v273, 2
        %v842 = vrot.slane %v274, 2
        %v843 = vsel %vm705, %v841, %v842
        %v844 = vrot.slane %v275, 2
        %v845 = vsel %vm705, %v842, %v844
        %v846 = vrot.slane %v276, 2
        %v847 = vsel %vm705, %v844, %v846
        %v848 = vrot.slane %v277, 2
        %v849 = vsel %vm705, %v846, %v848
        %850 = vrot.lane.b32.xlu0 %v708, 8
        %v851 = vpop.permute.xlu0 %850
        %852 = vrot.lane.b32.xlu0 %v710, 8
        %v853 = vpop.permute.xlu0 %852
        %854 = vrot.lane.b32.xlu0 %v712, 8
        %v855 = vpop.permute.xlu0 %854
        %856 = vrot.lane.b32.xlu0 %v714, 8
        %v857 = vpop.permute.xlu0 %856
        %858 = vrot.lane.b32.xlu0 %v717, 8
        %v859 = vpop.permute.xlu0 %858
        %860 = vrot.lane.b32.xlu0 %v719, 8
        %v861 = vpop.permute.xlu0 %860
        %862 = vrot.lane.b32.xlu0 %v721, 8
        %v863 = vpop.permute.xlu0 %862
        %864 = vrot.lane.b32.xlu0 %v723, 8
        %v865 = vpop.permute.xlu0 %864
        %866 = vrot.lane.b32.xlu0 %v726, 8
        %v867 = vpop.permute.xlu0 %866
        %868 = vrot.lane.b32.xlu0 %v728, 8
        %v869 = vpop.permute.xlu0 %868
        %870 = vrot.lane.b32.xlu0 %v730, 8
        %v871 = vpop.permute.xlu0 %870
        %872 = vrot.lane.b32.xlu0 %v732, 8
        %v873 = vpop.permute.xlu0 %872
        %874 = vrot.lane.b32.xlu0 %v735, 8
        %v875 = vpop.permute.xlu0 %874
        %876 = vrot.lane.b32.xlu0 %v737, 8
        %v877 = vpop.permute.xlu0 %876
        %878 = vrot.lane.b32.xlu0 %v739, 8
        %v879 = vpop.permute.xlu0 %878
        %880 = vrot.lane.b32.xlu0 %v741, 8
        %v881 = vpop.permute.xlu0 %880
        %882 = vrot.lane.b32.xlu0 %v744, 8
        %v883 = vpop.permute.xlu0 %882
        %884 = vrot.lane.b32.xlu0 %v746, 8
        %v885 = vpop.permute.xlu0 %884
        %886 = vrot.lane.b32.xlu0 %v748, 8
        %v887 = vpop.permute.xlu0 %886
        %888 = vrot.lane.b32.xlu0 %v750, 8
        %v889 = vpop.permute.xlu0 %888
        %890 = vrot.lane.b32.xlu0 %v753, 8
        %v891 = vpop.permute.xlu0 %890
        %892 = vrot.lane.b32.xlu0 %v755, 8
        %v893 = vpop.permute.xlu0 %892
        %894 = vrot.lane.b32.xlu0 %v757, 8
        %v895 = vpop.permute.xlu0 %894
        %896 = vrot.lane.b32.xlu0 %v759, 8
        %v897 = vpop.permute.xlu0 %896
        %898 = vrot.lane.b32.xlu0 %v762, 8
        %v899 = vpop.permute.xlu0 %898
        %900 = vrot.lane.b32.xlu0 %v764, 8
        %v901 = vpop.permute.xlu0 %900
        %902 = vrot.lane.b32.xlu0 %v766, 8
        %v903 = vpop.permute.xlu0 %902
        %904 = vrot.lane.b32.xlu0 %v768, 8
        %v905 = vpop.permute.xlu0 %904
        %906 = vrot.lane.b32.xlu0 %v771, 8
        %v907 = vpop.permute.xlu0 %906
        %908 = vrot.lane.b32.xlu0 %v773, 8
        %v909 = vpop.permute.xlu0 %908
        %910 = vrot.lane.b32.xlu0 %v775, 8
        %v911 = vpop.permute.xlu0 %910
        %912 = vrot.lane.b32.xlu0 %v777, 8
        %v913 = vpop.permute.xlu0 %912
        %914 = vrot.lane.b32.xlu0 %v780, 8
        %v915 = vpop.permute.xlu0 %914
        %916 = vrot.lane.b32.xlu0 %v782, 8
        %v917 = vpop.permute.xlu0 %916
        %918 = vrot.lane.b32.xlu0 %v784, 8
        %v919 = vpop.permute.xlu0 %918
        %920 = vrot.lane.b32.xlu0 %v786, 8
        %v921 = vpop.permute.xlu0 %920
        %922 = vrot.lane.b32.xlu0 %v789, 8
        %v923 = vpop.permute.xlu0 %922
        %924 = vrot.lane.b32.xlu0 %v791, 8
        %v925 = vpop.permute.xlu0 %924
        %926 = vrot.lane.b32.xlu0 %v793, 8
        %v927 = vpop.permute.xlu0 %926
        %928 = vrot.lane.b32.xlu0 %v795, 8
        %v929 = vpop.permute.xlu0 %928
        %930 = vrot.lane.b32.xlu0 %v798, 8
        %v931 = vpop.permute.xlu0 %930
        %932 = vrot.lane.b32.xlu0 %v800, 8
        %v933 = vpop.permute.xlu0 %932
        %934 = vrot.lane.b32.xlu0 %v802, 8
        %v935 = vpop.permute.xlu0 %934
        %936 = vrot.lane.b32.xlu0 %v804, 8
        %v937 = vpop.permute.xlu0 %936
        %938 = vrot.lane.b32.xlu0 %v807, 8
        %v939 = vpop.permute.xlu0 %938
        %940 = vrot.lane.b32.xlu0 %v809, 8
        %v941 = vpop.permute.xlu0 %940
        %942 = vrot.lane.b32.xlu0 %v811, 8
        %v943 = vpop.permute.xlu0 %942
        %944 = vrot.lane.b32.xlu0 %v813, 8
        %v945 = vpop.permute.xlu0 %944
        %946 = vrot.lane.b32.xlu0 %v816, 8
        %v947 = vpop.permute.xlu0 %946
        %948 = vrot.lane.b32.xlu0 %v818, 8
        %v949 = vpop.permute.xlu0 %948
        %950 = vrot.lane.b32.xlu0 %v820, 8
        %v951 = vpop.permute.xlu0 %950
        %952 = vrot.lane.b32.xlu0 %v822, 8
        %v953 = vpop.permute.xlu0 %952
        %954 = vrot.lane.b32.xlu0 %v825, 8
        %v955 = vpop.permute.xlu0 %954
        %956 = vrot.lane.b32.xlu0 %v827, 8
        %v957 = vpop.permute.xlu0 %956
        %958 = vrot.lane.b32.xlu0 %v829, 8
        %v959 = vpop.permute.xlu0 %958
        %960 = vrot.lane.b32.xlu0 %v831, 8
        %v961 = vpop.permute.xlu0 %960
        %962 = vrot.lane.b32.xlu0 %v834, 8
        %v963 = vpop.permute.xlu0 %962
        %964 = vrot.lane.b32.xlu0 %v836, 8
        %v965 = vpop.permute.xlu0 %964
        %966 = vrot.lane.b32.xlu0 %v838, 8
        %v967 = vpop.permute.xlu0 %966
        %968 = vrot.lane.b32.xlu0 %v840, 8
        %v969 = vpop.permute.xlu0 %968
        %970 = vrot.lane.b32.xlu0 %v843, 8
        %v971 = vpop.permute.xlu0 %970
        %972 = vrot.lane.b32.xlu0 %v845, 8
        %v973 = vpop.permute.xlu0 %972
        %974 = vrot.lane.b32.xlu0 %v847, 8
        %v975 = vpop.permute.xlu0 %974
        %976 = vrot.lane.b32.xlu0 %v849, 8
        %v977 = vpop.permute.xlu0 %976
        %1046 = vrot.lane.b32.xlu0 %v203, 12
        %v1047 = vpop.permute.xlu0 %1046
        %1048 = vrot.lane.b32.xlu0 %v204, 12
        %v1049 = vpop.permute.xlu0 %1048
        %1050 = vrot.lane.b32.xlu0 %v205, 12
        %v1051 = vpop.permute.xlu0 %1050
        %1052 = vrot.lane.b32.xlu0 %v206, 12
        %v1053 = vpop.permute.xlu0 %1052
        %1054 = vrot.lane.b32.xlu0 %v208, 12
        %v1055 = vpop.permute.xlu0 %1054
        %1056 = vrot.lane.b32.xlu0 %v209, 12
        %v1057 = vpop.permute.xlu0 %1056
        %1058 = vrot.lane.b32.xlu0 %v210, 12
        %v1059 = vpop.permute.xlu0 %1058
        %1060 = vrot.lane.b32.xlu0 %v211, 12
        %v1061 = vpop.permute.xlu0 %1060
        %1062 = vrot.lane.b32.xlu0 %v213, 12
        %v1063 = vpop.permute.xlu0 %1062
        %1064 = vrot.lane.b32.xlu0 %v214, 12
        %v1065 = vpop.permute.xlu0 %1064
        %1066 = vrot.lane.b32.xlu0 %v215, 12
        %v1067 = vpop.permute.xlu0 %1066
        %1068 = vrot.lane.b32.xlu0 %v216, 12
        %v1069 = vpop.permute.xlu0 %1068
        %1070 = vrot.lane.b32.xlu0 %v218, 12
        %v1071 = vpop.permute.xlu0 %1070
        %1072 = vrot.lane.b32.xlu0 %v219, 12
        %v1073 = vpop.permute.xlu0 %1072
        %1074 = vrot.lane.b32.xlu0 %v220, 12
        %v1075 = vpop.permute.xlu0 %1074
        %1076 = vrot.lane.b32.xlu0 %v221, 12
        %v1077 = vpop.permute.xlu0 %1076
        %1078 = vrot.lane.b32.xlu0 %v223, 12
        %v1079 = vpop.permute.xlu0 %1078
        %1080 = vrot.lane.b32.xlu0 %v224, 12
        %v1081 = vpop.permute.xlu0 %1080
        %1082 = vrot.lane.b32.xlu0 %v225, 12
        %v1083 = vpop.permute.xlu0 %1082
        %1084 = vrot.lane.b32.xlu0 %v226, 12
        %v1085 = vpop.permute.xlu0 %1084
        %1086 = vrot.lane.b32.xlu0 %v228, 12
        %v1087 = vpop.permute.xlu0 %1086
        %1088 = vrot.lane.b32.xlu0 %v229, 12
        %v1089 = vpop.permute.xlu0 %1088
        %1090 = vrot.lane.b32.xlu0 %v230, 12
        %v1091 = vpop.permute.xlu0 %1090
        %1092 = vrot.lane.b32.xlu0 %v231, 12
        %v1093 = vpop.permute.xlu0 %1092
        %1094 = vrot.lane.b32.xlu0 %v233, 12
        %v1095 = vpop.permute.xlu0 %1094
        %1096 = vrot.lane.b32.xlu0 %v234, 12
        %v1097 = vpop.permute.xlu0 %1096
        %1098 = vrot.lane.b32.xlu0 %v235, 12
        %v1099 = vpop.permute.xlu0 %1098
        %1100 = vrot.lane.b32.xlu0 %v236, 12
        %v1101 = vpop.permute.xlu0 %1100
        %1102 = vrot.lane.b32.xlu0 %v238, 12
        %v1103 = vpop.permute.xlu0 %1102
        %1104 = vrot.lane.b32.xlu0 %v239, 12
        %v1105 = vpop.permute.xlu0 %1104
        %1106 = vrot.lane.b32.xlu0 %v240, 12
        %v1107 = vpop.permute.xlu0 %1106
        %1108 = vrot.lane.b32.xlu0 %v241, 12
        %v1109 = vpop.permute.xlu0 %1108
        %1110 = vrot.lane.b32.xlu0 %v243, 12
        %v1111 = vpop.permute.xlu0 %1110
        %1112 = vrot.lane.b32.xlu0 %v244, 12
        %v1113 = vpop.permute.xlu0 %1112
        %1114 = vrot.lane.b32.xlu0 %v245, 12
        %v1115 = vpop.permute.xlu0 %1114
        %1116 = vrot.lane.b32.xlu0 %v246, 12
        %v1117 = vpop.permute.xlu0 %1116
        %1118 = vrot.lane.b32.xlu0 %v248, 12
        %v1119 = vpop.permute.xlu0 %1118
        %1120 = vrot.lane.b32.xlu0 %v249, 12
        %v1121 = vpop.permute.xlu0 %1120
        %1122 = vrot.lane.b32.xlu0 %v250, 12
        %v1123 = vpop.permute.xlu0 %1122
        %1124 = vrot.lane.b32.xlu0 %v251, 12
        %v1125 = vpop.permute.xlu0 %1124
        %1126 = vrot.lane.b32.xlu0 %v253, 12
        %v1127 = vpop.permute.xlu0 %1126
        %1128 = vrot.lane.b32.xlu0 %v254, 12
        %v1129 = vpop.permute.xlu0 %1128
        %1130 = vrot.lane.b32.xlu0 %v255, 12
        %v1131 = vpop.permute.xlu0 %1130
        %1132 = vrot.lane.b32.xlu0 %v256, 12
        %v1133 = vpop.permute.xlu0 %1132
        %1134 = vrot.lane.b32.xlu0 %v258, 12
        %v1135 = vpop.permute.xlu0 %1134
        %1136 = vrot.lane.b32.xlu0 %v259, 12
        %v1137 = vpop.permute.xlu0 %1136
        %1138 = vrot.lane.b32.xlu0 %v260, 12
        %v1139 = vpop.permute.xlu0 %1138
        %1140 = vrot.lane.b32.xlu0 %v261, 12
        %v1141 = vpop.permute.xlu0 %1140
        %1142 = vrot.lane.b32.xlu0 %v263, 12
        %v1143 = vpop.permute.xlu0 %1142
        %1144 = vrot.lane.b32.xlu0 %v264, 12
        %v1145 = vpop.permute.xlu0 %1144
        %1146 = vrot.lane.b32.xlu0 %v265, 12
        %v1147 = vpop.permute.xlu0 %1146
        %1148 = vrot.lane.b32.xlu0 %v266, 12
        %v1149 = vpop.permute.xlu0 %1148
        %1150 = vrot.lane.b32.xlu0 %v268, 12
        %v1151 = vpop.permute.xlu0 %1150
        %1152 = vrot.lane.b32.xlu0 %v269, 12
        %v1153 = vpop.permute.xlu0 %1152
        %1154 = vrot.lane.b32.xlu0 %v270, 12
        %v1155 = vpop.permute.xlu0 %1154
        %1156 = vrot.lane.b32.xlu0 %v271, 12
        %v1157 = vpop.permute.xlu0 %1156
        %1158 = vrot.lane.b32.xlu0 %v273, 12
        %v1159 = vpop.permute.xlu0 %1158
        %1160 = vrot.lane.b32.xlu0 %v274, 12
        %v1161 = vpop.permute.xlu0 %1160
        %1162 = vrot.lane.b32.xlu0 %v275, 12
        %v1163 = vpop.permute.xlu0 %1162
        %1164 = vrot.lane.b32.xlu0 %v276, 12
        %v1165 = vpop.permute.xlu0 %1164
        %1166 = vrot.lane.b32.xlu0 %v278, 12
        %v1167 = vpop.permute.xlu0 %1166
        %1168 = vrot.lane.b32.xlu0 %v279, 12
        %v1169 = vpop.permute.xlu0 %1168
        %1170 = vrot.lane.b32.xlu0 %v280, 12
        %v1171 = vpop.permute.xlu0 %1170
        %1172 = vrot.lane.b32.xlu0 %v281, 12
        %v1173 = vpop.permute.xlu0 %1172
        %v1239 = vrot.slane %v278, 1
        %v1240 = vrot.slane %v279, 1
        %v1241 = vsel %vm368, %v1239, %v1240
        %v1242 = vrot.slane %v280, 1
        %v1243 = vsel %vm368, %v1240, %v1242
        %v1244 = vrot.slane %v281, 1
        %v1245 = vsel %vm368, %v1242, %v1244
        %v1246 = vrot.slane %v282, 1
        %v1247 = vsel %vm368, %v1244, %v1246
        %1248 = vrot.lane.b32.xlu0 %v380, 16
        %v1249 = vpop.permute.xlu0 %1248
        %1250 = vrot.lane.b32.xlu0 %v382, 16
        %v1251 = vpop.permute.xlu0 %1250
        %1252 = vrot.lane.b32.xlu0 %v384, 16
        %v1253 = vpop.permute.xlu0 %1252
        %1254 = vrot.lane.b32.xlu0 %v386, 16
        %v1255 = vpop.permute.xlu0 %1254
        %1256 = vrot.lane.b32.xlu0 %v389, 16
        %v1257 = vpop.permute.xlu0 %1256
        %1258 = vrot.lane.b32.xlu0 %v391, 16
        %v1259 = vpop.permute.xlu0 %1258
        %1260 = vrot.lane.b32.xlu0 %v393, 16
        %v1261 = vpop.permute.xlu0 %1260
        %1262 = vrot.lane.b32.xlu0 %v395, 16
        %v1263 = vpop.permute.xlu0 %1262
        %1264 = vrot.lane.b32.xlu0 %v398, 16
        %v1265 = vpop.permute.xlu0 %1264
        %1266 = vrot.lane.b32.xlu0 %v400, 16
        %v1267 = vpop.permute.xlu0 %1266
        %1268 = vrot.lane.b32.xlu0 %v402, 16
        %v1269 = vpop.permute.xlu0 %1268
        %1270 = vrot.lane.b32.xlu0 %v404, 16
        %v1271 = vpop.permute.xlu0 %1270
        %1272 = vrot.lane.b32.xlu0 %v407, 16
        %v1273 = vpop.permute.xlu0 %1272
        %1274 = vrot.lane.b32.xlu0 %v409, 16
        %v1275 = vpop.permute.xlu0 %1274
        %1276 = vrot.lane.b32.xlu0 %v411, 16
        %v1277 = vpop.permute.xlu0 %1276
        %1278 = vrot.lane.b32.xlu0 %v413, 16
        %v1279 = vpop.permute.xlu0 %1278
        %1280 = vrot.lane.b32.xlu0 %v416, 16
        %v1281 = vpop.permute.xlu0 %1280
        %1282 = vrot.lane.b32.xlu0 %v418, 16
        %v1283 = vpop.permute.xlu0 %1282
        %1284 = vrot.lane.b32.xlu0 %v420, 16
        %v1285 = vpop.permute.xlu0 %1284
        %1286 = vrot.lane.b32.xlu0 %v422, 16
        %v1287 = vpop.permute.xlu0 %1286
        %1288 = vrot.lane.b32.xlu0 %v425, 16
        %v1289 = vpop.permute.xlu0 %1288
        %1290 = vrot.lane.b32.xlu0 %v427, 16
        %v1291 = vpop.permute.xlu0 %1290
        %1292 = vrot.lane.b32.xlu0 %v429, 16
        %v1293 = vpop.permute.xlu0 %1292
        %1294 = vrot.lane.b32.xlu0 %v431, 16
        %v1295 = vpop.permute.xlu0 %1294
        %1296 = vrot.lane.b32.xlu0 %v434, 16
        %v1297 = vpop.permute.xlu0 %1296
        %1298 = vrot.lane.b32.xlu0 %v436, 16
        %v1299 = vpop.permute.xlu0 %1298
        %1300 = vrot.lane.b32.xlu0 %v438, 16
        %v1301 = vpop.permute.xlu0 %1300
        %1302 = vrot.lane.b32.xlu0 %v440, 16
        %v1303 = vpop.permute.xlu0 %1302
        %1304 = vrot.lane.b32.xlu0 %v443, 16
        %v1305 = vpop.permute.xlu0 %1304
        %1306 = vrot.lane.b32.xlu0 %v445, 16
        %v1307 = vpop.permute.xlu0 %1306
        %1308 = vrot.lane.b32.xlu0 %v447, 16
        %v1309 = vpop.permute.xlu0 %1308
        %1310 = vrot.lane.b32.xlu0 %v449, 16
        %v1311 = vpop.permute.xlu0 %1310
        %1312 = vrot.lane.b32.xlu0 %v452, 16
        %v1313 = vpop.permute.xlu0 %1312
        %1314 = vrot.lane.b32.xlu0 %v454, 16
        %v1315 = vpop.permute.xlu0 %1314
        %1316 = vrot.lane.b32.xlu0 %v456, 16
        %v1317 = vpop.permute.xlu0 %1316
        %1318 = vrot.lane.b32.xlu0 %v458, 16
        %v1319 = vpop.permute.xlu0 %1318
        %1320 = vrot.lane.b32.xlu0 %v461, 16
        %v1321 = vpop.permute.xlu0 %1320
        %1322 = vrot.lane.b32.xlu0 %v463, 16
        %v1323 = vpop.permute.xlu0 %1322
        %1324 = vrot.lane.b32.xlu0 %v465, 16
        %v1325 = vpop.permute.xlu0 %1324
        %1326 = vrot.lane.b32.xlu0 %v467, 16
        %v1327 = vpop.permute.xlu0 %1326
        %1328 = vrot.lane.b32.xlu0 %v470, 16
        %v1329 = vpop.permute.xlu0 %1328
        %1330 = vrot.lane.b32.xlu0 %v472, 16
        %v1331 = vpop.permute.xlu0 %1330
        %1332 = vrot.lane.b32.xlu0 %v474, 16
        %v1333 = vpop.permute.xlu0 %1332
        %1334 = vrot.lane.b32.xlu0 %v476, 16
        %v1335 = vpop.permute.xlu0 %1334
        %1336 = vrot.lane.b32.xlu0 %v479, 16
        %v1337 = vpop.permute.xlu0 %1336
        %1338 = vrot.lane.b32.xlu0 %v481, 16
        %v1339 = vpop.permute.xlu0 %1338
        %1340 = vrot.lane.b32.xlu0 %v483, 16
        %v1341 = vpop.permute.xlu0 %1340
        %1342 = vrot.lane.b32.xlu0 %v485, 16
        %v1343 = vpop.permute.xlu0 %1342
        %1344 = vrot.lane.b32.xlu0 %v488, 16
        %v1345 = vpop.permute.xlu0 %1344
        %1346 = vrot.lane.b32.xlu0 %v490, 16
        %v1347 = vpop.permute.xlu0 %1346
        %1348 = vrot.lane.b32.xlu0 %v492, 16
        %v1349 = vpop.permute.xlu0 %1348
        %1350 = vrot.lane.b32.xlu0 %v494, 16
        %v1351 = vpop.permute.xlu0 %1350
        %1352 = vrot.lane.b32.xlu0 %v497, 16
        %v1353 = vpop.permute.xlu0 %1352
        %1354 = vrot.lane.b32.xlu0 %v499, 16
        %v1355 = vpop.permute.xlu0 %1354
        %1356 = vrot.lane.b32.xlu0 %v501, 16
        %v1357 = vpop.permute.xlu0 %1356
        %1358 = vrot.lane.b32.xlu0 %v503, 16
        %v1359 = vpop.permute.xlu0 %1358
        %1360 = vrot.lane.b32.xlu0 %v506, 16
        %v1361 = vpop.permute.xlu0 %1360
        %1362 = vrot.lane.b32.xlu0 %v508, 16
        %v1363 = vpop.permute.xlu0 %1362
        %1364 = vrot.lane.b32.xlu0 %v510, 16
        %v1365 = vpop.permute.xlu0 %1364
        %1366 = vrot.lane.b32.xlu0 %v512, 16
        %v1367 = vpop.permute.xlu0 %1366
        %1368 = vrot.lane.b32.xlu0 %v1241, 16
        %v1369 = vpop.permute.xlu0 %1368
        %1370 = vrot.lane.b32.xlu0 %v1243, 16
        %v1371 = vpop.permute.xlu0 %1370
        %1372 = vrot.lane.b32.xlu0 %v1245, 16
        %v1373 = vpop.permute.xlu0 %1372
        %1374 = vrot.lane.b32.xlu0 %v1247, 16
        %v1375 = vpop.permute.xlu0 %1374
        %v1440 = vrot.slane %v278, 2
        %v1441 = vrot.slane %v279, 2
        %v1442 = vsel %vm705, %v1440, %v1441
        %v1443 = vrot.slane %v280, 2
        %v1444 = vsel %vm705, %v1441, %v1443
        %v1445 = vrot.slane %v281, 2
        %v1446 = vsel %vm705, %v1443, %v1445
        %v1447 = vrot.slane %v282, 2
        %v1448 = vsel %vm705, %v1445, %v1447
        %1449 = vrot.lane.b32.xlu0 %v717, 20
        %v1450 = vpop.permute.xlu0 %1449
        %1451 = vrot.lane.b32.xlu0 %v719, 20
        %v1452 = vpop.permute.xlu0 %1451
        %1453 = vrot.lane.b32.xlu0 %v721, 20
        %v1454 = vpop.permute.xlu0 %1453
        %1455 = vrot.lane.b32.xlu0 %v723, 20
        %v1456 = vpop.permute.xlu0 %1455
        %1457 = vrot.lane.b32.xlu0 %v726, 20
        %v1458 = vpop.permute.xlu0 %1457
        %1459 = vrot.lane.b32.xlu0 %v728, 20
        %v1460 = vpop.permute.xlu0 %1459
        %1461 = vrot.lane.b32.xlu0 %v730, 20
        %v1462 = vpop.permute.xlu0 %1461
        %1463 = vrot.lane.b32.xlu0 %v732, 20
        %v1464 = vpop.permute.xlu0 %1463
        %1465 = vrot.lane.b32.xlu0 %v735, 20
        %v1466 = vpop.permute.xlu0 %1465
        %1467 = vrot.lane.b32.xlu0 %v737, 20
        %v1468 = vpop.permute.xlu0 %1467
        %1469 = vrot.lane.b32.xlu0 %v739, 20
        %v1470 = vpop.permute.xlu0 %1469
        %1471 = vrot.lane.b32.xlu0 %v741, 20
        %v1472 = vpop.permute.xlu0 %1471
        %1473 = vrot.lane.b32.xlu0 %v744, 20
        %v1474 = vpop.permute.xlu0 %1473
        %1475 = vrot.lane.b32.xlu0 %v746, 20
        %v1476 = vpop.permute.xlu0 %1475
        %1477 = vrot.lane.b32.xlu0 %v748, 20
        %v1478 = vpop.permute.xlu0 %1477
        %1479 = vrot.lane.b32.xlu0 %v750, 20
        %v1480 = vpop.permute.xlu0 %1479
        %1481 = vrot.lane.b32.xlu0 %v753, 20
        %v1482 = vpop.permute.xlu0 %1481
        %1483 = vrot.lane.b32.xlu0 %v755, 20
        %v1484 = vpop.permute.xlu0 %1483
        %1485 = vrot.lane.b32.xlu0 %v757, 20
        %v1486 = vpop.permute.xlu0 %1485
        %1487 = vrot.lane.b32.xlu0 %v759, 20
        %v1488 = vpop.permute.xlu0 %1487
        %1489 = vrot.lane.b32.xlu0 %v762, 20
        %v1490 = vpop.permute.xlu0 %1489
        %1491 = vrot.lane.b32.xlu0 %v764, 20
        %v1492 = vpop.permute.xlu0 %1491
        %1493 = vrot.lane.b32.xlu0 %v766, 20
        %v1494 = vpop.permute.xlu0 %1493
        %1495 = vrot.lane.b32.xlu0 %v768, 20
        %v1496 = vpop.permute.xlu0 %1495
        %1497 = vrot.lane.b32.xlu0 %v771, 20
        %v1498 = vpop.permute.xlu0 %1497
        %1499 = vrot.lane.b32.xlu0 %v773, 20
        %v1500 = vpop.permute.xlu0 %1499
        %1501 = vrot.lane.b32.xlu0 %v775, 20
        %v1502 = vpop.permute.xlu0 %1501
        %1503 = vrot.lane.b32.xlu0 %v777, 20
        %v1504 = vpop.permute.xlu0 %1503
        %1505 = vrot.lane.b32.xlu0 %v780, 20
        %v1506 = vpop.permute.xlu0 %1505
        %1507 = vrot.lane.b32.xlu0 %v782, 20
        %v1508 = vpop.permute.xlu0 %1507
        %1509 = vrot.lane.b32.xlu0 %v784, 20
        %v1510 = vpop.permute.xlu0 %1509
        %1511 = vrot.lane.b32.xlu0 %v786, 20
        %v1512 = vpop.permute.xlu0 %1511
        %1513 = vrot.lane.b32.xlu0 %v789, 20
        %v1514 = vpop.permute.xlu0 %1513
        %1515 = vrot.lane.b32.xlu0 %v791, 20
        %v1516 = vpop.permute.xlu0 %1515
        %1517 = vrot.lane.b32.xlu0 %v793, 20
        %v1518 = vpop.permute.xlu0 %1517
        %1519 = vrot.lane.b32.xlu0 %v795, 20
        %v1520 = vpop.permute.xlu0 %1519
        %1521 = vrot.lane.b32.xlu0 %v798, 20
        %v1522 = vpop.permute.xlu0 %1521
        %1523 = vrot.lane.b32.xlu0 %v800, 20
        %v1524 = vpop.permute.xlu0 %1523
        %1525 = vrot.lane.b32.xlu0 %v802, 20
        %v1526 = vpop.permute.xlu0 %1525
        %1527 = vrot.lane.b32.xlu0 %v804, 20
        %v1528 = vpop.permute.xlu0 %1527
        %1529 = vrot.lane.b32.xlu0 %v807, 20
        %v1530 = vpop.permute.xlu0 %1529
        %1531 = vrot.lane.b32.xlu0 %v809, 20
        %v1532 = vpop.permute.xlu0 %1531
        %1533 = vrot.lane.b32.xlu0 %v811, 20
        %v1534 = vpop.permute.xlu0 %1533
        %1535 = vrot.lane.b32.xlu0 %v813, 20
        %v1536 = vpop.permute.xlu0 %1535
        %1537 = vrot.lane.b32.xlu0 %v816, 20
        %v1538 = vpop.permute.xlu0 %1537
        %1539 = vrot.lane.b32.xlu0 %v818, 20
        %v1540 = vpop.permute.xlu0 %1539
        %1541 = vrot.lane.b32.xlu0 %v820, 20
        %v1542 = vpop.permute.xlu0 %1541
        %1543 = vrot.lane.b32.xlu0 %v822, 20
        %v1544 = vpop.permute.xlu0 %1543
        %1545 = vrot.lane.b32.xlu0 %v825, 20
        %v1546 = vpop.permute.xlu0 %1545
        %1547 = vrot.lane.b32.xlu0 %v827, 20
        %v1548 = vpop.permute.xlu0 %1547
        %1549 = vrot.lane.b32.xlu0 %v829, 20
        %v1550 = vpop.permute.xlu0 %1549
        %1551 = vrot.lane.b32.xlu0 %v831, 20
        %v1552 = vpop.permute.xlu0 %1551
        %1553 = vrot.lane.b32.xlu0 %v834, 20
        %v1554 = vpop.permute.xlu0 %1553
        %1555 = vrot.lane.b32.xlu0 %v836, 20
        %v1556 = vpop.permute.xlu0 %1555
        %1557 = vrot.lane.b32.xlu0 %v838, 20
        %v1558 = vpop.permute.xlu0 %1557
        %1559 = vrot.lane.b32.xlu0 %v840, 20
        %v1560 = vpop.permute.xlu0 %1559
        %1561 = vrot.lane.b32.xlu0 %v843, 20
        %v1562 = vpop.permute.xlu0 %1561
        %1563 = vrot.lane.b32.xlu0 %v845, 20
        %v1564 = vpop.permute.xlu0 %1563
        %1565 = vrot.lane.b32.xlu0 %v847, 20
        %v1566 = vpop.permute.xlu0 %1565
        %1567 = vrot.lane.b32.xlu0 %v849, 20
        %v1568 = vpop.permute.xlu0 %1567
        %1569 = vrot.lane.b32.xlu0 %v1442, 20
        %v1570 = vpop.permute.xlu0 %1569
        %1571 = vrot.lane.b32.xlu0 %v1444, 20
        %v1572 = vpop.permute.xlu0 %1571
        %1573 = vrot.lane.b32.xlu0 %v1446, 20
        %v1574 = vpop.permute.xlu0 %1573
        %1575 = vrot.lane.b32.xlu0 %v1448, 20
        %v1576 = vpop.permute.xlu0 %1575
        %1645 = vrot.lane.b32.xlu0 %v208, 24
        %v1646 = vpop.permute.xlu0 %1645
        %1647 = vrot.lane.b32.xlu0 %v209, 24
        %v1648 = vpop.permute.xlu0 %1647
        %1649 = vrot.lane.b32.xlu0 %v210, 24
        %v1650 = vpop.permute.xlu0 %1649
        %1651 = vrot.lane.b32.xlu0 %v211, 24
        %v1652 = vpop.permute.xlu0 %1651
        %1653 = vrot.lane.b32.xlu0 %v213, 24
        %v1654 = vpop.permute.xlu0 %1653
        %1655 = vrot.lane.b32.xlu0 %v214, 24
        %v1656 = vpop.permute.xlu0 %1655
        %1657 = vrot.lane.b32.xlu0 %v215, 24
        %v1658 = vpop.permute.xlu0 %1657
        %1659 = vrot.lane.b32.xlu0 %v216, 24
        %v1660 = vpop.permute.xlu0 %1659
        %1661 = vrot.lane.b32.xlu0 %v218, 24
        %v1662 = vpop.permute.xlu0 %1661
        %1663 = vrot.lane.b32.xlu0 %v219, 24
        %v1664 = vpop.permute.xlu0 %1663
        %1665 = vrot.lane.b32.xlu0 %v220, 24
        %v1666 = vpop.permute.xlu0 %1665
        %1667 = vrot.lane.b32.xlu0 %v221, 24
        %v1668 = vpop.permute.xlu0 %1667
        %1669 = vrot.lane.b32.xlu0 %v223, 24
        %v1670 = vpop.permute.xlu0 %1669
        %1671 = vrot.lane.b32.xlu0 %v224, 24
        %v1672 = vpop.permute.xlu0 %1671
        %1673 = vrot.lane.b32.xlu0 %v225, 24
        %v1674 = vpop.permute.xlu0 %1673
        %1675 = vrot.lane.b32.xlu0 %v226, 24
        %v1676 = vpop.permute.xlu0 %1675
        %1677 = vrot.lane.b32.xlu0 %v228, 24
        %v1678 = vpop.permute.xlu0 %1677
        %1679 = vrot.lane.b32.xlu0 %v229, 24
        %v1680 = vpop.permute.xlu0 %1679
        %1681 = vrot.lane.b32.xlu0 %v230, 24
        %v1682 = vpop.permute.xlu0 %1681
        %1683 = vrot.lane.b32.xlu0 %v231, 24
        %v1684 = vpop.permute.xlu0 %1683
        %1685 = vrot.lane.b32.xlu0 %v233, 24
        %v1686 = vpop.permute.xlu0 %1685
        %1687 = vrot.lane.b32.xlu0 %v234, 24
        %v1688 = vpop.permute.xlu0 %1687
        %1689 = vrot.lane.b32.xlu0 %v235, 24
        %v1690 = vpop.permute.xlu0 %1689
        %1691 = vrot.lane.b32.xlu0 %v236, 24
        %v1692 = vpop.permute.xlu0 %1691
        %1693 = vrot.lane.b32.xlu0 %v238, 24
        %v1694 = vpop.permute.xlu0 %1693
        %1695 = vrot.lane.b32.xlu0 %v239, 24
        %v1696 = vpop.permute.xlu0 %1695
        %1697 = vrot.lane.b32.xlu0 %v240, 24
        %v1698 = vpop.permute.xlu0 %1697
        %1699 = vrot.lane.b32.xlu0 %v241, 24
        %v1700 = vpop.permute.xlu0 %1699
        %1701 = vrot.lane.b32.xlu0 %v243, 24
        %v1702 = vpop.permute.xlu0 %1701
        %1703 = vrot.lane.b32.xlu0 %v244, 24
        %v1704 = vpop.permute.xlu0 %1703
        %1705 = vrot.lane.b32.xlu0 %v245, 24
        %v1706 = vpop.permute.xlu0 %1705
        %1707 = vrot.lane.b32.xlu0 %v246, 24
        %v1708 = vpop.permute.xlu0 %1707
        %1709 = vrot.lane.b32.xlu0 %v248, 24
        %v1710 = vpop.permute.xlu0 %1709
        %1711 = vrot.lane.b32.xlu0 %v249, 24
        %v1712 = vpop.permute.xlu0 %1711
        %1713 = vrot.lane.b32.xlu0 %v250, 24
        %v1714 = vpop.permute.xlu0 %1713
        %1715 = vrot.lane.b32.xlu0 %v251, 24
        %v1716 = vpop.permute.xlu0 %1715
        %1717 = vrot.lane.b32.xlu0 %v253, 24
        %v1718 = vpop.permute.xlu0 %1717
        %1719 = vrot.lane.b32.xlu0 %v254, 24
        %v1720 = vpop.permute.xlu0 %1719
        %1721 = vrot.lane.b32.xlu0 %v255, 24
        %v1722 = vpop.permute.xlu0 %1721
        %1723 = vrot.lane.b32.xlu0 %v256, 24
        %v1724 = vpop.permute.xlu0 %1723
        %1725 = vrot.lane.b32.xlu0 %v258, 24
        %v1726 = vpop.permute.xlu0 %1725
        %1727 = vrot.lane.b32.xlu0 %v259, 24
        %v1728 = vpop.permute.xlu0 %1727
        %1729 = vrot.lane.b32.xlu0 %v260, 24
        %v1730 = vpop.permute.xlu0 %1729
        %1731 = vrot.lane.b32.xlu0 %v261, 24
        %v1732 = vpop.permute.xlu0 %1731
        %1733 = vrot.lane.b32.xlu0 %v263, 24
        %v1734 = vpop.permute.xlu0 %1733
        %1735 = vrot.lane.b32.xlu0 %v264, 24
        %v1736 = vpop.permute.xlu0 %1735
        %1737 = vrot.lane.b32.xlu0 %v265, 24
        %v1738 = vpop.permute.xlu0 %1737
        %1739 = vrot.lane.b32.xlu0 %v266, 24
        %v1740 = vpop.permute.xlu0 %1739
        %1741 = vrot.lane.b32.xlu0 %v268, 24
        %v1742 = vpop.permute.xlu0 %1741
        %1743 = vrot.lane.b32.xlu0 %v269, 24
        %v1744 = vpop.permute.xlu0 %1743
        %1745 = vrot.lane.b32.xlu0 %v270, 24
        %v1746 = vpop.permute.xlu0 %1745
        %1747 = vrot.lane.b32.xlu0 %v271, 24
        %v1748 = vpop.permute.xlu0 %1747
        %1749 = vrot.lane.b32.xlu0 %v273, 24
        %v1750 = vpop.permute.xlu0 %1749
        %1751 = vrot.lane.b32.xlu0 %v274, 24
        %v1752 = vpop.permute.xlu0 %1751
        %1753 = vrot.lane.b32.xlu0 %v275, 24
        %v1754 = vpop.permute.xlu0 %1753
        %1755 = vrot.lane.b32.xlu0 %v276, 24
        %v1756 = vpop.permute.xlu0 %1755
        %1757 = vrot.lane.b32.xlu0 %v278, 24
        %v1758 = vpop.permute.xlu0 %1757
        %1759 = vrot.lane.b32.xlu0 %v279, 24
        %v1760 = vpop.permute.xlu0 %1759
        %1761 = vrot.lane.b32.xlu0 %v280, 24
        %v1762 = vpop.permute.xlu0 %1761
        %1763 = vrot.lane.b32.xlu0 %v281, 24
        %v1764 = vpop.permute.xlu0 %1763
        %1765 = vrot.lane.b32.xlu0 %v283, 24
        %v1766 = vpop.permute.xlu0 %1765
        %1767 = vrot.lane.b32.xlu0 %v284, 24
        %v1768 = vpop.permute.xlu0 %1767
        %1769 = vrot.lane.b32.xlu0 %v285, 24
        %v1770 = vpop.permute.xlu0 %1769
        %1771 = vrot.lane.b32.xlu0 %v286, 24
        %v1772 = vpop.permute.xlu0 %1771
        %v1838 = vrot.slane %v283, 1
        %v1839 = vrot.slane %v284, 1
        %v1840 = vsel %vm368, %v1838, %v1839
        %v1841 = vrot.slane %v285, 1
        %v1842 = vsel %vm368, %v1839, %v1841
        %v1843 = vrot.slane %v286, 1
        %v1844 = vsel %vm368, %v1841, %v1843
        %v1845 = vrot.slane %v287, 1
        %v1846 = vsel %vm368, %v1843, %v1845
        %1847 = vrot.lane.b32.xlu0 %v389, 28
        %v1848 = vpop.permute.xlu0 %1847
        %1849 = vrot.lane.b32.xlu0 %v391, 28
        %v1850 = vpop.permute.xlu0 %1849
        %1851 = vrot.lane.b32.xlu0 %v393, 28
        %v1852 = vpop.permute.xlu0 %1851
        %1853 = vrot.lane.b32.xlu0 %v395, 28
        %v1854 = vpop.permute.xlu0 %1853
        %1855 = vrot.lane.b32.xlu0 %v398, 28
        %v1856 = vpop.permute.xlu0 %1855
        %1857 = vrot.lane.b32.xlu0 %v400, 28
        %v1858 = vpop.permute.xlu0 %1857
        %1859 = vrot.lane.b32.xlu0 %v402, 28
        %v1860 = vpop.permute.xlu0 %1859
        %1861 = vrot.lane.b32.xlu0 %v404, 28
        %v1862 = vpop.permute.xlu0 %1861
        %1863 = vrot.lane.b32.xlu0 %v407, 28
        %v1864 = vpop.permute.xlu0 %1863
        %1865 = vrot.lane.b32.xlu0 %v409, 28
        %v1866 = vpop.permute.xlu0 %1865
        %1867 = vrot.lane.b32.xlu0 %v411, 28
        %v1868 = vpop.permute.xlu0 %1867
        %1869 = vrot.lane.b32.xlu0 %v413, 28
        %v1870 = vpop.permute.xlu0 %1869
        %1871 = vrot.lane.b32.xlu0 %v416, 28
        %v1872 = vpop.permute.xlu0 %1871
        %1873 = vrot.lane.b32.xlu0 %v418, 28
        %v1874 = vpop.permute.xlu0 %1873
        %1875 = vrot.lane.b32.xlu0 %v420, 28
        %v1876 = vpop.permute.xlu0 %1875
        %1877 = vrot.lane.b32.xlu0 %v422, 28
        %v1878 = vpop.permute.xlu0 %1877
        %1879 = vrot.lane.b32.xlu0 %v425, 28
        %v1880 = vpop.permute.xlu0 %1879
        %1881 = vrot.lane.b32.xlu0 %v427, 28
        %v1882 = vpop.permute.xlu0 %1881
        %1883 = vrot.lane.b32.xlu0 %v429, 28
        %v1884 = vpop.permute.xlu0 %1883
        %1885 = vrot.lane.b32.xlu0 %v431, 28
        %v1886 = vpop.permute.xlu0 %1885
        %1887 = vrot.lane.b32.xlu0 %v434, 28
        %v1888 = vpop.permute.xlu0 %1887
        %1889 = vrot.lane.b32.xlu0 %v436, 28
        %v1890 = vpop.permute.xlu0 %1889
        %1891 = vrot.lane.b32.xlu0 %v438, 28
        %v1892 = vpop.permute.xlu0 %1891
        %1893 = vrot.lane.b32.xlu0 %v440, 28
        %v1894 = vpop.permute.xlu0 %1893
        %1895 = vrot.lane.b32.xlu0 %v443, 28
        %v1896 = vpop.permute.xlu0 %1895
        %1897 = vrot.lane.b32.xlu0 %v445, 28
        %v1898 = vpop.permute.xlu0 %1897
        %1899 = vrot.lane.b32.xlu0 %v447, 28
        %v1900 = vpop.permute.xlu0 %1899
        %1901 = vrot.lane.b32.xlu0 %v449, 28
        %v1902 = vpop.permute.xlu0 %1901
        %1903 = vrot.lane.b32.xlu0 %v452, 28
        %v1904 = vpop.permute.xlu0 %1903
        %1905 = vrot.lane.b32.xlu0 %v454, 28
        %v1906 = vpop.permute.xlu0 %1905
        %1907 = vrot.lane.b32.xlu0 %v456, 28
        %v1908 = vpop.permute.xlu0 %1907
        %1909 = vrot.lane.b32.xlu0 %v458, 28
        %v1910 = vpop.permute.xlu0 %1909
        %1911 = vrot.lane.b32.xlu0 %v461, 28
        %v1912 = vpop.permute.xlu0 %1911
        %1913 = vrot.lane.b32.xlu0 %v463, 28
        %v1914 = vpop.permute.xlu0 %1913
        %1915 = vrot.lane.b32.xlu0 %v465, 28
        %v1916 = vpop.permute.xlu0 %1915
        %1917 = vrot.lane.b32.xlu0 %v467, 28
        %v1918 = vpop.permute.xlu0 %1917
        %1919 = vrot.lane.b32.xlu0 %v470, 28
        %v1920 = vpop.permute.xlu0 %1919
        %1921 = vrot.lane.b32.xlu0 %v472, 28
        %v1922 = vpop.permute.xlu0 %1921
        %1923 = vrot.lane.b32.xlu0 %v474, 28
        %v1924 = vpop.permute.xlu0 %1923
        %1925 = vrot.lane.b32.xlu0 %v476, 28
        %v1926 = vpop.permute.xlu0 %1925
        %1927 = vrot.lane.b32.xlu0 %v479, 28
        %v1928 = vpop.permute.xlu0 %1927
        %1929 = vrot.lane.b32.xlu0 %v481, 28
        %v1930 = vpop.permute.xlu0 %1929
        %1931 = vrot.lane.b32.xlu0 %v483, 28
        %v1932 = vpop.permute.xlu0 %1931
        %1933 = vrot.lane.b32.xlu0 %v485, 28
        %v1934 = vpop.permute.xlu0 %1933
        %1935 = vrot.lane.b32.xlu0 %v488, 28
        %v1936 = vpop.permute.xlu0 %1935
        %1937 = vrot.lane.b32.xlu0 %v490, 28
        %v1938 = vpop.permute.xlu0 %1937
        %1939 = vrot.lane.b32.xlu0 %v492, 28
        %v1940 = vpop.permute.xlu0 %1939
        %1941 = vrot.lane.b32.xlu0 %v494, 28
        %v1942 = vpop.permute.xlu0 %1941
        %1943 = vrot.lane.b32.xlu0 %v497, 28
        %v1944 = vpop.permute.xlu0 %1943
        %1945 = vrot.lane.b32.xlu0 %v499, 28
        %v1946 = vpop.permute.xlu0 %1945
        %1947 = vrot.lane.b32.xlu0 %v501, 28
        %v1948 = vpop.permute.xlu0 %1947
        %1949 = vrot.lane.b32.xlu0 %v503, 28
        %v1950 = vpop.permute.xlu0 %1949
        %1951 = vrot.lane.b32.xlu0 %v506, 28
        %v1952 = vpop.permute.xlu0 %1951
        %1953 = vrot.lane.b32.xlu0 %v508, 28
        %v1954 = vpop.permute.xlu0 %1953
        %1955 = vrot.lane.b32.xlu0 %v510, 28
        %v1956 = vpop.permute.xlu0 %1955
        %1957 = vrot.lane.b32.xlu0 %v512, 28
        %v1958 = vpop.permute.xlu0 %1957
        %1959 = vrot.lane.b32.xlu0 %v1241, 28
        %v1960 = vpop.permute.xlu0 %1959
        %1961 = vrot.lane.b32.xlu0 %v1243, 28
        %v1962 = vpop.permute.xlu0 %1961
        %1963 = vrot.lane.b32.xlu0 %v1245, 28
        %v1964 = vpop.permute.xlu0 %1963
        %1965 = vrot.lane.b32.xlu0 %v1247, 28
        %v1966 = vpop.permute.xlu0 %1965
        %1967 = vrot.lane.b32.xlu0 %v1840, 28
        %v1968 = vpop.permute.xlu0 %1967
        %1969 = vrot.lane.b32.xlu0 %v1842, 28
        %v1970 = vpop.permute.xlu0 %1969
        %1971 = vrot.lane.b32.xlu0 %v1844, 28
        %v1972 = vpop.permute.xlu0 %1971
        %1973 = vrot.lane.b32.xlu0 %v1846, 28
        %v1974 = vpop.permute.xlu0 %1973
        %v2039 = vrot.slane %v283, 2
        %v2040 = vrot.slane %v284, 2
        %v2041 = vsel %vm705, %v2039, %v2040
        %v2042 = vrot.slane %v285, 2
        %v2043 = vsel %vm705, %v2040, %v2042
        %v2044 = vrot.slane %v286, 2
        %v2045 = vsel %vm705, %v2042, %v2044
        %v2046 = vrot.slane %v287, 2
        %v2047 = vsel %vm705, %v2044, %v2046
        %2048 = vrot.lane.b32.xlu0 %v726, 32
        %v2049 = vpop.permute.xlu0 %2048
        %2050 = vrot.lane.b32.xlu0 %v728, 32
        %v2051 = vpop.permute.xlu0 %2050
        %2052 = vrot.lane.b32.xlu0 %v730, 32
        %v2053 = vpop.permute.xlu0 %2052
        %2054 = vrot.lane.b32.xlu0 %v732, 32
        %v2055 = vpop.permute.xlu0 %2054
        %2056 = vrot.lane.b32.xlu0 %v735, 32
        %v2057 = vpop.permute.xlu0 %2056
        %2058 = vrot.lane.b32.xlu0 %v737, 32
        %v2059 = vpop.permute.xlu0 %2058
        %2060 = vrot.lane.b32.xlu0 %v739, 32
        %v2061 = vpop.permute.xlu0 %2060
        %2062 = vrot.lane.b32.xlu0 %v741, 32
        %v2063 = vpop.permute.xlu0 %2062
        %2064 = vrot.lane.b32.xlu0 %v744, 32
        %v2065 = vpop.permute.xlu0 %2064
        %2066 = vrot.lane.b32.xlu0 %v746, 32
        %v2067 = vpop.permute.xlu0 %2066
        %2068 = vrot.lane.b32.xlu0 %v748, 32
        %v2069 = vpop.permute.xlu0 %2068
        %2070 = vrot.lane.b32.xlu0 %v750, 32
        %v2071 = vpop.permute.xlu0 %2070
        %2072 = vrot.lane.b32.xlu0 %v753, 32
        %v2073 = vpop.permute.xlu0 %2072
        %2074 = vrot.lane.b32.xlu0 %v755, 32
        %v2075 = vpop.permute.xlu0 %2074
        %2076 = vrot.lane.b32.xlu0 %v757, 32
        %v2077 = vpop.permute.xlu0 %2076
        %2078 = vrot.lane.b32.xlu0 %v759, 32
        %v2079 = vpop.permute.xlu0 %2078
        %2080 = vrot.lane.b32.xlu0 %v762, 32
        %v2081 = vpop.permute.xlu0 %2080
        %2082 = vrot.lane.b32.xlu0 %v764, 32
        %v2083 = vpop.permute.xlu0 %2082
        %2084 = vrot.lane.b32.xlu0 %v766, 32
        %v2085 = vpop.permute.xlu0 %2084
        %2086 = vrot.lane.b32.xlu0 %v768, 32
        %v2087 = vpop.permute.xlu0 %2086
        %2088 = vrot.lane.b32.xlu0 %v771, 32
        %v2089 = vpop.permute.xlu0 %2088
        %2090 = vrot.lane.b32.xlu0 %v773, 32
        %v2091 = vpop.permute.xlu0 %2090
        %2092 = vrot.lane.b32.xlu0 %v775, 32
        %v2093 = vpop.permute.xlu0 %2092
        %2094 = vrot.lane.b32.xlu0 %v777, 32
        %v2095 = vpop.permute.xlu0 %2094
        %2096 = vrot.lane.b32.xlu0 %v780, 32
        %v2097 = vpop.permute.xlu0 %2096
        %2098 = vrot.lane.b32.xlu0 %v782, 32
        %v2099 = vpop.permute.xlu0 %2098
        %2100 = vrot.lane.b32.xlu0 %v784, 32
        %v2101 = vpop.permute.xlu0 %2100
        %2102 = vrot.lane.b32.xlu0 %v786, 32
        %v2103 = vpop.permute.xlu0 %2102
        %2104 = vrot.lane.b32.xlu0 %v789, 32
        %v2105 = vpop.permute.xlu0 %2104
        %2106 = vrot.lane.b32.xlu0 %v791, 32
        %v2107 = vpop.permute.xlu0 %2106
        %2108 = vrot.lane.b32.xlu0 %v793, 32
        %v2109 = vpop.permute.xlu0 %2108
        %2110 = vrot.lane.b32.xlu0 %v795, 32
        %v2111 = vpop.permute.xlu0 %2110
        %2112 = vrot.lane.b32.xlu0 %v798, 32
        %v2113 = vpop.permute.xlu0 %2112
        %2114 = vrot.lane.b32.xlu0 %v800, 32
        %v2115 = vpop.permute.xlu0 %2114
        %2116 = vrot.lane.b32.xlu0 %v802, 32
        %v2117 = vpop.permute.xlu0 %2116
        %2118 = vrot.lane.b32.xlu0 %v804, 32
        %v2119 = vpop.permute.xlu0 %2118
        %2120 = vrot.lane.b32.xlu0 %v807, 32
        %v2121 = vpop.permute.xlu0 %2120
        %2122 = vrot.lane.b32.xlu0 %v809, 32
        %v2123 = vpop.permute.xlu0 %2122
        %2124 = vrot.lane.b32.xlu0 %v811, 32
        %v2125 = vpop.permute.xlu0 %2124
        %2126 = vrot.lane.b32.xlu0 %v813, 32
        %v2127 = vpop.permute.xlu0 %2126
        %2128 = vrot.lane.b32.xlu0 %v816, 32
        %v2129 = vpop.permute.xlu0 %2128
        %2130 = vrot.lane.b32.xlu0 %v818, 32
        %v2131 = vpop.permute.xlu0 %2130
        %2132 = vrot.lane.b32.xlu0 %v820, 32
        %v2133 = vpop.permute.xlu0 %2132
        %2134 = vrot.lane.b32.xlu0 %v822, 32
        %v2135 = vpop.permute.xlu0 %2134
        %2136 = vrot.lane.b32.xlu0 %v825, 32
        %v2137 = vpop.permute.xlu0 %2136
        %2138 = vrot.lane.b32.xlu0 %v827, 32
        %v2139 = vpop.permute.xlu0 %2138
        %2140 = vrot.lane.b32.xlu0 %v829, 32
        %v2141 = vpop.permute.xlu0 %2140
        %2142 = vrot.lane.b32.xlu0 %v831, 32
        %v2143 = vpop.permute.xlu0 %2142
        %2144 = vrot.lane.b32.xlu0 %v834, 32
        %v2145 = vpop.permute.xlu0 %2144
        %2146 = vrot.lane.b32.xlu0 %v836, 32
        %v2147 = vpop.permute.xlu0 %2146
        %2148 = vrot.lane.b32.xlu0 %v838, 32
        %v2149 = vpop.permute.xlu0 %2148
        %2150 = vrot.lane.b32.xlu0 %v840, 32
        %v2151 = vpop.permute.xlu0 %2150
        %2152 = vrot.lane.b32.xlu0 %v843, 32
        %v2153 = vpop.permute.xlu0 %2152
        %2154 = vrot.lane.b32.xlu0 %v845, 32
        %v2155 = vpop.permute.xlu0 %2154
        %2156 = vrot.lane.b32.xlu0 %v847, 32
        %v2157 = vpop.permute.xlu0 %2156
        %2158 = vrot.lane.b32.xlu0 %v849, 32
        %v2159 = vpop.permute.xlu0 %2158
        %2160 = vrot.lane.b32.xlu0 %v1442, 32
        %v2161 = vpop.permute.xlu0 %2160
        %2162 = vrot.lane.b32.xlu0 %v1444, 32
        %v2163 = vpop.permute.xlu0 %2162
        %2164 = vrot.lane.b32.xlu0 %v1446, 32
        %v2165 = vpop.permute.xlu0 %2164
        %2166 = vrot.lane.b32.xlu0 %v1448, 32
        %v2167 = vpop.permute.xlu0 %2166
        %2168 = vrot.lane.b32.xlu0 %v2041, 32
        %v2169 = vpop.permute.xlu0 %2168
        %2170 = vrot.lane.b32.xlu0 %v2043, 32
        %v2171 = vpop.permute.xlu0 %2170
        %2172 = vrot.lane.b32.xlu0 %v2045, 32
        %v2173 = vpop.permute.xlu0 %2172
        %2174 = vrot.lane.b32.xlu0 %v2047, 32
        %v2175 = vpop.permute.xlu0 %2174
        %vm2240 = vcmask 31744
        %v2241 = vsel %vm2240, %v198, %v514
        %v2242 = vsel %vm2240, %v199, %v516
        %v2243 = vsel %vm2240, %v200, %v518
        %v2244 = vsel %vm2240, %v201, %v520
        %v2245 = vsel %vm2240, %v203, %v522
        %v2246 = vsel %vm2240, %v204, %v524
        %v2247 = vsel %vm2240, %v205, %v526
        %v2248 = vsel %vm2240, %v206, %v528
        %v2249 = vsel %vm2240, %v208, %v530
        %v2250 = vsel %vm2240, %v209, %v532
        %v2251 = vsel %vm2240, %v210, %v534
        %v2252 = vsel %vm2240, %v211, %v536
        %v2253 = vsel %vm2240, %v213, %v538
        %v2254 = vsel %vm2240, %v214, %v540
        %v2255 = vsel %vm2240, %v215, %v542
        %v2256 = vsel %vm2240, %v216, %v544
        %v2257 = vsel %vm2240, %v218, %v546
        %v2258 = vsel %vm2240, %v219, %v548
        %v2259 = vsel %vm2240, %v220, %v550
        %v2260 = vsel %vm2240, %v221, %v552
        %v2261 = vsel %vm2240, %v223, %v554
        %v2262 = vsel %vm2240, %v224, %v556
        %v2263 = vsel %vm2240, %v225, %v558
        %v2264 = vsel %vm2240, %v226, %v560
        %v2265 = vsel %vm2240, %v228, %v562
        %v2266 = vsel %vm2240, %v229, %v564
        %v2267 = vsel %vm2240, %v230, %v566
        %v2268 = vsel %vm2240, %v231, %v568
        %v2269 = vsel %vm2240, %v233, %v570
        %v2270 = vsel %vm2240, %v234, %v572
        %v2271 = vsel %vm2240, %v235, %v574
        %v2272 = vsel %vm2240, %v236, %v576
        %v2273 = vsel %vm2240, %v238, %v578
        %v2274 = vsel %vm2240, %v239, %v580
        %v2275 = vsel %vm2240, %v240, %v582
        %v2276 = vsel %vm2240, %v241, %v584
        %v2277 = vsel %vm2240, %v243, %v586
        %v2278 = vsel %vm2240, %v244, %v588
        %v2279 = vsel %vm2240, %v245, %v590
        %v2280 = vsel %vm2240, %v246, %v592
        %v2281 = vsel %vm2240, %v248, %v594
        %v2282 = vsel %vm2240, %v249, %v596
        %v2283 = vsel %vm2240, %v250, %v598
        %v2284 = vsel %vm2240, %v251, %v600
        %v2285 = vsel %vm2240, %v253, %v602
        %v2286 = vsel %vm2240, %v254, %v604
        %v2287 = vsel %vm2240, %v255, %v606
        %v2288 = vsel %vm2240, %v256, %v608
        %v2289 = vsel %vm2240, %v258, %v610
        %v2290 = vsel %vm2240, %v259, %v612
        %v2291 = vsel %vm2240, %v260, %v614
        %v2292 = vsel %vm2240, %v261, %v616
        %v2293 = vsel %vm2240, %v263, %v618
        %v2294 = vsel %vm2240, %v264, %v620
        %v2295 = vsel %vm2240, %v265, %v622
        %v2296 = vsel %vm2240, %v266, %v624
        %v2297 = vsel %vm2240, %v268, %v626
        %v2298 = vsel %vm2240, %v269, %v628
        %v2299 = vsel %vm2240, %v270, %v630
        %v2300 = vsel %vm2240, %v271, %v632
        %v2301 = vsel %vm2240, %v273, %v634
        %v2302 = vsel %vm2240, %v274, %v636
        %v2303 = vsel %vm2240, %v275, %v638
        %v2304 = vsel %vm2240, %v276, %v640
        %vm2305 = vcmask 64512
        %v2306 = vsel %vm2305, %v2241, %v851
        %v2307 = vsel %vm2305, %v2242, %v853
        %v2308 = vsel %vm2305, %v2243, %v855
        %v2309 = vsel %vm2305, %v2244, %v857
        %v2310 = vsel %vm2305, %v2245, %v859
        %v2311 = vsel %vm2305, %v2246, %v861
        %v2312 = vsel %vm2305, %v2247, %v863
        %v2313 = vsel %vm2305, %v2248, %v865
        %v2314 = vsel %vm2305, %v2249, %v867
        %v2315 = vsel %vm2305, %v2250, %v869
        %v2316 = vsel %vm2305, %v2251, %v871
        %v2317 = vsel %vm2305, %v2252, %v873
        %v2318 = vsel %vm2305, %v2253, %v875
        %v2319 = vsel %vm2305, %v2254, %v877
        %v2320 = vsel %vm2305, %v2255, %v879
        %v2321 = vsel %vm2305, %v2256, %v881
        %v2322 = vsel %vm2305, %v2257, %v883
        %v2323 = vsel %vm2305, %v2258, %v885
        %v2324 = vsel %vm2305, %v2259, %v887
        %v2325 = vsel %vm2305, %v2260, %v889
        %v2326 = vsel %vm2305, %v2261, %v891
        %v2327 = vsel %vm2305, %v2262, %v893
        %v2328 = vsel %vm2305, %v2263, %v895
        %v2329 = vsel %vm2305, %v2264, %v897
        %v2330 = vsel %vm2305, %v2265, %v899
        %v2331 = vsel %vm2305, %v2266, %v901
        %v2332 = vsel %vm2305, %v2267, %v903
        %v2333 = vsel %vm2305, %v2268, %v905
        %v2334 = vsel %vm2305, %v2269, %v907
        %v2335 = vsel %vm2305, %v2270, %v909
        %v2336 = vsel %vm2305, %v2271, %v911
        %v2337 = vsel %vm2305, %v2272, %v913
        %v2338 = vsel %vm2305, %v2273, %v915
        %v2339 = vsel %vm2305, %v2274, %v917
        %v2340 = vsel %vm2305, %v2275, %v919
        %v2341 = vsel %vm2305, %v2276, %v921
        %v2342 = vsel %vm2305, %v2277, %v923
        %v2343 = vsel %vm2305, %v2278, %v925
        %v2344 = vsel %vm2305, %v2279, %v927
        %v2345 = vsel %vm2305, %v2280, %v929
        %v2346 = vsel %vm2305, %v2281, %v931
        %v2347 = vsel %vm2305, %v2282, %v933
        %v2348 = vsel %vm2305, %v2283, %v935
        %v2349 = vsel %vm2305, %v2284, %v937
        %v2350 = vsel %vm2305, %v2285, %v939
        %v2351 = vsel %vm2305, %v2286, %v941
        %v2352 = vsel %vm2305, %v2287, %v943
        %v2353 = vsel %vm2305, %v2288, %v945
        %v2354 = vsel %vm2305, %v2289, %v947
        %v2355 = vsel %vm2305, %v2290, %v949
        %v2356 = vsel %vm2305, %v2291, %v951
        %v2357 = vsel %vm2305, %v2292, %v953
        %v2358 = vsel %vm2305, %v2293, %v955
        %v2359 = vsel %vm2305, %v2294, %v957
        %v2360 = vsel %vm2305, %v2295, %v959
        %v2361 = vsel %vm2305, %v2296, %v961
        %v2362 = vsel %vm2305, %v2297, %v963
        %v2363 = vsel %vm2305, %v2298, %v965
        %v2364 = vsel %vm2305, %v2299, %v967
        %v2365 = vsel %vm2305, %v2300, %v969
        %v2366 = vsel %vm2305, %v2301, %v971
        %v2367 = vsel %vm2305, %v2302, %v973
        %v2368 = vsel %vm2305, %v2303, %v975
        %v2369 = vsel %vm2305, %v2304, %v977
        %vm2370 = vcmask 97280
        %v2371 = vsel %vm2370, %v2306, %v1047
        %v2372 = vsel %vm2370, %v2307, %v1049
        %v2373 = vsel %vm2370, %v2308, %v1051
        %v2374 = vsel %vm2370, %v2309, %v1053
        %v2375 = vsel %vm2370, %v2310, %v1055
        %v2376 = vsel %vm2370, %v2311, %v1057
        %v2377 = vsel %vm2370, %v2312, %v1059
        %v2378 = vsel %vm2370, %v2313, %v1061
        %v2379 = vsel %vm2370, %v2314, %v1063
        %v2380 = vsel %vm2370, %v2315, %v1065
        %v2381 = vsel %vm2370, %v2316, %v1067
        %v2382 = vsel %vm2370, %v2317, %v1069
        %v2383 = vsel %vm2370, %v2318, %v1071
        %v2384 = vsel %vm2370, %v2319, %v1073
        %v2385 = vsel %vm2370, %v2320, %v1075
        %v2386 = vsel %vm2370, %v2321, %v1077
        %v2387 = vsel %vm2370, %v2322, %v1079
        %v2388 = vsel %vm2370, %v2323, %v1081
        %v2389 = vsel %vm2370, %v2324, %v1083
        %v2390 = vsel %vm2370, %v2325, %v1085
        %v2391 = vsel %vm2370, %v2326, %v1087
        %v2392 = vsel %vm2370, %v2327, %v1089
        %v2393 = vsel %vm2370, %v2328, %v1091
        %v2394 = vsel %vm2370, %v2329, %v1093
        %v2395 = vsel %vm2370, %v2330, %v1095
        %v2396 = vsel %vm2370, %v2331, %v1097
        %v2397 = vsel %vm2370, %v2332, %v1099
        %v2398 = vsel %vm2370, %v2333, %v1101
        %v2399 = vsel %vm2370, %v2334, %v1103
        %v2400 = vsel %vm2370, %v2335, %v1105
        %v2401 = vsel %vm2370, %v2336, %v1107
        %v2402 = vsel %vm2370, %v2337, %v1109
        %v2403 = vsel %vm2370, %v2338, %v1111
        %v2404 = vsel %vm2370, %v2339, %v1113
        %v2405 = vsel %vm2370, %v2340, %v1115
        %v2406 = vsel %vm2370, %v2341, %v1117
        %v2407 = vsel %vm2370, %v2342, %v1119
        %v2408 = vsel %vm2370, %v2343, %v1121
        %v2409 = vsel %vm2370, %v2344, %v1123
        %v2410 = vsel %vm2370, %v2345, %v1125
        %v2411 = vsel %vm2370, %v2346, %v1127
        %v2412 = vsel %vm2370, %v2347, %v1129
        %v2413 = vsel %vm2370, %v2348, %v1131
        %v2414 = vsel %vm2370, %v2349, %v1133
        %v2415 = vsel %vm2370, %v2350, %v1135
        %v2416 = vsel %vm2370, %v2351, %v1137
        %v2417 = vsel %vm2370, %v2352, %v1139
        %v2418 = vsel %vm2370, %v2353, %v1141
        %v2419 = vsel %vm2370, %v2354, %v1143
        %v2420 = vsel %vm2370, %v2355, %v1145
        %v2421 = vsel %vm2370, %v2356, %v1147
        %v2422 = vsel %vm2370, %v2357, %v1149
        %v2423 = vsel %vm2370, %v2358, %v1151
        %v2424 = vsel %vm2370, %v2359, %v1153
        %v2425 = vsel %vm2370, %v2360, %v1155
        %v2426 = vsel %vm2370, %v2361, %v1157
        %v2427 = vsel %vm2370, %v2362, %v1159
        %v2428 = vsel %vm2370, %v2363, %v1161
        %v2429 = vsel %vm2370, %v2364, %v1163
        %v2430 = vsel %vm2370, %v2365, %v1165
        %v2431 = vsel %vm2370, %v2366, %v1167
        %v2432 = vsel %vm2370, %v2367, %v1169
        %v2433 = vsel %vm2370, %v2368, %v1171
        %v2434 = vsel %vm2370, %v2369, %v1173
        %vm2435 = vcmask 130048
        %v2436 = vsel %vm2435, %v2371, %v1249
        %v2437 = vsel %vm2435, %v2372, %v1251
        %v2438 = vsel %vm2435, %v2373, %v1253
        %v2439 = vsel %vm2435, %v2374, %v1255
        %v2440 = vsel %vm2435, %v2375, %v1257
        %v2441 = vsel %vm2435, %v2376, %v1259
        %v2442 = vsel %vm2435, %v2377, %v1261
        %v2443 = vsel %vm2435, %v2378, %v1263
        %v2444 = vsel %vm2435, %v2379, %v1265
        %v2445 = vsel %vm2435, %v2380, %v1267
        %v2446 = vsel %vm2435, %v2381, %v1269
        %v2447 = vsel %vm2435, %v2382, %v1271
        %v2448 = vsel %vm2435, %v2383, %v1273
        %v2449 = vsel %vm2435, %v2384, %v1275
        %v2450 = vsel %vm2435, %v2385, %v1277
        %v2451 = vsel %vm2435, %v2386, %v1279
        %v2452 = vsel %vm2435, %v2387, %v1281
        %v2453 = vsel %vm2435, %v2388, %v1283
        %v2454 = vsel %vm2435, %v2389, %v1285
        %v2455 = vsel %vm2435, %v2390, %v1287
        %v2456 = vsel %vm2435, %v2391, %v1289
        %v2457 = vsel %vm2435, %v2392, %v1291
        %v2458 = vsel %vm2435, %v2393, %v1293
        %v2459 = vsel %vm2435, %v2394, %v1295
        %v2460 = vsel %vm2435, %v2395, %v1297
        %v2461 = vsel %vm2435, %v2396, %v1299
        %v2462 = vsel %vm2435, %v2397, %v1301
        %v2463 = vsel %vm2435, %v2398, %v1303
        %v2464 = vsel %vm2435, %v2399, %v1305
        %v2465 = vsel %vm2435, %v2400, %v1307
        %v2466 = vsel %vm2435, %v2401, %v1309
        %v2467 = vsel %vm2435, %v2402, %v1311
        %v2468 = vsel %vm2435, %v2403, %v1313
        %v2469 = vsel %vm2435, %v2404, %v1315
        %v2470 = vsel %vm2435, %v2405, %v1317
        %v2471 = vsel %vm2435, %v2406, %v1319
        %v2472 = vsel %vm2435, %v2407, %v1321
        %v2473 = vsel %vm2435, %v2408, %v1323
        %v2474 = vsel %vm2435, %v2409, %v1325
        %v2475 = vsel %vm2435, %v2410, %v1327
        %v2476 = vsel %vm2435, %v2411, %v1329
        %v2477 = vsel %vm2435, %v2412, %v1331
        %v2478 = vsel %vm2435, %v2413, %v1333
        %v2479 = vsel %vm2435, %v2414, %v1335
        %v2480 = vsel %vm2435, %v2415, %v1337
        %v2481 = vsel %vm2435, %v2416, %v1339
        %v2482 = vsel %vm2435, %v2417, %v1341
        %v2483 = vsel %vm2435, %v2418, %v1343
        %v2484 = vsel %vm2435, %v2419, %v1345
        %v2485 = vsel %vm2435, %v2420, %v1347
        %v2486 = vsel %vm2435, %v2421, %v1349
        %v2487 = vsel %vm2435, %v2422, %v1351
        %v2488 = vsel %vm2435, %v2423, %v1353
        %v2489 = vsel %vm2435, %v2424, %v1355
        %v2490 = vsel %vm2435, %v2425, %v1357
        %v2491 = vsel %vm2435, %v2426, %v1359
        %v2492 = vsel %vm2435, %v2427, %v1361
        %v2493 = vsel %vm2435, %v2428, %v1363
        %v2494 = vsel %vm2435, %v2429, %v1365
        %v2495 = vsel %vm2435, %v2430, %v1367
        %v2496 = vsel %vm2435, %v2431, %v1369
        %v2497 = vsel %vm2435, %v2432, %v1371
        %v2498 = vsel %vm2435, %v2433, %v1373
        %v2499 = vsel %vm2435, %v2434, %v1375
        %vm2500 = vcmask 162816
        %v2501 = vsel %vm2500, %v2436, %v1450
        %v2502 = vsel %vm2500, %v2437, %v1452
        %v2503 = vsel %vm2500, %v2438, %v1454
        %v2504 = vsel %vm2500, %v2439, %v1456
        %v2505 = vsel %vm2500, %v2440, %v1458
        %v2506 = vsel %vm2500, %v2441, %v1460
        %v2507 = vsel %vm2500, %v2442, %v1462
        %v2508 = vsel %vm2500, %v2443, %v1464
        %v2509 = vsel %vm2500, %v2444, %v1466
        %v2510 = vsel %vm2500, %v2445, %v1468
        %v2511 = vsel %vm2500, %v2446, %v1470
        %v2512 = vsel %vm2500, %v2447, %v1472
        %v2513 = vsel %vm2500, %v2448, %v1474
        %v2514 = vsel %vm2500, %v2449, %v1476
        %v2515 = vsel %vm2500, %v2450, %v1478
        %v2516 = vsel %vm2500, %v2451, %v1480
        %v2517 = vsel %vm2500, %v2452, %v1482
        %v2518 = vsel %vm2500, %v2453, %v1484
        %v2519 = vsel %vm2500, %v2454, %v1486
        %v2520 = vsel %vm2500, %v2455, %v1488
        %v2521 = vsel %vm2500, %v2456, %v1490
        %v2522 = vsel %vm2500, %v2457, %v1492
        %v2523 = vsel %vm2500, %v2458, %v1494
        %v2524 = vsel %vm2500, %v2459, %v1496
        %v2525 = vsel %vm2500, %v2460, %v1498
        %v2526 = vsel %vm2500, %v2461, %v1500
        %v2527 = vsel %vm2500, %v2462, %v1502
        %v2528 = vsel %vm2500, %v2463, %v1504
        %v2529 = vsel %vm2500, %v2464, %v1506
        %v2530 = vsel %vm2500, %v2465, %v1508
        %v2531 = vsel %vm2500, %v2466, %v1510
        %v2532 = vsel %vm2500, %v2467, %v1512
        %v2533 = vsel %vm2500, %v2468, %v1514
        %v2534 = vsel %vm2500, %v2469, %v1516
        %v2535 = vsel %vm2500, %v2470, %v1518
        %v2536 = vsel %vm2500, %v2471, %v1520
        %v2537 = vsel %vm2500, %v2472, %v1522
        %v2538 = vsel %vm2500, %v2473, %v1524
        %v2539 = vsel %vm2500, %v2474, %v1526
        %v2540 = vsel %vm2500, %v2475, %v1528
        %v2541 = vsel %vm2500, %v2476, %v1530
        %v2542 = vsel %vm2500, %v2477, %v1532
        %v2543 = vsel %vm2500, %v2478, %v1534
        %v2544 = vsel %vm2500, %v2479, %v1536
        %v2545 = vsel %vm2500, %v2480, %v1538
        %v2546 = vsel %vm2500, %v2481, %v1540
        %v2547 = vsel %vm2500, %v2482, %v1542
        %v2548 = vsel %vm2500, %v2483, %v1544
        %v2549 = vsel %vm2500, %v2484, %v1546
        %v2550 = vsel %vm2500, %v2485, %v1548
        %v2551 = vsel %vm2500, %v2486, %v1550
        %v2552 = vsel %vm2500, %v2487, %v1552
        %v2553 = vsel %vm2500, %v2488, %v1554
        %v2554 = vsel %vm2500, %v2489, %v1556
        %v2555 = vsel %vm2500, %v2490, %v1558
        %v2556 = vsel %vm2500, %v2491, %v1560
        %v2557 = vsel %vm2500, %v2492, %v1562
        %v2558 = vsel %vm2500, %v2493, %v1564
        %v2559 = vsel %vm2500, %v2494, %v1566
        %v2560 = vsel %vm2500, %v2495, %v1568
        %v2561 = vsel %vm2500, %v2496, %v1570
        %v2562 = vsel %vm2500, %v2497, %v1572
        %v2563 = vsel %vm2500, %v2498, %v1574
        %v2564 = vsel %vm2500, %v2499, %v1576
        %vm2565 = vcmask 195584
        %v2566 = vsel %vm2565, %v2501, %v1646
        %v2567 = vsel %vm2565, %v2502, %v1648
        %v2568 = vsel %vm2565, %v2503, %v1650
        %v2569 = vsel %vm2565, %v2504, %v1652
        %v2570 = vsel %vm2565, %v2505, %v1654
        %v2571 = vsel %vm2565, %v2506, %v1656
        %v2572 = vsel %vm2565, %v2507, %v1658
        %v2573 = vsel %vm2565, %v2508, %v1660
        %v2574 = vsel %vm2565, %v2509, %v1662
        %v2575 = vsel %vm2565, %v2510, %v1664
        %v2576 = vsel %vm2565, %v2511, %v1666
        %v2577 = vsel %vm2565, %v2512, %v1668
        %v2578 = vsel %vm2565, %v2513, %v1670
        %v2579 = vsel %vm2565, %v2514, %v1672
        %v2580 = vsel %vm2565, %v2515, %v1674
        %v2581 = vsel %vm2565, %v2516, %v1676
        %v2582 = vsel %vm2565, %v2517, %v1678
        %v2583 = vsel %vm2565, %v2518, %v1680
        %v2584 = vsel %vm2565, %v2519, %v1682
        %v2585 = vsel %vm2565, %v2520, %v1684
        %v2586 = vsel %vm2565, %v2521, %v1686
        %v2587 = vsel %vm2565, %v2522, %v1688
        %v2588 = vsel %vm2565, %v2523, %v1690
        %v2589 = vsel %vm2565, %v2524, %v1692
        %v2590 = vsel %vm2565, %v2525, %v1694
        %v2591 = vsel %vm2565, %v2526, %v1696
        %v2592 = vsel %vm2565, %v2527, %v1698
        %v2593 = vsel %vm2565, %v2528, %v1700
        %v2594 = vsel %vm2565, %v2529, %v1702
        %v2595 = vsel %vm2565, %v2530, %v1704
        %v2596 = vsel %vm2565, %v2531, %v1706
        %v2597 = vsel %vm2565, %v2532, %v1708
        %v2598 = vsel %vm2565, %v2533, %v1710
        %v2599 = vsel %vm2565, %v2534, %v1712
        %v2600 = vsel %vm2565, %v2535, %v1714
        %v2601 = vsel %vm2565, %v2536, %v1716
        %v2602 = vsel %vm2565, %v2537, %v1718
        %v2603 = vsel %vm2565, %v2538, %v1720
        %v2604 = vsel %vm2565, %v2539, %v1722
        %v2605 = vsel %vm2565, %v2540, %v1724
        %v2606 = vsel %vm2565, %v2541, %v1726
        %v2607 = vsel %vm2565, %v2542, %v1728
        %v2608 = vsel %vm2565, %v2543, %v1730
        %v2609 = vsel %vm2565, %v2544, %v1732
        %v2610 = vsel %vm2565, %v2545, %v1734
        %v2611 = vsel %vm2565, %v2546, %v1736
        %v2612 = vsel %vm2565, %v2547, %v1738
        %v2613 = vsel %vm2565, %v2548, %v1740
        %v2614 = vsel %vm2565, %v2549, %v1742
        %v2615 = vsel %vm2565, %v2550, %v1744
        %v2616 = vsel %vm2565, %v2551, %v1746
        %v2617 = vsel %vm2565, %v2552, %v1748
        %v2618 = vsel %vm2565, %v2553, %v1750
        %v2619 = vsel %vm2565, %v2554, %v1752
        %v2620 = vsel %vm2565, %v2555, %v1754
        %v2621 = vsel %vm2565, %v2556, %v1756
        %v2622 = vsel %vm2565, %v2557, %v1758
        %v2623 = vsel %vm2565, %v2558, %v1760
        %v2624 = vsel %vm2565, %v2559, %v1762
        %v2625 = vsel %vm2565, %v2560, %v1764
        %v2626 = vsel %vm2565, %v2561, %v1766
        %v2627 = vsel %vm2565, %v2562, %v1768
        %v2628 = vsel %vm2565, %v2563, %v1770
        %v2629 = vsel %vm2565, %v2564, %v1772
        %vm2630 = vcmask 228352
        %v2631 = vsel %vm2630, %v2566, %v1848
        %v2632 = vsel %vm2630, %v2567, %v1850
        %v2633 = vsel %vm2630, %v2568, %v1852
        %v2634 = vsel %vm2630, %v2569, %v1854
        %v2635 = vsel %vm2630, %v2570, %v1856
        %v2636 = vsel %vm2630, %v2571, %v1858
        %v2637 = vsel %vm2630, %v2572, %v1860
        %v2638 = vsel %vm2630, %v2573, %v1862
        %v2639 = vsel %vm2630, %v2574, %v1864
        %v2640 = vsel %vm2630, %v2575, %v1866
        %v2641 = vsel %vm2630, %v2576, %v1868
        %v2642 = vsel %vm2630, %v2577, %v1870
        %v2643 = vsel %vm2630, %v2578, %v1872
        %v2644 = vsel %vm2630, %v2579, %v1874
        %v2645 = vsel %vm2630, %v2580, %v1876
        %v2646 = vsel %vm2630, %v2581, %v1878
        %v2647 = vsel %vm2630, %v2582, %v1880
        %v2648 = vsel %vm2630, %v2583, %v1882
        %v2649 = vsel %vm2630, %v2584, %v1884
        %v2650 = vsel %vm2630, %v2585, %v1886
        %v2651 = vsel %vm2630, %v2586, %v1888
        %v2652 = vsel %vm2630, %v2587, %v1890
        %v2653 = vsel %vm2630, %v2588, %v1892
        %v2654 = vsel %vm2630, %v2589, %v1894
        %v2655 = vsel %vm2630, %v2590, %v1896
        %v2656 = vsel %vm2630, %v2591, %v1898
        %v2657 = vsel %vm2630, %v2592, %v1900
        %v2658 = vsel %vm2630, %v2593, %v1902
        %v2659 = vsel %vm2630, %v2594, %v1904
        %v2660 = vsel %vm2630, %v2595, %v1906
        %v2661 = vsel %vm2630, %v2596, %v1908
        %v2662 = vsel %vm2630, %v2597, %v1910
        %v2663 = vsel %vm2630, %v2598, %v1912
        %v2664 = vsel %vm2630, %v2599, %v1914
        %v2665 = vsel %vm2630, %v2600, %v1916
        %v2666 = vsel %vm2630, %v2601, %v1918
        %v2667 = vsel %vm2630, %v2602, %v1920
        %v2668 = vsel %vm2630, %v2603, %v1922
        %v2669 = vsel %vm2630, %v2604, %v1924
        %v2670 = vsel %vm2630, %v2605, %v1926
        %v2671 = vsel %vm2630, %v2606, %v1928
        %v2672 = vsel %vm2630, %v2607, %v1930
        %v2673 = vsel %vm2630, %v2608, %v1932
        %v2674 = vsel %vm2630, %v2609, %v1934
        %v2675 = vsel %vm2630, %v2610, %v1936
        %v2676 = vsel %vm2630, %v2611, %v1938
        %v2677 = vsel %vm2630, %v2612, %v1940
        %v2678 = vsel %vm2630, %v2613, %v1942
        %v2679 = vsel %vm2630, %v2614, %v1944
        %v2680 = vsel %vm2630, %v2615, %v1946
        %v2681 = vsel %vm2630, %v2616, %v1948
        %v2682 = vsel %vm2630, %v2617, %v1950
        %v2683 = vsel %vm2630, %v2618, %v1952
        %v2684 = vsel %vm2630, %v2619, %v1954
        %v2685 = vsel %vm2630, %v2620, %v1956
        %v2686 = vsel %vm2630, %v2621, %v1958
        %v2687 = vsel %vm2630, %v2622, %v1960
        %v2688 = vsel %vm2630, %v2623, %v1962
        %v2689 = vsel %vm2630, %v2624, %v1964
        %v2690 = vsel %vm2630, %v2625, %v1966
        %v2691 = vsel %vm2630, %v2626, %v1968
        %v2692 = vsel %vm2630, %v2627, %v1970
        %v2693 = vsel %vm2630, %v2628, %v1972
        %v2694 = vsel %vm2630, %v2629, %v1974
        %vm2695 = vcmask 261120
        %v2696 = vsel %vm2695, %v2631, %v2049
        %v2697 = vsel %vm2695, %v2632, %v2051
        %v2698 = vsel %vm2695, %v2633, %v2053
        %v2699 = vsel %vm2695, %v2634, %v2055
        %v2700 = vsel %vm2695, %v2635, %v2057
        %v2701 = vsel %vm2695, %v2636, %v2059
        %v2702 = vsel %vm2695, %v2637, %v2061
        %v2703 = vsel %vm2695, %v2638, %v2063
        %v2704 = vsel %vm2695, %v2639, %v2065
        %v2705 = vsel %vm2695, %v2640, %v2067
        %v2706 = vsel %vm2695, %v2641, %v2069
        %v2707 = vsel %vm2695, %v2642, %v2071
        %v2708 = vsel %vm2695, %v2643, %v2073
        %v2709 = vsel %vm2695, %v2644, %v2075
        %v2710 = vsel %vm2695, %v2645, %v2077
        %v2711 = vsel %vm2695, %v2646, %v2079
        %v2712 = vsel %vm2695, %v2647, %v2081
        %v2713 = vsel %vm2695, %v2648, %v2083
        %v2714 = vsel %vm2695, %v2649, %v2085
        %v2715 = vsel %vm2695, %v2650, %v2087
        %v2716 = vsel %vm2695, %v2651, %v2089
        %v2717 = vsel %vm2695, %v2652, %v2091
        %v2718 = vsel %vm2695, %v2653, %v2093
        %v2719 = vsel %vm2695, %v2654, %v2095
        %v2720 = vsel %vm2695, %v2655, %v2097
        %v2721 = vsel %vm2695, %v2656, %v2099
        %v2722 = vsel %vm2695, %v2657, %v2101
        %v2723 = vsel %vm2695, %v2658, %v2103
        %v2724 = vsel %vm2695, %v2659, %v2105
        %v2725 = vsel %vm2695, %v2660, %v2107
        %v2726 = vsel %vm2695, %v2661, %v2109
        %v2727 = vsel %vm2695, %v2662, %v2111
        %v2728 = vsel %vm2695, %v2663, %v2113
        %v2729 = vsel %vm2695, %v2664, %v2115
        %v2730 = vsel %vm2695, %v2665, %v2117
        %v2731 = vsel %vm2695, %v2666, %v2119
        %v2732 = vsel %vm2695, %v2667, %v2121
        %v2733 = vsel %vm2695, %v2668, %v2123
        %v2734 = vsel %vm2695, %v2669, %v2125
        %v2735 = vsel %vm2695, %v2670, %v2127
        %v2736 = vsel %vm2695, %v2671, %v2129
        %v2737 = vsel %vm2695, %v2672, %v2131
        %v2738 = vsel %vm2695, %v2673, %v2133
        %v2739 = vsel %vm2695, %v2674, %v2135
        %v2740 = vsel %vm2695, %v2675, %v2137
        %v2741 = vsel %vm2695, %v2676, %v2139
        %v2742 = vsel %vm2695, %v2677, %v2141
        %v2743 = vsel %vm2695, %v2678, %v2143
        %v2744 = vsel %vm2695, %v2679, %v2145
        %v2745 = vsel %vm2695, %v2680, %v2147
        %v2746 = vsel %vm2695, %v2681, %v2149
        %v2747 = vsel %vm2695, %v2682, %v2151
        %v2748 = vsel %vm2695, %v2683, %v2153
        %v2749 = vsel %vm2695, %v2684, %v2155
        %v2750 = vsel %vm2695, %v2685, %v2157
        %v2751 = vsel %vm2695, %v2686, %v2159
        %v2752 = vsel %vm2695, %v2687, %v2161
        %v2753 = vsel %vm2695, %v2688, %v2163
        %v2754 = vsel %vm2695, %v2689, %v2165
        %v2755 = vsel %vm2695, %v2690, %v2167
        %v2756 = vsel %vm2695, %v2691, %v2169
        %v2757 = vsel %vm2695, %v2692, %v2171
        %v2758 = vsel %vm2695, %v2693, %v2173
        %v2759 = vsel %vm2695, %v2694, %v2175
        %v2760 = vld [vmem:[%s1] sm:$0xff]
        %v2761 = vld [vmem:[%s1 + $0x8] sm:$0xff]
        %v2762 = vld [vmem:[%s1 + $0x10] sm:$0xff]
        %v2763 = vld [vmem:[%s1 + $0x18] sm:$0xff]
        %v2764 = vld [vmem:[%s1 + $0x20] sm:$0xf]
        %v2765 = vld [vmem:[%s2] sm:$0x1]
        %v2767 = vperm.slane %v2765, 0
        %vm2769 = vcmask 293888
        %v2771 = vsel %vm2769, %v2696, 0
        %v2774 = vsel %vm2769, %v2697, 0
        %v2777 = vsel %vm2769, %v2698, 0
        %v2780 = vsel %vm2769, %v2699, 0
        %v2783 = vsel %vm2769, %v2700, 0
        %v2786 = vsel %vm2769, %v2701, 0
        %v2789 = vsel %vm2769, %v2702, 0
        %v2792 = vsel %vm2769, %v2703, 0
        %v2795 = vsel %vm2769, %v2704, 0
        %v2798 = vsel %vm2769, %v2705, 0
        %v2801 = vsel %vm2769, %v2706, 0
        %v2804 = vsel %vm2769, %v2707, 0
        %v2807 = vsel %vm2769, %v2708, 0
        %v2810 = vsel %vm2769, %v2709, 0
        %v2813 = vsel %vm2769, %v2710, 0
        %v2816 = vsel %vm2769, %v2711, 0
        %v2819 = vsel %vm2769, %v2712, 0
        %v2822 = vsel %vm2769, %v2713, 0
        %v2825 = vsel %vm2769, %v2714, 0
        %v2828 = vsel %vm2769, %v2715, 0
        %v2831 = vsel %vm2769, %v2716, 0
        %v2834 = vsel %vm2769, %v2717, 0
        %v2837 = vsel %vm2769, %v2718, 0
        %v2840 = vsel %vm2769, %v2719, 0
        %v2843 = vsel %vm2769, %v2720, 0
        %v2846 = vsel %vm2769, %v2721, 0
        %v2849 = vsel %vm2769, %v2722, 0
        %v2852 = vsel %vm2769, %v2723, 0
        %v2855 = vsel %vm2769, %v2724, 0
        %v2858 = vsel %vm2769, %v2725, 0
        %v2861 = vsel %vm2769, %v2726, 0
        %v2864 = vsel %vm2769, %v2727, 0
        %v2867 = vsel %vm2769, %v2728, 0
        %v2870 = vsel %vm2769, %v2729, 0
        %v2873 = vsel %vm2769, %v2730, 0
        %v2876 = vsel %vm2769, %v2731, 0
        %v2879 = vsel %vm2769, %v2732, 0
        %v2882 = vsel %vm2769, %v2733, 0
        %v2885 = vsel %vm2769, %v2734, 0
        %v2888 = vsel %vm2769, %v2735, 0
        %v2891 = vsel %vm2769, %v2736, 0
        %v2894 = vsel %vm2769, %v2737, 0
        %v2897 = vsel %vm2769, %v2738, 0
        %v2900 = vsel %vm2769, %v2739, 0
        %v2903 = vsel %vm2769, %v2740, 0
        %v2906 = vsel %vm2769, %v2741, 0
        %v2909 = vsel %vm2769, %v2742, 0
        %v2912 = vsel %vm2769, %v2743, 0
        %v2915 = vsel %vm2769, %v2744, 0
        %v2918 = vsel %vm2769, %v2745, 0
        %v2921 = vsel %vm2769, %v2746, 0
        %v2924 = vsel %vm2769, %v2747, 0
        %v2927 = vsel %vm2769, %v2748, 0
        %v2930 = vsel %vm2769, %v2749, 0
        %v2933 = vsel %vm2769, %v2750, 0
        %v2936 = vsel %vm2769, %v2751, 0
        %v2939 = vsel %vm2769, %v2752, 0
        %v2942 = vsel %vm2769, %v2753, 0
        %v2945 = vsel %vm2769, %v2754, 0
        %v2948 = vsel %vm2769, %v2755, 0
        %v2951 = vsel %vm2769, %v2756, 0
        %v2954 = vsel %vm2769, %v2757, 0
        %v2957 = vsel %vm2769, %v2758, 0
        %v2960 = vsel %vm2769, %v2759, 0
        %vm2962 = vcmask 1043456
        %v2964 = vsel %vm2962, %v2764, 0
        %2966 = vmatpush.msra.mxu0 0.0
        %2967 = vmatpush.msra.mxu0 0.0
        %2968 = vmatpush.msra.mxu0 0.0
        %2969 = vmatpush.msra.mxu0 0.0
        %2970 = vmatpush.msra.mxu0 0.0
        %2971 = vmatpush.msra.mxu0 0.0
        %2972 = vmatpush.msra.mxu0 0.0
        %2973 = vmatpush.msra.mxu0 0.0
        %2974 = vmatpush.msra.mxu0 0.0
        %2975 = vmatpush.msra.mxu0 0.0
        %2976 = vmatpush.msra.mxu0 0.0
        %2977 = vmatpush.msra.mxu0 %v2964
        %2978 = vmatpush.msra.mxu0 %v2763
        %2979 = vmatpush.msra.mxu0 %v2762
        %2980 = vmatpush.msra.mxu0 %v2761
        %2981 = vmatpush.msra.mxu0 %v2760
        %2982 = vmatmul.f32.gmra.mxu0 %v2771
        %v2983 = vpop.f32.mrf.mxu0
        %v2984 = vadd.f32 %v2767, %v2983
        %2985 = vmatmul.f32.gmra.mxu0 %v2774
        %v2986 = vpop.f32.mrf.mxu0
        %v2987 = vadd.f32 %v2767, %v2986
        %2988 = vmatmul.f32.gmra.mxu0 %v2777
        %v2989 = vpop.f32.mrf.mxu0
        %v2990 = vadd.f32 %v2767, %v2989
        %2991 = vmatmul.f32.gmra.mxu0 %v2780
        %v2992 = vpop.f32.mrf.mxu0
        %v2993 = vadd.f32 %v2767, %v2992
        %2994 = vmatmul.f32.gmra.mxu0 %v2783
        %v2995 = vpop.f32.mrf.mxu0
        %v2996 = vadd.f32 %v2767, %v2995
        %2997 = vmatmul.f32.gmra.mxu0 %v2786
        %v2998 = vpop.f32.mrf.mxu0
        %v2999 = vadd.f32 %v2767, %v2998
        %3000 = vmatmul.f32.gmra.mxu0 %v2789
        %v3001 = vpop.f32.mrf.mxu0
        %v3002 = vadd.f32 %v2767, %v3001
        %3003 = vmatmul.f32.gmra.mxu0 %v2792
        %v3004 = vpop.f32.mrf.mxu0
        %v3005 = vadd.f32 %v2767, %v3004
        %3006 = vmatmul.f32.gmra.mxu0 %v2795
        %v3007 = vpop.f32.mrf.mxu0
        %v3008 = vadd.f32 %v2767, %v3007
        %3009 = vmatmul.f32.gmra.mxu0 %v2798
        %v3010 = vpop.f32.mrf.mxu0
        %v3011 = vadd.f32 %v2767, %v3010
        %3012 = vmatmul.f32.gmra.mxu0 %v2801
        %v3013 = vpop.f32.mrf.mxu0
        %v3014 = vadd.f32 %v2767, %v3013
        %3015 = vmatmul.f32.gmra.mxu0 %v2804
        %v3016 = vpop.f32.mrf.mxu0
        %v3017 = vadd.f32 %v2767, %v3016
        %3018 = vmatmul.f32.gmra.mxu0 %v2807
        %v3019 = vpop.f32.mrf.mxu0
        %v3020 = vadd.f32 %v2767, %v3019
        %3021 = vmatmul.f32.gmra.mxu0 %v2810
        %v3022 = vpop.f32.mrf.mxu0
        %v3023 = vadd.f32 %v2767, %v3022
        %3024 = vmatmul.f32.gmra.mxu0 %v2813
        %v3025 = vpop.f32.mrf.mxu0
        %v3026 = vadd.f32 %v2767, %v3025
        %3027 = vmatmul.f32.gmra.mxu0 %v2816
        %v3028 = vpop.f32.mrf.mxu0
        %v3029 = vadd.f32 %v2767, %v3028
        %3030 = vmatmul.f32.gmra.mxu0 %v2819
        %v3031 = vpop.f32.mrf.mxu0
        %v3032 = vadd.f32 %v2767, %v3031
        %3033 = vmatmul.f32.gmra.mxu0 %v2822
        %v3034 = vpop.f32.mrf.mxu0
        %v3035 = vadd.f32 %v2767, %v3034
        %3036 = vmatmul.f32.gmra.mxu0 %v2825
        %v3037 = vpop.f32.mrf.mxu0
        %v3038 = vadd.f32 %v2767, %v3037
        %3039 = vmatmul.f32.gmra.mxu0 %v2828
        %v3040 = vpop.f32.mrf.mxu0
        %v3041 = vadd.f32 %v2767, %v3040
        %3042 = vmatmul.f32.gmra.mxu0 %v2831
        %v3043 = vpop.f32.mrf.mxu0
        %v3044 = vadd.f32 %v2767, %v3043
        %3045 = vmatmul.f32.gmra.mxu0 %v2834
        %v3046 = vpop.f32.mrf.mxu0
        %v3047 = vadd.f32 %v2767, %v3046
        %3048 = vmatmul.f32.gmra.mxu0 %v2837
        %v3049 = vpop.f32.mrf.mxu0
        %v3050 = vadd.f32 %v2767, %v3049
        %3051 = vmatmul.f32.gmra.mxu0 %v2840
        %v3052 = vpop.f32.mrf.mxu0
        %v3053 = vadd.f32 %v2767, %v3052
        %3054 = vmatmul.f32.gmra.mxu0 %v2843
        %v3055 = vpop.f32.mrf.mxu0
        %v3056 = vadd.f32 %v2767, %v3055
        %3057 = vmatmul.f32.gmra.mxu0 %v2846
        %v3058 = vpop.f32.mrf.mxu0
        %v3059 = vadd.f32 %v2767, %v3058
        %3060 = vmatmul.f32.gmra.mxu0 %v2849
        %v3061 = vpop.f32.mrf.mxu0
        %v3062 = vadd.f32 %v2767, %v3061
        %3063 = vmatmul.f32.gmra.mxu0 %v2852
        %v3064 = vpop.f32.mrf.mxu0
        %v3065 = vadd.f32 %v2767, %v3064
        %3066 = vmatmul.f32.gmra.mxu0 %v2855
        %v3067 = vpop.f32.mrf.mxu0
        %v3068 = vadd.f32 %v2767, %v3067
        %3069 = vmatmul.f32.gmra.mxu0 %v2858
        %v3070 = vpop.f32.mrf.mxu0
        %v3071 = vadd.f32 %v2767, %v3070
        %3072 = vmatmul.f32.gmra.mxu0 %v2861
        %v3073 = vpop.f32.mrf.mxu0
        %v3074 = vadd.f32 %v2767, %v3073
        %3075 = vmatmul.f32.gmra.mxu0 %v2864
        %v3076 = vpop.f32.mrf.mxu0
        %v3077 = vadd.f32 %v2767, %v3076
        %3078 = vmatmul.f32.gmra.mxu0 %v2867
        %v3079 = vpop.f32.mrf.mxu0
        %v3080 = vadd.f32 %v2767, %v3079
        %3081 = vmatmul.f32.gmra.mxu0 %v2870
        %v3082 = vpop.f32.mrf.mxu0
        %v3083 = vadd.f32 %v2767, %v3082
        %3084 = vmatmul.f32.gmra.mxu0 %v2873
        %v3085 = vpop.f32.mrf.mxu0
        %v3086 = vadd.f32 %v2767, %v3085
        %3087 = vmatmul.f32.gmra.mxu0 %v2876
        %v3088 = vpop.f32.mrf.mxu0
        %v3089 = vadd.f32 %v2767, %v3088
        %3090 = vmatmul.f32.gmra.mxu0 %v2879
        %v3091 = vpop.f32.mrf.mxu0
        %v3092 = vadd.f32 %v2767, %v3091
        %3093 = vmatmul.f32.gmra.mxu0 %v2882
        %v3094 = vpop.f32.mrf.mxu0
        %v3095 = vadd.f32 %v2767, %v3094
        %3096 = vmatmul.f32.gmra.mxu0 %v2885
        %v3097 = vpop.f32.mrf.mxu0
        %v3098 = vadd.f32 %v2767, %v3097
        %3099 = vmatmul.f32.gmra.mxu0 %v2888
        %v3100 = vpop.f32.mrf.mxu0
        %v3101 = vadd.f32 %v2767, %v3100
        %3102 = vmatmul.f32.gmra.mxu0 %v2891
        %v3103 = vpop.f32.mrf.mxu0
        %v3104 = vadd.f32 %v2767, %v3103
        %3105 = vmatmul.f32.gmra.mxu0 %v2894
        %v3106 = vpop.f32.mrf.mxu0
        %v3107 = vadd.f32 %v2767, %v3106
        %3108 = vmatmul.f32.gmra.mxu0 %v2897
        %v3109 = vpop.f32.mrf.mxu0
        %v3110 = vadd.f32 %v2767, %v3109
        %3111 = vmatmul.f32.gmra.mxu0 %v2900
        %v3112 = vpop.f32.mrf.mxu0
        %v3113 = vadd.f32 %v2767, %v3112
        %3114 = vmatmul.f32.gmra.mxu0 %v2903
        %v3115 = vpop.f32.mrf.mxu0
        %v3116 = vadd.f32 %v2767, %v3115
        %3117 = vmatmul.f32.gmra.mxu0 %v2906
        %v3118 = vpop.f32.mrf.mxu0
        %v3119 = vadd.f32 %v2767, %v3118
        %3120 = vmatmul.f32.gmra.mxu0 %v2909
        %v3121 = vpop.f32.mrf.mxu0
        %v3122 = vadd.f32 %v2767, %v3121
        %3123 = vmatmul.f32.gmra.mxu0 %v2912
        %v3124 = vpop.f32.mrf.mxu0
        %v3125 = vadd.f32 %v2767, %v3124
        %3126 = vmatmul.f32.gmra.mxu0 %v2915
        %v3127 = vpop.f32.mrf.mxu0
        %v3128 = vadd.f32 %v2767, %v3127
        %3129 = vmatmul.f32.gmra.mxu0 %v2918
        %v3130 = vpop.f32.mrf.mxu0
        %v3131 = vadd.f32 %v2767, %v3130
        %3132 = vmatmul.f32.gmra.mxu0 %v2921
        %v3133 = vpop.f32.mrf.mxu0
        %v3134 = vadd.f32 %v2767, %v3133
        %3135 = vmatmul.f32.gmra.mxu0 %v2924
        %v3136 = vpop.f32.mrf.mxu0
        %v3137 = vadd.f32 %v2767, %v3136
        %3138 = vmatmul.f32.gmra.mxu0 %v2927
        %v3139 = vpop.f32.mrf.mxu0
        %v3140 = vadd.f32 %v2767, %v3139
        %3141 = vmatmul.f32.gmra.mxu0 %v2930
        %v3142 = vpop.f32.mrf.mxu0
        %v3143 = vadd.f32 %v2767, %v3142
        %3144 = vmatmul.f32.gmra.mxu0 %v2933
        %v3145 = vpop.f32.mrf.mxu0
        %v3146 = vadd.f32 %v2767, %v3145
        %3147 = vmatmul.f32.gmra.mxu0 %v2936
        %v3148 = vpop.f32.mrf.mxu0
        %v3149 = vadd.f32 %v2767, %v3148
        %3150 = vmatmul.f32.gmra.mxu0 %v2939
        %v3151 = vpop.f32.mrf.mxu0
        %v3152 = vadd.f32 %v2767, %v3151
        %3153 = vmatmul.f32.gmra.mxu0 %v2942
        %v3154 = vpop.f32.mrf.mxu0
        %v3155 = vadd.f32 %v2767, %v3154
        %3156 = vmatmul.f32.gmra.mxu0 %v2945
        %v3157 = vpop.f32.mrf.mxu0
        %v3158 = vadd.f32 %v2767, %v3157
        %3159 = vmatmul.f32.gmra.mxu0 %v2948
        %v3160 = vpop.f32.mrf.mxu0
        %v3161 = vadd.f32 %v2767, %v3160
        %3162 = vmatmul.f32.gmra.mxu0 %v2951
        %v3163 = vpop.f32.mrf.mxu0
        %v3164 = vadd.f32 %v2767, %v3163
        %3165 = vmatmul.f32.gmra.mxu0 %v2954
        %v3166 = vpop.f32.mrf.mxu0
        %v3167 = vadd.f32 %v2767, %v3166
        %3168 = vmatmul.f32.gmra.mxu0 %v2957
        %v3169 = vpop.f32.mrf.mxu0
        %v3170 = vadd.f32 %v2767, %v3169
        %3171 = vmatmul.f32.gmra.mxu0 %v2960
        %v3172 = vpop.f32.mrf.mxu0
        %v3173 = vadd.f32 %v2767, %v3172
        %3174 = vdwg.mxu0
        %3175 = vxpose.xlu0.b32.start [1/16] %v2984, 128
        %3176 = vxpose.xlu0.b32.cont [2/16] %v2987, 128
        %3177 = vxpose.xlu0.b32.cont [3/16] %v2990, 128
        %3178 = vxpose.xlu0.b32.cont [4/16] %v2993, 128
        %3179 = vxpose.xlu0.b32.cont [5/16] %v2996, 128
        %3180 = vxpose.xlu0.b32.cont [6/16] %v2999, 128
        %3181 = vxpose.xlu0.b32.cont [7/16] %v3002, 128
        %3182 = vxpose.xlu0.b32.cont [8/16] %v3005, 128
        %3183 = vxpose.xlu0.b32.cont [9/16] %v3008, 128
        %3184 = vxpose.xlu0.b32.cont [10/16] %v3011, 128
        %3185 = vxpose.xlu0.b32.cont [11/16] %v3014, 128
        %3186 = vxpose.xlu0.b32.cont [12/16] %v3017, 128
        %3187 = vxpose.xlu0.b32.cont [13/16] %v3020, 128
        %3188 = vxpose.xlu0.b32.cont [14/16] %v3023, 128
        %3189 = vxpose.xlu0.b32.cont [15/16] %v3026, 128
        %3190 = vxpose.xlu0.b32.end [16/16] %v3029, 128
        %v3191 = vpop.trf.xlu0
        %v3192 = vpop.trf.xlu0
        %v3193 = vpop.trf.xlu0
        %v3194 = vpop.trf.xlu0
        %v3195 = vpop.trf.xlu0
        %v3196 = vpop.trf.xlu0
        %v3197 = vpop.trf.xlu0
        %v3198 = vpop.trf.xlu0
        %v3199 = vpop.trf.xlu0
        %v3200 = vpop.trf.xlu0
        %v3201 = vpop.trf.xlu0
        %v3202 = vpop.trf.xlu0
        %v3203 = vpop.trf.xlu0
        %v3204 = vpop.trf.xlu0
        %v3205 = vpop.trf.xlu0
        %v3206 = vpop.trf.xlu0
        %3207 = vxpose.xlu0.b32.start [1/16] %v3032, 128
        %3208 = vxpose.xlu0.b32.cont [2/16] %v3035, 128
        %3209 = vxpose.xlu0.b32.cont [3/16] %v3038, 128
        %3210 = vxpose.xlu0.b32.cont [4/16] %v3041, 128
        %3211 = vxpose.xlu0.b32.cont [5/16] %v3044, 128
        %3212 = vxpose.xlu0.b32.cont [6/16] %v3047, 128
        %3213 = vxpose.xlu0.b32.cont [7/16] %v3050, 128
        %3214 = vxpose.xlu0.b32.cont [8/16] %v3053, 128
        %3215 = vxpose.xlu0.b32.cont [9/16] %v3056, 128
        %3216 = vxpose.xlu0.b32.cont [10/16] %v3059, 128
        %3217 = vxpose.xlu0.b32.cont [11/16] %v3062, 128
        %3218 = vxpose.xlu0.b32.cont [12/16] %v3065, 128
        %3219 = vxpose.xlu0.b32.cont [13/16] %v3068, 128
        %3220 = vxpose.xlu0.b32.cont [14/16] %v3071, 128
        %3221 = vxpose.xlu0.b32.cont [15/16] %v3074, 128
        %3222 = vxpose.xlu0.b32.end [16/16] %v3077, 128
        %v3223 = vpop.trf.xlu0
        %v3224 = vpop.trf.xlu0
        %v3225 = vpop.trf.xlu0
        %v3226 = vpop.trf.xlu0
        %v3227 = vpop.trf.xlu0
        %v3228 = vpop.trf.xlu0
        %v3229 = vpop.trf.xlu0
        %v3230 = vpop.trf.xlu0
        %v3231 = vpop.trf.xlu0
        %v3232 = vpop.trf.xlu0
        %v3233 = vpop.trf.xlu0
        %v3234 = vpop.trf.xlu0
        %v3235 = vpop.trf.xlu0
        %v3236 = vpop.trf.xlu0
        %v3237 = vpop.trf.xlu0
        %v3238 = vpop.trf.xlu0
        %3239 = vxpose.xlu0.b32.start [1/16] %v3080, 128
        %3240 = vxpose.xlu0.b32.cont [2/16] %v3083, 128
        %3241 = vxpose.xlu0.b32.cont [3/16] %v3086, 128
        %3242 = vxpose.xlu0.b32.cont [4/16] %v3089, 128
        %3243 = vxpose.xlu0.b32.cont [5/16] %v3092, 128
        %3244 = vxpose.xlu0.b32.cont [6/16] %v3095, 128
        %3245 = vxpose.xlu0.b32.cont [7/16] %v3098, 128
        %3246 = vxpose.xlu0.b32.cont [8/16] %v3101, 128
        %3247 = vxpose.xlu0.b32.cont [9/16] %v3104, 128
        %3248 = vxpose.xlu0.b32.cont [10/16] %v3107, 128
        %3249 = vxpose.xlu0.b32.cont [11/16] %v3110, 128
        %3250 = vxpose.xlu0.b32.cont [12/16] %v3113, 128
        %3251 = vxpose.xlu0.b32.cont [13/16] %v3116, 128
        %3252 = vxpose.xlu0.b32.cont [14/16] %v3119, 128
        %3253 = vxpose.xlu0.b32.cont [15/16] %v3122, 128
        %3254 = vxpose.xlu0.b32.end [16/16] %v3125, 128
        %v3255 = vpop.trf.xlu0
        %v3256 = vpop.trf.xlu0
        %v3257 = vpop.trf.xlu0
        %v3258 = vpop.trf.xlu0
        %v3259 = vpop.trf.xlu0
        %v3260 = vpop.trf.xlu0
        %v3261 = vpop.trf.xlu0
        %v3262 = vpop.trf.xlu0
        %v3263 = vpop.trf.xlu0
        %v3264 = vpop.trf.xlu0
        %v3265 = vpop.trf.xlu0
        %v3266 = vpop.trf.xlu0
        %v3267 = vpop.trf.xlu0
        %v3268 = vpop.trf.xlu0
        %v3269 = vpop.trf.xlu0
        %v3270 = vpop.trf.xlu0
        %3271 = vxpose.xlu0.b32.start [1/16] %v3128, 128
        %3272 = vxpose.xlu0.b32.cont [2/16] %v3131, 128
        %3273 = vxpose.xlu0.b32.cont [3/16] %v3134, 128
        %3274 = vxpose.xlu0.b32.cont [4/16] %v3137, 128
        %3275 = vxpose.xlu0.b32.cont [5/16] %v3140, 128
        %3276 = vxpose.xlu0.b32.cont [6/16] %v3143, 128
        %3277 = vxpose.xlu0.b32.cont [7/16] %v3146, 128
        %3278 = vxpose.xlu0.b32.cont [8/16] %v3149, 128
        %3279 = vxpose.xlu0.b32.cont [9/16] %v3152, 128
        %3280 = vxpose.xlu0.b32.cont [10/16] %v3155, 128
        %3281 = vxpose.xlu0.b32.cont [11/16] %v3158, 128
        %3282 = vxpose.xlu0.b32.cont [12/16] %v3161, 128
        %3283 = vxpose.xlu0.b32.cont [13/16] %v3164, 128
        %3284 = vxpose.xlu0.b32.cont [14/16] %v3167, 128
        %3285 = vxpose.xlu0.b32.cont [15/16] %v3170, 128
        %3286 = vxpose.xlu0.b32.end [16/16] %v3173, 128
        %v3287 = vpop.trf.xlu0
        %v3288 = vpop.trf.xlu0
        %v3289 = vpop.trf.xlu0
        %v3290 = vpop.trf.xlu0
        %v3291 = vpop.trf.xlu0
        %v3292 = vpop.trf.xlu0
        %v3293 = vpop.trf.xlu0
        %v3294 = vpop.trf.xlu0
        %v3295 = vpop.trf.xlu0
        %v3296 = vpop.trf.xlu0
        %v3297 = vpop.trf.xlu0
        %v3298 = vpop.trf.xlu0
        %v3299 = vpop.trf.xlu0
        %v3300 = vpop.trf.xlu0
        %v3301 = vpop.trf.xlu0
        %v3302 = vpop.trf.xlu0
        %3303 = vst [vmem:[%s187] sm:$0xff] %v3191
        %3304 = vst [vmem:[%s187 + $0x8] sm:$0xff] %v3223
        %3305 = vst [vmem:[%s187 + $0x10] sm:$0xff] %v3255
        %3306 = vst [vmem:[%s187 + $0x18] sm:$0xff] %v3287
        %s3307 = sand.u32 %s111, 1
        %s3308 = scalar_lea.sflag [#allocation3], %s3307
        %s3309 = sand.u32 %s111, 1
        %s3310 = smul.addr %s3309, 32
        %s3311 = scalar_lea.vmem [#allocation2], %s3310
        // Predicated region
        $region33: #{tpu_custom_call.1} parent=31 // pred_check
          %p3312 = pneg %p121
        $region34: #{tpu_custom_call.1} parent=31 // pred_check_branch
          %3314 = sbr.rel (%p3312) target = $region36
        $region35: #{tpu_custom_call.1} parent=31 // pred_region
          %s3315 = smul.u32 4, %s22
          %3317 = vsyncadd %s3308, 0
          %s3318 = smul.addr %s21, 8
          %s3319 = sadd.s32 %s3315, %s3318
          %s3320 = smul.addr %s3319, 8
          %s3321 = scalar_lea.hbm %s3, %s3320
          %s3323 = sshll.u32 %s3311, 4
          %s3324 = int_to_ptr.vmem [resolvable:$true] %s3323
          %s3325 = sshll.u32 %s3321, 4
          %s3326 = int_to_ptr.hbm [resolvable:$true] %s3325
          %3328 = dma.vmem_to_hbm [thread:$0]  %s3324, 512, %s3326, %s3308
        $region36: #{tpu_custom_call.1} parent=31 // pred_fallthru
          _
      $region32: #{tpu_custom_call.1} parent=5 // pred_fallthru
        _
      %p3329 = scmp.le.s32.totalorder 2, %s12
      // Predicated region
      $region37: #{tpu_custom_call.1} parent=5 // pred_check
        %p3330 = pneg %p3329
      $region38: #{tpu_custom_call.1} parent=5 // pred_check_branch
        %3332 = sbr.rel (%p3330) target = $region40
      $region39: #{tpu_custom_call.1} parent=5 // pred_region
        %s3333 = ssub.s32 %s12, 2
        // Predicated region
        $region41: #{tpu_custom_call.1} parent=39 // pred_check
          %p3334 = pneg %p127
        $region42: #{tpu_custom_call.1} parent=39 // pred_check_branch
          %3336 = sbr.rel (%p3334) target = $region44
        $region43: #{tpu_custom_call.1} parent=39 // pred_region
          %s3337 = sand.u32 %s112, 1
          %s3338 = scalar_lea.sflag [#allocation3], %s3337
          %s3339 = sand.u32 %s112, 1
          %s3340 = smul.addr %s3339, 32
          %s3341 = scalar_lea.vmem [#allocation2], %s3340
          %3343 = dma.done %s3338, 512
        $region44: #{tpu_custom_call.1} parent=39 // pred_fallthru
          _
      $region40: #{tpu_custom_call.1} parent=5 // pred_fallthru
        _
    $region6: #{tpu_custom_call.1} parent=1 // loop_footer
      %s16 = sadd.s32 1, %s12
    $region7: #{tpu_custom_call.1} parent=1 // loop_footer_branch
      %11 = sbr.rel target = $region3
    $region8: #{tpu_custom_call.1} parent=1 // loop_exit
      _
    %3344 = vsyncpa [#allocation3], 1
    %s3345 = scalar_lea.sflag [#allocation3], 1
    %3346 = vsyncpa %s3345, 1

// kernel: tpu_custom_call.1
$region0: #{tpu_custom_call.1}
  #allocation0 [shape = 'u32[]', space=smem, size = 0x4, offset = 0x4, fixed_abs, tag = 'smem constant byte address 0x4 - core index']
  #allocation1 [shape = 'u32[72,128]{1,0:T(1,128)}', space=vmem, size = 0x9000, scoped, tag = 'internal scratch']
  %s0 = inlined_call_operand.vmem [shape: f32[4,18,34,4], index: 0, kind: input, shape index: {}]
  %s1 = inlined_call_operand.vmem [shape: f32[36,8], index: 1, kind: input, shape index: {}]
  %s2 = inlined_call_operand.vmem [shape: f32[1,8], index: 2, kind: input, shape index: {}]
  %s3 = inlined_call_operand.vmem [shape: f32[2,1024,8], index: 3, kind: output, shape index: {}]
  %s4 = sld [smem:[#allocation0]]
  $region45: #{tpu_custom_call.1} parent=0
    _
  %s6 = ssub.s32 1, %s4
  %s7 = scalar_select 0, %s6, %s4
  loop: start=0, step=1, limit=6
  $region2: #{tpu_custom_call.1} parent=0 // loop_pre_header
    _
  $region3: #{tpu_custom_call.1} parent=0 // loop_header
    %s9 = sphi 0, %s13
    %p10 = scmp.ge.s32.totalorder %s9, 6
    %s16 = sphi 0, %s28
    %s17 = sphi 0, %s24
    %s18 = sphi 0, %s16
    %s19 = sphi 0, %s17
    %s20 = sphi 0, %s18
    %s21 = sphi 0, %s19
    %s35 = sphi 0, %s37
    %s38 = sphi 0, %s35
    %s39 = sphi 0, %s38
    %s55 = sphi 0, %s39
    %s59 = sphi 0, %s59
    %s61 = sphi 0, %s59
    %s62 = sphi 0, %s61
    %s76 = sphi 0, %s62
    %s80 = sphi 0, %s80
    %s82 = sphi 0, %s80
    %s83 = sphi 0, %s82
    %s97 = sphi 0, %s83
    %s105 = sphi 0, %s107
    %s108 = sphi 0, %s105
    %s109 = sphi 0, %s108
    %s125 = sphi 0, %s109
  $region4: #{tpu_custom_call.1} parent=0 // loop_header_branch
    %12 = sbr.rel (%p10) target = $region8
  $region5: #{tpu_custom_call.1} parent=0 // loop_body
    %s14 = ssub.s32 %s9, 1
    %s15 = ssub.s32 %s9, 2
    %s22 = sadd.s32 1, %s17
    %p23 = scmp.ge.s32.totalorder %s22, 2
    %s24 = scalar_select %p23, 0, %s22
    %s25 = sadd.s32 1, %s16
    %s26 = scalar_select %p23, %s25, %s16
    %p27 = scmp.ge.s32.totalorder %s26, 2
    %s28 = scalar_select %p27, 0, %s26
    %s29 = smul.u32 %s16, 2
    %s30 = sadd.s32 %s29, %s17
    %s31 = smul.u32 %s28, 2
    %s32 = sadd.s32 %s31, %s24
    %s33 = ssub.s32 %s30, %s32
    %p34 = scmp.eq.s32.totalorder %s33, 0
    %s36 = sadd.s32 %s35, 1
    %s37 = scalar_select %p34, %s35, %s36
    %p40 = pneg %p34
    %p41 = scmp.eq.s32.totalorder %s9, 3
    %p42 = por %p40, %p41
    %p43 = scmp.ne.s32.totalorder %s35, %s38
    %p44 = scmp.eq.s32.totalorder %s9, 0
    %p45 = por %p43, %p44
    %p46 = scmp.ne.s32.totalorder %s35, %s38
    %p47 = scmp.eq.s32.totalorder %s14, 3
    %p48 = por %p46, %p47
    %p49 = scmp.ne.s32.totalorder %s38, %s39
    %p50 = scmp.eq.s32.totalorder %s14, 0
    %p51 = por %p49, %p50
    %p52 = scmp.ne.s32.totalorder %s38, %s39
    %p53 = scmp.eq.s32.totalorder %s15, 3
    %p54 = por %p52, %p53
    %p56 = scmp.ne.s32.totalorder %s39, %s55
    %p57 = scmp.eq.s32.totalorder %s15, 0
    %p58 = por %p56, %p57
    %s60 = sadd.s32 %s59, 1
    %p63 = scmp.eq.s32.totalorder %s9, 3
    %p64 = scmp.ne.s32.totalorder %s59, %s61
    %p65 = scmp.eq.s32.totalorder %s9, 0
    %p66 = por %p64, %p65
    %p67 = scmp.ne.s32.totalorder %s59, %s61
    %p68 = scmp.eq.s32.totalorder %s14, 3
    %p69 = por %p67, %p68
    %p70 = scmp.ne.s32.totalorder %s61, %s62
    %p71 = scmp.eq.s32.totalorder %s14, 0
    %p72 = por %p70, %p71
    %p73 = scmp.ne.s32.totalorder %s61, %s62
    %p74 = scmp.eq.s32.totalorder %s15, 3
    %p75 = por %p73, %p74
    %p77 = scmp.ne.s32.totalorder %s62, %s76
    %p78 = scmp.eq.s32.totalorder %s15, 0
    %p79 = por %p77, %p78
    %s81 = sadd.s32 %s80, 1
    %p84 = scmp.eq.s32.totalorder %s9, 3
    %p85 = scmp.ne.s32.totalorder %s80, %s82
    %p86 = scmp.eq.s32.totalorder %s9, 0
    %p87 = por %p85, %p86
    %p88 = scmp.ne.s32.totalorder %s80, %s82
    %p89 = scmp.eq.s32.totalorder %s14, 3
    %p90 = por %p88, %p89
    %p91 = scmp.ne.s32.totalorder %s82, %s83
    %p92 = scmp.eq.s32.totalorder %s14, 0
    %p93 = por %p91, %p92
    %p94 = scmp.ne.s32.totalorder %s82, %s83
    %p95 = scmp.eq.s32.totalorder %s15, 3
    %p96 = por %p94, %p95
    %p98 = scmp.ne.s32.totalorder %s83, %s97
    %p99 = scmp.eq.s32.totalorder %s15, 0
    %p100 = por %p98, %p99
    %s101 = ssub.s32 %s16, %s28
    %s102 = ssub.s32 %s17, %s24
    %s103 = sor.u32 %s101, %s102
    %p104 = scmp.eq.s32.totalorder %s103, 0
    %s106 = sadd.s32 %s105, 1
    %s107 = scalar_select %p104, %s105, %s106
    %p110 = pneg %p104
    %p111 = scmp.eq.s32.totalorder %s9, 3
    %p112 = por %p110, %p111
    %p113 = scmp.ne.s32.totalorder %s105, %s108
    %p114 = scmp.eq.s32.totalorder %s9, 0
    %p115 = por %p113, %p114
    %p116 = scmp.ne.s32.totalorder %s105, %s108
    %p117 = scmp.eq.s32.totalorder %s14, 3
    %p118 = por %p116, %p117
    %p119 = scmp.ne.s32.totalorder %s108, %s109
    %p120 = scmp.eq.s32.totalorder %s14, 0
    %p121 = por %p119, %p120
    %p122 = scmp.ne.s32.totalorder %s108, %s109
    %p123 = scmp.eq.s32.totalorder %s15, 3
    %p124 = por %p122, %p123
    %p126 = scmp.ne.s32.totalorder %s109, %s125
    %p127 = scmp.eq.s32.totalorder %s15, 0
    %p128 = por %p126, %p127
    %p129 = scmp.le.s32.totalorder 1, %s9
    %p130 = scmp.lt.s32.totalorder %s9, 5
    %p131 = pnand %p129, %p130
    %p132 = pneg %p131
    // Predicated region
    $region9: #{tpu_custom_call.1} parent=5 // pred_check
      _
    $region10: #{tpu_custom_call.1} parent=5 // pred_check_branch
      %134 = sbr.rel (%p131) target = $region12
    $region11: #{tpu_custom_call.1} parent=5 // pred_region
      %s135 = ssub.s32 %s9, 1
      // Predicated region
      $region13: #{tpu_custom_call.1} parent=11 // pred_check
        %p136 = pneg %p72
      $region14: #{tpu_custom_call.1} parent=11 // pred_check_branch
        %138 = sbr.rel (%p136) target = $region16
      $region15: #{tpu_custom_call.1} parent=11 // pred_region
        _
      $region16: #{tpu_custom_call.1} parent=11 // pred_fallthru
        _
      // Predicated region
      $region17: #{tpu_custom_call.1} parent=11 // pred_check
        %p139 = pneg %p93
      $region18: #{tpu_custom_call.1} parent=11 // pred_check_branch
        %141 = sbr.rel (%p139) target = $region20
      $region19: #{tpu_custom_call.1} parent=11 // pred_region
        _
      $region20: #{tpu_custom_call.1} parent=11 // pred_fallthru
        _
    $region12: #{tpu_custom_call.1} parent=5 // pred_fallthru
      _
    %p142 = scmp.lt.s32.totalorder %s9, 4
    // Predicated region
    $region21: #{tpu_custom_call.1} parent=5 // pred_check
      %p143 = pneg %p142
    $region22: #{tpu_custom_call.1} parent=5 // pred_check_branch
      %145 = sbr.rel (%p143) target = $region24
    $region23: #{tpu_custom_call.1} parent=5 // pred_region
      // Predicated region
      $region25: #{tpu_custom_call.1} parent=23 // pred_check
        %p146 = pneg %p45
      $region26: #{tpu_custom_call.1} parent=23 // pred_check_branch
        %148 = sbr.rel (%p146) target = $region28
      $region27: #{tpu_custom_call.1} parent=23 // pred_region
        %s149 = smul.u32 %s16, 2
        %s150 = sadd.s32 %s149, %s17
        %p151 = scmp.lt.s32.totalorder %s150, 3
        %s152 = scalar_select %p151, %s150, 3
        %s153 = smul.addr %s152, 90
        %s154 = smul.addr %s153, 8
        %s155 = scalar_lea.vmem %s0, %s154
        %s156 = smul.u32 %s16, 2
        %s157 = sadd.s32 %s156, %s17
      $region28: #{tpu_custom_call.1} parent=23 // pred_fallthru
        _
    $region24: #{tpu_custom_call.1} parent=5 // pred_fallthru
      _
    %p158 = scmp.le.s32.totalorder 1, %s9
    %p159 = scmp.lt.s32.totalorder %s9, 5
    %p160 = pnand %p158, %p159
    %p161 = pneg %p160
    // Predicated region
    $region29: #{tpu_custom_call.1} parent=5 // pred_check
      _
    $region30: #{tpu_custom_call.1} parent=5 // pred_check_branch
      %163 = sbr.rel (%p160) target = $region32
    $region31: #{tpu_custom_call.1} parent=5 // pred_region
      %s164 = ssub.s32 %s9, 1
      %s165 = smul.u32 %s18, 2
      %s166 = sadd.s32 %s165, %s19
      %p167 = scmp.lt.s32.totalorder %s166, 3
      %s168 = scalar_select %p167, %s166, 3
      %s169 = smul.addr %s168, 90
      %s170 = smul.addr %s169, 8
      %s171 = scalar_lea.vmem %s0, %s170
      %p172 = pneg %p51
      %p173 = pneg %p48
      %p174 = pneg %p72
      %p175 = pneg %p69
      %p176 = pneg %p93
      %p177 = pneg %p90
      %p178 = pneg %p121
      %p179 = pneg %p118
      %s180 = smul.u32 64, %s19
      %p181 = scmp.lt.s32.totalorder %s18, 1
      %s182 = scalar_select %p181, %s18, 1
      %p183 = scmp.lt.s32.totalorder %s180, 127
      %s184 = scalar_select %p183, %s180, 127
      %s185 = smul.addr %s182, 128
      %s186 = sadd.s32 %s184, %s185
      %s187 = smul.addr %s186, 8
      %s188 = scalar_lea.vmem %s3, %s187
      %s189 = smul.u32 %s18, 2
      %s190 = sadd.s32 %s189, %s19
      %p191 = scmp.lt.s32.totalorder %s190, 3
      %s192 = scalar_select %p191, %s190, 3
      %s193 = smul.addr %s192, 90
      %s194 = smul.addr %s193, 8
      %s195 = scalar_lea.vmem %s0, %s194
      %s196 = smul.u32 %s18, 2
      %s197 = sadd.s32 %s196, %s19
      %s198 = smul.u32 64, %s19
      %p199 = scmp.lt.s32.totalorder %s18, 1
      %s200 = scalar_select %p199, %s18, 1
      %p201 = scmp.lt.s32.totalorder %s198, 127
      %s202 = scalar_select %p201, %s198, 127
      %s203 = smul.addr %s200, 128
      %s204 = sadd.s32 %s202, %s203
      %s205 = smul.addr %s204, 8
      %s206 = scalar_lea.vmem %s3, %s205
      %s207 = smul.u32 64, %s19
      %v208 = vld [vmem:[%s195] sm:$0xff]
      %v209 = vld [vmem:[%s195 + $0x8] sm:$0xff]
      %v210 = vld [vmem:[%s195 + $0x10] sm:$0xff]
      %v211 = vld [vmem:[%s195 + $0x18] sm:$0xff]
      %v212 = vld [vmem:[%s195 + $0x20] sm:$0x3]
      %v213 = vld [vmem:[%s195 + $0x28] sm:$0xff]
      %v214 = vld [vmem:[%s195 + $0x30] sm:$0xff]
      %v215 = vld [vmem:[%s195 + $0x38] sm:$0xff]
      %v216 = vld [vmem:[%s195 + $0x40] sm:$0xff]
      %v217 = vld [vmem:[%s195 + $0x48] sm:$0x3]
      %v218 = vld [vmem:[%s195 + $0x50] sm:$0xff]
      %v219 = vld [vmem:[%s195 + $0x58] sm:$0xff]
      %v220 = vld [vmem:[%s195 + $0x60] sm:$0xff]
      %v221 = vld [vmem:[%s195 + $0x68] sm:$0xff]
      %v222 = vld [vmem:[%s195 + $0x70] sm:$0x3]
      %v223 = vld [vmem:[%s195 + $0x78] sm:$0xff]
      %v224 = vld [vmem:[%s195 + $0x80] sm:$0xff]
      %v225 = vld [vmem:[%s195 + $0x88] sm:$0xff]
      %v226 = vld [vmem:[%s195 + $0x90] sm:$0xff]
      %v227 = vld [vmem:[%s195 + $0x98] sm:$0x3]
      %v228 = vld [vmem:[%s195 + $0xa0] sm:$0xff]
      %v229 = vld [vmem:[%s195 + $0xa8] sm:$0xff]
      %v230 = vld [vmem:[%s195 + $0xb0] sm:$0xff]
      %v231 = vld [vmem:[%s195 + $0xb8] sm:$0xff]
      %v232 = vld [vmem:[%s195 + $0xc0] sm:$0x3]
      %v233 = vld [vmem:[%s195 + $0xc8] sm:$0xff]
      %v234 = vld [vmem:[%s195 + $0xd0] sm:$0xff]
      %v235 = vld [vmem:[%s195 + $0xd8] sm:$0xff]
      %v236 = vld [vmem:[%s195 + $0xe0] sm:$0xff]
      %v237 = vld [vmem:[%s195 + $0xe8] sm:$0x3]
      %v238 = vld [vmem:[%s195 + $0xf0] sm:$0xff]
      %v239 = vld [vmem:[%s195 + $0xf8] sm:$0xff]
      %v240 = vld [vmem:[%s195 + $0x100] sm:$0xff]
      %v241 = vld [vmem:[%s195 + $0x108] sm:$0xff]
      %v242 = vld [vmem:[%s195 + $0x110] sm:$0x3]
      %v243 = vld [vmem:[%s195 + $0x118] sm:$0xff]
      %v244 = vld [vmem:[%s195 + $0x120] sm:$0xff]
      %v245 = vld [vmem:[%s195 + $0x128] sm:$0xff]
      %v246 = vld [vmem:[%s195 + $0x130] sm:$0xff]
      %v247 = vld [vmem:[%s195 + $0x138] sm:$0x3]
      %v248 = vld [vmem:[%s195 + $0x140] sm:$0xff]
      %v249 = vld [vmem:[%s195 + $0x148] sm:$0xff]
      %v250 = vld [vmem:[%s195 + $0x150] sm:$0xff]
      %v251 = vld [vmem:[%s195 + $0x158] sm:$0xff]
      %v252 = vld [vmem:[%s195 + $0x160] sm:$0x3]
      %v253 = vld [vmem:[%s195 + $0x168] sm:$0xff]
      %v254 = vld [vmem:[%s195 + $0x170] sm:$0xff]
      %v255 = vld [vmem:[%s195 + $0x178] sm:$0xff]
      %v256 = vld [vmem:[%s195 + $0x180] sm:$0xff]
      %v257 = vld [vmem:[%s195 + $0x188] sm:$0x3]
      %v258 = vld [vmem:[%s195 + $0x190] sm:$0xff]
      %v259 = vld [vmem:[%s195 + $0x198] sm:$0xff]
      %v260 = vld [vmem:[%s195 + $0x1a0] sm:$0xff]
      %v261 = vld [vmem:[%s195 + $0x1a8] sm:$0xff]
      %v262 = vld [vmem:[%s195 + $0x1b0] sm:$0x3]
      %v263 = vld [vmem:[%s195 + $0x1b8] sm:$0xff]
      %v264 = vld [vmem:[%s195 + $0x1c0] sm:$0xff]
      %v265 = vld [vmem:[%s195 + $0x1c8] sm:$0xff]
      %v266 = vld [vmem:[%s195 + $0x1d0] sm:$0xff]
      %v267 = vld [vmem:[%s195 + $0x1d8] sm:$0x3]
      %v268 = vld [vmem:[%s195 + $0x1e0] sm:$0xff]
      %v269 = vld [vmem:[%s195 + $0x1e8] sm:$0xff]
      %v270 = vld [vmem:[%s195 + $0x1f0] sm:$0xff]
      %v271 = vld [vmem:[%s195 + $0x1f8] sm:$0xff]
      %v272 = vld [vmem:[%s195 + $0x200] sm:$0x3]
      %v273 = vld [vmem:[%s195 + $0x208] sm:$0xff]
      %v274 = vld [vmem:[%s195 + $0x210] sm:$0xff]
      %v275 = vld [vmem:[%s195 + $0x218] sm:$0xff]
      %v276 = vld [vmem:[%s195 + $0x220] sm:$0xff]
      %v277 = vld [vmem:[%s195 + $0x228] sm:$0x3]
      %v278 = vld [vmem:[%s195 + $0x230] sm:$0xff]
      %v279 = vld [vmem:[%s195 + $0x238] sm:$0xff]
      %v280 = vld [vmem:[%s195 + $0x240] sm:$0xff]
      %v281 = vld [vmem:[%s195 + $0x248] sm:$0xff]
      %v282 = vld [vmem:[%s195 + $0x250] sm:$0x3]
      %v283 = vld [vmem:[%s195 + $0x258] sm:$0xff]
      %v284 = vld [vmem:[%s195 + $0x260] sm:$0xff]
      %v285 = vld [vmem:[%s195 + $0x268] sm:$0xff]
      %v286 = vld [vmem:[%s195 + $0x270] sm:$0xff]
      %v287 = vld [vmem:[%s195 + $0x278] sm:$0x3]
      %v288 = vld [vmem:[%s195 + $0x280] sm:$0xff]
      %v289 = vld [vmem:[%s195 + $0x288] sm:$0xff]
      %v290 = vld [vmem:[%s195 + $0x290] sm:$0xff]
      %v291 = vld [vmem:[%s195 + $0x298] sm:$0xff]
      %v292 = vld [vmem:[%s195 + $0x2a0] sm:$0x3]
      %v293 = vld [vmem:[%s195 + $0x2a8] sm:$0xff]
      %v294 = vld [vmem:[%s195 + $0x2b0] sm:$0xff]
      %v295 = vld [vmem:[%s195 + $0x2b8] sm:$0xff]
      %v296 = vld [vmem:[%s195 + $0x2c0] sm:$0xff]
      %v297 = vld [vmem:[%s195 + $0x2c8] sm:$0x3]
      %v298 = vld [vmem:[%s1] sm:$0xf]
      %vm379 = vcmask 1046528
      %v380 = vrot.slane %v208, 1
      %v381 = vrot.slane %v209, 1
      %v382 = vsel %vm379, %v380, %v381
      %v383 = vrot.slane %v210, 1
      %v384 = vsel %vm379, %v381, %v383
      %v385 = vrot.slane %v211, 1
      %v386 = vsel %vm379, %v383, %v385
      %v387 = vrot.slane %v212, 1
      %v388 = vsel %vm379, %v385, %v387
      %v389 = vrot.slane %v213, 1
      %v390 = vrot.slane %v214, 1
      %v391 = vsel %vm379, %v389, %v390
      %v392 = vrot.slane %v215, 1
      %v393 = vsel %vm379, %v390, %v392
      %v394 = vrot.slane %v216, 1
      %v395 = vsel %vm379, %v392, %v394
      %v396 = vrot.slane %v217, 1
      %v397 = vsel %vm379, %v394, %v396
      %v398 = vrot.slane %v218, 1
      %v399 = vrot.slane %v219, 1
      %v400 = vsel %vm379, %v398, %v399
      %v401 = vrot.slane %v220, 1
      %v402 = vsel %vm379, %v399, %v401
      %v403 = vrot.slane %v221, 1
      %v404 = vsel %vm379, %v401, %v403
      %v405 = vrot.slane %v222, 1
      %v406 = vsel %vm379, %v403, %v405
      %v407 = vrot.slane %v223, 1
      %v408 = vrot.slane %v224, 1
      %v409 = vsel %vm379, %v407, %v408
      %v410 = vrot.slane %v225, 1
      %v411 = vsel %vm379, %v408, %v410
      %v412 = vrot.slane %v226, 1
      %v413 = vsel %vm379, %v410, %v412
      %v414 = vrot.slane %v227, 1
      %v415 = vsel %vm379, %v412, %v414
      %v416 = vrot.slane %v228, 1
      %v417 = vrot.slane %v229, 1
      %v418 = vsel %vm379, %v416, %v417
      %v419 = vrot.slane %v230, 1
      %v420 = vsel %vm379, %v417, %v419
      %v421 = vrot.slane %v231, 1
      %v422 = vsel %vm379, %v419, %v421
      %v423 = vrot.slane %v232, 1
      %v424 = vsel %vm379, %v421, %v423
      %v425 = vrot.slane %v233, 1
      %v426 = vrot.slane %v234, 1
      %v427 = vsel %vm379, %v425, %v426
      %v428 = vrot.slane %v235, 1
      %v429 = vsel %vm379, %v426, %v428
      %v430 = vrot.slane %v236, 1
      %v431 = vsel %vm379, %v428, %v430
      %v432 = vrot.slane %v237, 1
      %v433 = vsel %vm379, %v430, %v432
      %v434 = vrot.slane %v238, 1
      %v435 = vrot.slane %v239, 1
      %v436 = vsel %vm379, %v434, %v435
      %v437 = vrot.slane %v240, 1
      %v438 = vsel %vm379, %v435, %v437
      %v439 = vrot.slane %v241, 1
      %v440 = vsel %vm379, %v437, %v439
      %v441 = vrot.slane %v242, 1
      %v442 = vsel %vm379, %v439, %v441
      %v443 = vrot.slane %v243, 1
      %v444 = vrot.slane %v244, 1
      %v445 = vsel %vm379, %v443, %v444
      %v446 = vrot.slane %v245, 1
      %v447 = vsel %vm379, %v444, %v446
      %v448 = vrot.slane %v246, 1
      %v449 = vsel %vm379, %v446, %v448
      %v450 = vrot.slane %v247, 1
      %v451 = vsel %vm379, %v448, %v450
      %v452 = vrot.slane %v248, 1
      %v453 = vrot.slane %v249, 1
      %v454 = vsel %vm379, %v452, %v453
      %v455 = vrot.slane %v250, 1
      %v456 = vsel %vm379, %v453, %v455
      %v457 = vrot.slane %v251, 1
      %v458 = vsel %vm379, %v455, %v457
      %v459 = vrot.slane %v252, 1
      %v460 = vsel %vm379, %v457, %v459
      %v461 = vrot.slane %v253, 1
      %v462 = vrot.slane %v254, 1
      %v463 = vsel %vm379, %v461, %v462
      %v464 = vrot.slane %v255, 1
      %v465 = vsel %vm379, %v462, %v464
      %v466 = vrot.slane %v256, 1
      %v467 = vsel %vm379, %v464, %v466
      %v468 = vrot.slane %v257, 1
      %v469 = vsel %vm379, %v466, %v468
      %v470 = vrot.slane %v258, 1
      %v471 = vrot.slane %v259, 1
      %v472 = vsel %vm379, %v470, %v471
      %v473 = vrot.slane %v260, 1
      %v474 = vsel %vm379, %v471, %v473
      %v475 = vrot.slane %v261, 1
      %v476 = vsel %vm379, %v473, %v475
      %v477 = vrot.slane %v262, 1
      %v478 = vsel %vm379, %v475, %v477
      %v479 = vrot.slane %v263, 1
      %v480 = vrot.slane %v264, 1
      %v481 = vsel %vm379, %v479, %v480
      %v482 = vrot.slane %v265, 1
      %v483 = vsel %vm379, %v480, %v482
      %v484 = vrot.slane %v266, 1
      %v485 = vsel %vm379, %v482, %v484
      %v486 = vrot.slane %v267, 1
      %v487 = vsel %vm379, %v484, %v486
      %v488 = vrot.slane %v268, 1
      %v489 = vrot.slane %v269, 1
      %v490 = vsel %vm379, %v488, %v489
      %v491 = vrot.slane %v270, 1
      %v492 = vsel %vm379, %v489, %v491
      %v493 = vrot.slane %v271, 1
      %v494 = vsel %vm379, %v491, %v493
      %v495 = vrot.slane %v272, 1
      %v496 = vsel %vm379, %v493, %v495
      %v497 = vrot.slane %v273, 1
      %v498 = vrot.slane %v274, 1
      %v499 = vsel %vm379, %v497, %v498
      %v500 = vrot.slane %v275, 1
      %v501 = vsel %vm379, %v498, %v500
      %v502 = vrot.slane %v276, 1
      %v503 = vsel %vm379, %v500, %v502
      %v504 = vrot.slane %v277, 1
      %v505 = vsel %vm379, %v502, %v504
      %v506 = vrot.slane %v278, 1
      %v507 = vrot.slane %v279, 1
      %v508 = vsel %vm379, %v506, %v507
      %v509 = vrot.slane %v280, 1
      %v510 = vsel %vm379, %v507, %v509
      %v511 = vrot.slane %v281, 1
      %v512 = vsel %vm379, %v509, %v511
      %v513 = vrot.slane %v282, 1
      %v514 = vsel %vm379, %v511, %v513
      %v515 = vrot.slane %v283, 1
      %v516 = vrot.slane %v284, 1
      %v517 = vsel %vm379, %v515, %v516
      %v518 = vrot.slane %v285, 1
      %v519 = vsel %vm379, %v516, %v518
      %v520 = vrot.slane %v286, 1
      %v521 = vsel %vm379, %v518, %v520
      %v522 = vrot.slane %v287, 1
      %v523 = vsel %vm379, %v520, %v522
      %v524 = vld [vmem:[%s1 + $0x4] sm:$0xf]
      %vm525 = vcmask 31744
      %v526 = vsel %vm525, %v382, 0
      %v528 = vsel %vm525, %v384, 0
      %v530 = vsel %vm525, %v386, 0
      %v532 = vsel %vm525, %v388, 0
      %v534 = vsel %vm525, %v391, 0
      %v536 = vsel %vm525, %v393, 0
      %v538 = vsel %vm525, %v395, 0
      %v540 = vsel %vm525, %v397, 0
      %v542 = vsel %vm525, %v400, 0
      %v544 = vsel %vm525, %v402, 0
      %v546 = vsel %vm525, %v404, 0
      %v548 = vsel %vm525, %v406, 0
      %v550 = vsel %vm525, %v409, 0
      %v552 = vsel %vm525, %v411, 0
      %v554 = vsel %vm525, %v413, 0
      %v556 = vsel %vm525, %v415, 0
      %v558 = vsel %vm525, %v418, 0
      %v560 = vsel %vm525, %v420, 0
      %v562 = vsel %vm525, %v422, 0
      %v564 = vsel %vm525, %v424, 0
      %v566 = vsel %vm525, %v427, 0
      %v568 = vsel %vm525, %v429, 0
      %v570 = vsel %vm525, %v431, 0
      %v572 = vsel %vm525, %v433, 0
      %v574 = vsel %vm525, %v436, 0
      %v576 = vsel %vm525, %v438, 0
      %v578 = vsel %vm525, %v440, 0
      %v580 = vsel %vm525, %v442, 0
      %v582 = vsel %vm525, %v445, 0
      %v584 = vsel %vm525, %v447, 0
      %v586 = vsel %vm525, %v449, 0
      %v588 = vsel %vm525, %v451, 0
      %v590 = vsel %vm525, %v454, 0
      %v592 = vsel %vm525, %v456, 0
      %v594 = vsel %vm525, %v458, 0
      %v596 = vsel %vm525, %v460, 0
      %v598 = vsel %vm525, %v463, 0
      %v600 = vsel %vm525, %v465, 0
      %v602 = vsel %vm525, %v467, 0
      %v604 = vsel %vm525, %v469, 0
      %v606 = vsel %vm525, %v472, 0
      %v608 = vsel %vm525, %v474, 0
      %v610 = vsel %vm525, %v476, 0
      %v612 = vsel %vm525, %v478, 0
      %v614 = vsel %vm525, %v481, 0
      %v616 = vsel %vm525, %v483, 0
      %v618 = vsel %vm525, %v485, 0
      %v620 = vsel %vm525, %v487, 0
      %v622 = vsel %vm525, %v490, 0
      %v624 = vsel %vm525, %v492, 0
      %v626 = vsel %vm525, %v494, 0
      %v628 = vsel %vm525, %v496, 0
      %v630 = vsel %vm525, %v499, 0
      %v632 = vsel %vm525, %v501, 0
      %v634 = vsel %vm525, %v503, 0
      %v636 = vsel %vm525, %v505, 0
      %v638 = vsel %vm525, %v508, 0
      %v640 = vsel %vm525, %v510, 0
      %v642 = vsel %vm525, %v512, 0
      %v644 = vsel %vm525, %v514, 0
      %v646 = vsel %vm525, %v517, 0
      %v648 = vsel %vm525, %v519, 0
      %v650 = vsel %vm525, %v521, 0
      %v652 = vsel %vm525, %v523, 0
      %vm654 = vcmask 1043456
      %v656 = vsel %vm654, %v524, 0
      %658 = vmatpush.msra.mxu0 0.0
      %659 = vmatpush.msra.mxu0 0.0
      %660 = vmatpush.msra.mxu0 0.0
      %661 = vmatpush.msra.mxu0 0.0
      %662 = vmatpush.msra.mxu0 0.0
      %663 = vmatpush.msra.mxu0 0.0
      %664 = vmatpush.msra.mxu0 0.0
      %665 = vmatpush.msra.mxu0 0.0
      %666 = vmatpush.msra.mxu0 0.0
      %667 = vmatpush.msra.mxu0 0.0
      %668 = vmatpush.msra.mxu0 0.0
      %669 = vmatpush.msra.mxu0 0.0
      %670 = vmatpush.msra.mxu0 0.0
      %671 = vmatpush.msra.mxu0 0.0
      %672 = vmatpush.msra.mxu0 0.0
      %673 = vmatpush.msra.mxu0 %v656
      %674 = vmatmul.f32.gmra.mxu0 %v526
      %v675 = vpop.f32.mrf.mxu0
      %v676 = vadd.f32 0.0, %v675
      %677 = vmatmul.f32.gmra.mxu0 %v528
      %v678 = vpop.f32.mrf.mxu0
      %v679 = vadd.f32 0.0, %v678
      %680 = vmatmul.f32.gmra.mxu0 %v530
      %v681 = vpop.f32.mrf.mxu0
      %v682 = vadd.f32 0.0, %v681
      %683 = vmatmul.f32.gmra.mxu0 %v532
      %v684 = vpop.f32.mrf.mxu0
      %v685 = vadd.f32 0.0, %v684
      %686 = vmatmul.f32.gmra.mxu0 %v534
      %v687 = vpop.f32.mrf.mxu0
      %v688 = vadd.f32 0.0, %v687
      %689 = vmatmul.f32.gmra.mxu0 %v536
      %v690 = vpop.f32.mrf.mxu0
      %v691 = vadd.f32 0.0, %v690
      %692 = vmatmul.f32.gmra.mxu0 %v538
      %v693 = vpop.f32.mrf.mxu0
      %v694 = vadd.f32 0.0, %v693
      %695 = vmatmul.f32.gmra.mxu0 %v540
      %v696 = vpop.f32.mrf.mxu0
      %v697 = vadd.f32 0.0, %v696
      %698 = vmatmul.f32.gmra.mxu0 %v542
      %v699 = vpop.f32.mrf.mxu0
      %v700 = vadd.f32 0.0, %v699
      %701 = vmatmul.f32.gmra.mxu0 %v544
      %v702 = vpop.f32.mrf.mxu0
      %v703 = vadd.f32 0.0, %v702
      %704 = vmatmul.f32.gmra.mxu0 %v546
      %v705 = vpop.f32.mrf.mxu0
      %v706 = vadd.f32 0.0, %v705
      %707 = vmatmul.f32.gmra.mxu0 %v548
      %v708 = vpop.f32.mrf.mxu0
      %v709 = vadd.f32 0.0, %v708
      %710 = vmatmul.f32.gmra.mxu0 %v550
      %v711 = vpop.f32.mrf.mxu0
      %v712 = vadd.f32 0.0, %v711
      %713 = vmatmul.f32.gmra.mxu0 %v552
      %v714 = vpop.f32.mrf.mxu0
      %v715 = vadd.f32 0.0, %v714
      %716 = vmatmul.f32.gmra.mxu0 %v554
      %v717 = vpop.f32.mrf.mxu0
      %v718 = vadd.f32 0.0, %v717
      %719 = vmatmul.f32.gmra.mxu0 %v556
      %v720 = vpop.f32.mrf.mxu0
      %v721 = vadd.f32 0.0, %v720
      %722 = vmatmul.f32.gmra.mxu0 %v558
      %v723 = vpop.f32.mrf.mxu0
      %v724 = vadd.f32 0.0, %v723
      %725 = vmatmul.f32.gmra.mxu0 %v560
      %v726 = vpop.f32.mrf.mxu0
      %v727 = vadd.f32 0.0, %v726
      %728 = vmatmul.f32.gmra.mxu0 %v562
      %v729 = vpop.f32.mrf.mxu0
      %v730 = vadd.f32 0.0, %v729
      %731 = vmatmul.f32.gmra.mxu0 %v564
      %v732 = vpop.f32.mrf.mxu0
      %v733 = vadd.f32 0.0, %v732
      %734 = vmatmul.f32.gmra.mxu0 %v566
      %v735 = vpop.f32.mrf.mxu0
      %v736 = vadd.f32 0.0, %v735
      %737 = vmatmul.f32.gmra.mxu0 %v568
      %v738 = vpop.f32.mrf.mxu0
      %v739 = vadd.f32 0.0, %v738
      %740 = vmatmul.f32.gmra.mxu0 %v570
      %v741 = vpop.f32.mrf.mxu0
      %v742 = vadd.f32 0.0, %v741
      %743 = vmatmul.f32.gmra.mxu0 %v572
      %v744 = vpop.f32.mrf.mxu0
      %v745 = vadd.f32 0.0, %v744
      %746 = vmatmul.f32.gmra.mxu0 %v574
      %v747 = vpop.f32.mrf.mxu0
      %v748 = vadd.f32 0.0, %v747
      %749 = vmatmul.f32.gmra.mxu0 %v576
      %v750 = vpop.f32.mrf.mxu0
      %v751 = vadd.f32 0.0, %v750
      %752 = vmatmul.f32.gmra.mxu0 %v578
      %v753 = vpop.f32.mrf.mxu0
      %v754 = vadd.f32 0.0, %v753
      %755 = vmatmul.f32.gmra.mxu0 %v580
      %v756 = vpop.f32.mrf.mxu0
      %v757 = vadd.f32 0.0, %v756
      %758 = vmatmul.f32.gmra.mxu0 %v582
      %v759 = vpop.f32.mrf.mxu0
      %v760 = vadd.f32 0.0, %v759
      %761 = vmatmul.f32.gmra.mxu0 %v584
      %v762 = vpop.f32.mrf.mxu0
      %v763 = vadd.f32 0.0, %v762
      %764 = vmatmul.f32.gmra.mxu0 %v586
      %v765 = vpop.f32.mrf.mxu0
      %v766 = vadd.f32 0.0, %v765
      %767 = vmatmul.f32.gmra.mxu0 %v588
      %v768 = vpop.f32.mrf.mxu0
      %v769 = vadd.f32 0.0, %v768
      %770 = vmatmul.f32.gmra.mxu0 %v590
      %v771 = vpop.f32.mrf.mxu0
      %v772 = vadd.f32 0.0, %v771
      %773 = vmatmul.f32.gmra.mxu0 %v592
      %v774 = vpop.f32.mrf.mxu0
      %v775 = vadd.f32 0.0, %v774
      %776 = vmatmul.f32.gmra.mxu0 %v594
      %v777 = vpop.f32.mrf.mxu0
      %v778 = vadd.f32 0.0, %v777
      %779 = vmatmul.f32.gmra.mxu0 %v596
      %v780 = vpop.f32.mrf.mxu0
      %v781 = vadd.f32 0.0, %v780
      %782 = vmatmul.f32.gmra.mxu0 %v598
      %v783 = vpop.f32.mrf.mxu0
      %v784 = vadd.f32 0.0, %v783
      %785 = vmatmul.f32.gmra.mxu0 %v600
      %v786 = vpop.f32.mrf.mxu0
      %v787 = vadd.f32 0.0, %v786
      %788 = vmatmul.f32.gmra.mxu0 %v602
      %v789 = vpop.f32.mrf.mxu0
      %v790 = vadd.f32 0.0, %v789
      %791 = vmatmul.f32.gmra.mxu0 %v604
      %v792 = vpop.f32.mrf.mxu0
      %v793 = vadd.f32 0.0, %v792
      %794 = vmatmul.f32.gmra.mxu0 %v606
      %v795 = vpop.f32.mrf.mxu0
      %v796 = vadd.f32 0.0, %v795
      %797 = vmatmul.f32.gmra.mxu0 %v608
      %v798 = vpop.f32.mrf.mxu0
      %v799 = vadd.f32 0.0, %v798
      %800 = vmatmul.f32.gmra.mxu0 %v610
      %v801 = vpop.f32.mrf.mxu0
      %v802 = vadd.f32 0.0, %v801
      %803 = vmatmul.f32.gmra.mxu0 %v612
      %v804 = vpop.f32.mrf.mxu0
      %v805 = vadd.f32 0.0, %v804
      %806 = vmatmul.f32.gmra.mxu0 %v614
      %v807 = vpop.f32.mrf.mxu0
      %v808 = vadd.f32 0.0, %v807
      %809 = vmatmul.f32.gmra.mxu0 %v616
      %v810 = vpop.f32.mrf.mxu0
      %v811 = vadd.f32 0.0, %v810
      %812 = vmatmul.f32.gmra.mxu0 %v618
      %v813 = vpop.f32.mrf.mxu0
      %v814 = vadd.f32 0.0, %v813
      %815 = vmatmul.f32.gmra.mxu0 %v620
      %v816 = vpop.f32.mrf.mxu0
      %v817 = vadd.f32 0.0, %v816
      %818 = vmatmul.f32.gmra.mxu0 %v622
      %v819 = vpop.f32.mrf.mxu0
      %v820 = vadd.f32 0.0, %v819
      %821 = vmatmul.f32.gmra.mxu0 %v624
      %v822 = vpop.f32.mrf.mxu0
      %v823 = vadd.f32 0.0, %v822
      %824 = vmatmul.f32.gmra.mxu0 %v626
      %v825 = vpop.f32.mrf.mxu0
      %v826 = vadd.f32 0.0, %v825
      %827 = vmatmul.f32.gmra.mxu0 %v628
      %v828 = vpop.f32.mrf.mxu0
      %v829 = vadd.f32 0.0, %v828
      %830 = vmatmul.f32.gmra.mxu0 %v630
      %v831 = vpop.f32.mrf.mxu0
      %v832 = vadd.f32 0.0, %v831
      %833 = vmatmul.f32.gmra.mxu0 %v632
      %v834 = vpop.f32.mrf.mxu0
      %v835 = vadd.f32 0.0, %v834
      %836 = vmatmul.f32.gmra.mxu0 %v634
      %v837 = vpop.f32.mrf.mxu0
      %v838 = vadd.f32 0.0, %v837
      %839 = vmatmul.f32.gmra.mxu0 %v636
      %v840 = vpop.f32.mrf.mxu0
      %v841 = vadd.f32 0.0, %v840
      %842 = vmatmul.f32.gmra.mxu0 %v638
      %v843 = vpop.f32.mrf.mxu0
      %v844 = vadd.f32 0.0, %v843
      %845 = vmatmul.f32.gmra.mxu0 %v640
      %v846 = vpop.f32.mrf.mxu0
      %v847 = vadd.f32 0.0, %v846
      %848 = vmatmul.f32.gmra.mxu0 %v642
      %v849 = vpop.f32.mrf.mxu0
      %v850 = vadd.f32 0.0, %v849
      %851 = vmatmul.f32.gmra.mxu0 %v644
      %v852 = vpop.f32.mrf.mxu0
      %v853 = vadd.f32 0.0, %v852
      %854 = vmatmul.f32.gmra.mxu0 %v646
      %v855 = vpop.f32.mrf.mxu0
      %v856 = vadd.f32 0.0, %v855
      %857 = vmatmul.f32.gmra.mxu0 %v648
      %v858 = vpop.f32.mrf.mxu0
      %v859 = vadd.f32 0.0, %v858
      %860 = vmatmul.f32.gmra.mxu0 %v650
      %v861 = vpop.f32.mrf.mxu0
      %v862 = vadd.f32 0.0, %v861
      %863 = vmatmul.f32.gmra.mxu0 %v652
      %v864 = vpop.f32.mrf.mxu0
      %v865 = vadd.f32 0.0, %v864
      %866 = vdwg.mxu0
      %v867 = vsel %vm525, %v208, 0
      %v869 = vsel %vm525, %v209, 0
      %v871 = vsel %vm525, %v210, 0
      %v873 = vsel %vm525, %v211, 0
      %v875 = vsel %vm525, %v213, 0
      %v877 = vsel %vm525, %v214, 0
      %v879 = vsel %vm525, %v215, 0
      %v881 = vsel %vm525, %v216, 0
      %v883 = vsel %vm525, %v218, 0
      %v885 = vsel %vm525, %v219, 0
      %v887 = vsel %vm525, %v220, 0
      %v889 = vsel %vm525, %v221, 0
      %v891 = vsel %vm525, %v223, 0
      %v893 = vsel %vm525, %v224, 0
      %v895 = vsel %vm525, %v225, 0
      %v897 = vsel %vm525, %v226, 0
      %v899 = vsel %vm525, %v228, 0
      %v901 = vsel %vm525, %v229, 0
      %v903 = vsel %vm525, %v230, 0
      %v905 = vsel %vm525, %v231, 0
      %v907 = vsel %vm525, %v233, 0
      %v909 = vsel %vm525, %v234, 0
      %v911 = vsel %vm525, %v235, 0
      %v913 = vsel %vm525, %v236, 0
      %v915 = vsel %vm525, %v238, 0
      %v917 = vsel %vm525, %v239, 0
      %v919 = vsel %vm525, %v240, 0
      %v921 = vsel %vm525, %v241, 0
      %v923 = vsel %vm525, %v243, 0
      %v925 = vsel %vm525, %v244, 0
      %v927 = vsel %vm525, %v245, 0
      %v929 = vsel %vm525, %v246, 0
      %v931 = vsel %vm525, %v248, 0
      %v933 = vsel %vm525, %v249, 0
      %v935 = vsel %vm525, %v250, 0
      %v937 = vsel %vm525, %v251, 0
      %v939 = vsel %vm525, %v253, 0
      %v941 = vsel %vm525, %v254, 0
      %v943 = vsel %vm525, %v255, 0
      %v945 = vsel %vm525, %v256, 0
      %v947 = vsel %vm525, %v258, 0
      %v949 = vsel %vm525, %v259, 0
      %v951 = vsel %vm525, %v260, 0
      %v953 = vsel %vm525, %v261, 0
      %v955 = vsel %vm525, %v263, 0
      %v957 = vsel %vm525, %v264, 0
      %v959 = vsel %vm525, %v265, 0
      %v961 = vsel %vm525, %v266, 0
      %v963 = vsel %vm525, %v268, 0
      %v965 = vsel %vm525, %v269, 0
      %v967 = vsel %vm525, %v270, 0
      %v969 = vsel %vm525, %v271, 0
      %v971 = vsel %vm525, %v273, 0
      %v973 = vsel %vm525, %v274, 0
      %v975 = vsel %vm525, %v275, 0
      %v977 = vsel %vm525, %v276, 0
      %v979 = vsel %vm525, %v278, 0
      %v981 = vsel %vm525, %v279, 0
      %v983 = vsel %vm525, %v280, 0
      %v985 = vsel %vm525, %v281, 0
      %v987 = vsel %vm525, %v283, 0
      %v989 = vsel %vm525, %v284, 0
      %v991 = vsel %vm525, %v285, 0
      %v993 = vsel %vm525, %v286, 0
      %v996 = vsel %vm654, %v298, 0
      %998 = vmatpush.msra.mxu0 0.0
      %999 = vmatpush.msra.mxu0 0.0
      %1000 = vmatpush.msra.mxu0 0.0
      %1001 = vmatpush.msra.mxu0 0.0
      %1002 = vmatpush.msra.mxu0 0.0
      %1003 = vmatpush.msra.mxu0 0.0
      %1004 = vmatpush.msra.mxu0 0.0
      %1005 = vmatpush.msra.mxu0 0.0
      %1006 = vmatpush.msra.mxu0 0.0
      %1007 = vmatpush.msra.mxu0 0.0
      %1008 = vmatpush.msra.mxu0 0.0
      %1009 = vmatpush.msra.mxu0 0.0
      %1010 = vmatpush.msra.mxu0 0.0
      %1011 = vmatpush.msra.mxu0 0.0
      %1012 = vmatpush.msra.mxu0 0.0
      %1013 = vmatpush.msra.mxu0 %v996
      %1014 = vmatmul.f32.gmra.mxu0 %v867
      %v1015 = vpop.f32.mrf.mxu0
      %v1016 = vadd.f32 %v676, %v1015
      %1017 = vmatmul.f32.gmra.mxu0 %v869
      %v1018 = vpop.f32.mrf.mxu0
      %v1019 = vadd.f32 %v679, %v1018
      %1020 = vmatmul.f32.gmra.mxu0 %v871
      %v1021 = vpop.f32.mrf.mxu0
      %v1022 = vadd.f32 %v682, %v1021
      %1023 = vmatmul.f32.gmra.mxu0 %v873
      %v1024 = vpop.f32.mrf.mxu0
      %v1025 = vadd.f32 %v685, %v1024
      %1026 = vmatmul.f32.gmra.mxu0 %v875
      %v1027 = vpop.f32.mrf.mxu0
      %v1028 = vadd.f32 %v688, %v1027
      %1029 = vmatmul.f32.gmra.mxu0 %v877
      %v1030 = vpop.f32.mrf.mxu0
      %v1031 = vadd.f32 %v691, %v1030
      %1032 = vmatmul.f32.gmra.mxu0 %v879
      %v1033 = vpop.f32.mrf.mxu0
      %v1034 = vadd.f32 %v694, %v1033
      %1035 = vmatmul.f32.gmra.mxu0 %v881
      %v1036 = vpop.f32.mrf.mxu0
      %v1037 = vadd.f32 %v697, %v1036
      %1038 = vmatmul.f32.gmra.mxu0 %v883
      %v1039 = vpop.f32.mrf.mxu0
      %v1040 = vadd.f32 %v700, %v1039
      %1041 = vmatmul.f32.gmra.mxu0 %v885
      %v1042 = vpop.f32.mrf.mxu0
      %v1043 = vadd.f32 %v703, %v1042
      %1044 = vmatmul.f32.gmra.mxu0 %v887
      %v1045 = vpop.f32.mrf.mxu0
      %v1046 = vadd.f32 %v706, %v1045
      %1047 = vmatmul.f32.gmra.mxu0 %v889
      %v1048 = vpop.f32.mrf.mxu0
      %v1049 = vadd.f32 %v709, %v1048
      %1050 = vmatmul.f32.gmra.mxu0 %v891
      %v1051 = vpop.f32.mrf.mxu0
      %v1052 = vadd.f32 %v712, %v1051
      %1053 = vmatmul.f32.gmra.mxu0 %v893
      %v1054 = vpop.f32.mrf.mxu0
      %v1055 = vadd.f32 %v715, %v1054
      %1056 = vmatmul.f32.gmra.mxu0 %v895
      %v1057 = vpop.f32.mrf.mxu0
      %v1058 = vadd.f32 %v718, %v1057
      %1059 = vmatmul.f32.gmra.mxu0 %v897
      %v1060 = vpop.f32.mrf.mxu0
      %v1061 = vadd.f32 %v721, %v1060
      %1062 = vmatmul.f32.gmra.mxu0 %v899
      %v1063 = vpop.f32.mrf.mxu0
      %v1064 = vadd.f32 %v724, %v1063
      %1065 = vmatmul.f32.gmra.mxu0 %v901
      %v1066 = vpop.f32.mrf.mxu0
      %v1067 = vadd.f32 %v727, %v1066
      %1068 = vmatmul.f32.gmra.mxu0 %v903
      %v1069 = vpop.f32.mrf.mxu0
      %v1070 = vadd.f32 %v730, %v1069
      %1071 = vmatmul.f32.gmra.mxu0 %v905
      %v1072 = vpop.f32.mrf.mxu0
      %v1073 = vadd.f32 %v733, %v1072
      %1074 = vmatmul.f32.gmra.mxu0 %v907
      %v1075 = vpop.f32.mrf.mxu0
      %v1076 = vadd.f32 %v736, %v1075
      %1077 = vmatmul.f32.gmra.mxu0 %v909
      %v1078 = vpop.f32.mrf.mxu0
      %v1079 = vadd.f32 %v739, %v1078
      %1080 = vmatmul.f32.gmra.mxu0 %v911
      %v1081 = vpop.f32.mrf.mxu0
      %v1082 = vadd.f32 %v742, %v1081
      %1083 = vmatmul.f32.gmra.mxu0 %v913
      %v1084 = vpop.f32.mrf.mxu0
      %v1085 = vadd.f32 %v745, %v1084
      %1086 = vmatmul.f32.gmra.mxu0 %v915
      %v1087 = vpop.f32.mrf.mxu0
      %v1088 = vadd.f32 %v748, %v1087
      %1089 = vmatmul.f32.gmra.mxu0 %v917
      %v1090 = vpop.f32.mrf.mxu0
      %v1091 = vadd.f32 %v751, %v1090
      %1092 = vmatmul.f32.gmra.mxu0 %v919
      %v1093 = vpop.f32.mrf.mxu0
      %v1094 = vadd.f32 %v754, %v1093
      %1095 = vmatmul.f32.gmra.mxu0 %v921
      %v1096 = vpop.f32.mrf.mxu0
      %v1097 = vadd.f32 %v757, %v1096
      %1098 = vmatmul.f32.gmra.mxu0 %v923
      %v1099 = vpop.f32.mrf.mxu0
      %v1100 = vadd.f32 %v760, %v1099
      %1101 = vmatmul.f32.gmra.mxu0 %v925
      %v1102 = vpop.f32.mrf.mxu0
      %v1103 = vadd.f32 %v763, %v1102
      %1104 = vmatmul.f32.gmra.mxu0 %v927
      %v1105 = vpop.f32.mrf.mxu0
      %v1106 = vadd.f32 %v766, %v1105
      %1107 = vmatmul.f32.gmra.mxu0 %v929
      %v1108 = vpop.f32.mrf.mxu0
      %v1109 = vadd.f32 %v769, %v1108
      %1110 = vmatmul.f32.gmra.mxu0 %v931
      %v1111 = vpop.f32.mrf.mxu0
      %v1112 = vadd.f32 %v772, %v1111
      %1113 = vmatmul.f32.gmra.mxu0 %v933
      %v1114 = vpop.f32.mrf.mxu0
      %v1115 = vadd.f32 %v775, %v1114
      %1116 = vmatmul.f32.gmra.mxu0 %v935
      %v1117 = vpop.f32.mrf.mxu0
      %v1118 = vadd.f32 %v778, %v1117
      %1119 = vmatmul.f32.gmra.mxu0 %v937
      %v1120 = vpop.f32.mrf.mxu0
      %v1121 = vadd.f32 %v781, %v1120
      %1122 = vmatmul.f32.gmra.mxu0 %v939
      %v1123 = vpop.f32.mrf.mxu0
      %v1124 = vadd.f32 %v784, %v1123
      %1125 = vmatmul.f32.gmra.mxu0 %v941
      %v1126 = vpop.f32.mrf.mxu0
      %v1127 = vadd.f32 %v787, %v1126
      %1128 = vmatmul.f32.gmra.mxu0 %v943
      %v1129 = vpop.f32.mrf.mxu0
      %v1130 = vadd.f32 %v790, %v1129
      %1131 = vmatmul.f32.gmra.mxu0 %v945
      %v1132 = vpop.f32.mrf.mxu0
      %v1133 = vadd.f32 %v793, %v1132
      %1134 = vmatmul.f32.gmra.mxu0 %v947
      %v1135 = vpop.f32.mrf.mxu0
      %v1136 = vadd.f32 %v796, %v1135
      %1137 = vmatmul.f32.gmra.mxu0 %v949
      %v1138 = vpop.f32.mrf.mxu0
      %v1139 = vadd.f32 %v799, %v1138
      %1140 = vmatmul.f32.gmra.mxu0 %v951
      %v1141 = vpop.f32.mrf.mxu0
      %v1142 = vadd.f32 %v802, %v1141
      %1143 = vmatmul.f32.gmra.mxu0 %v953
      %v1144 = vpop.f32.mrf.mxu0
      %v1145 = vadd.f32 %v805, %v1144
      %1146 = vmatmul.f32.gmra.mxu0 %v955
      %v1147 = vpop.f32.mrf.mxu0
      %v1148 = vadd.f32 %v808, %v1147
      %1149 = vmatmul.f32.gmra.mxu0 %v957
      %v1150 = vpop.f32.mrf.mxu0
      %v1151 = vadd.f32 %v811, %v1150
      %1152 = vmatmul.f32.gmra.mxu0 %v959
      %v1153 = vpop.f32.mrf.mxu0
      %v1154 = vadd.f32 %v814, %v1153
      %1155 = vmatmul.f32.gmra.mxu0 %v961
      %v1156 = vpop.f32.mrf.mxu0
      %v1157 = vadd.f32 %v817, %v1156
      %1158 = vmatmul.f32.gmra.mxu0 %v963
      %v1159 = vpop.f32.mrf.mxu0
      %v1160 = vadd.f32 %v820, %v1159
      %1161 = vmatmul.f32.gmra.mxu0 %v965
      %v1162 = vpop.f32.mrf.mxu0
      %v1163 = vadd.f32 %v823, %v1162
      %1164 = vmatmul.f32.gmra.mxu0 %v967
      %v1165 = vpop.f32.mrf.mxu0
      %v1166 = vadd.f32 %v826, %v1165
      %1167 = vmatmul.f32.gmra.mxu0 %v969
      %v1168 = vpop.f32.mrf.mxu0
      %v1169 = vadd.f32 %v829, %v1168
      %1170 = vmatmul.f32.gmra.mxu0 %v971
      %v1171 = vpop.f32.mrf.mxu0
      %v1172 = vadd.f32 %v832, %v1171
      %1173 = vmatmul.f32.gmra.mxu0 %v973
      %v1174 = vpop.f32.mrf.mxu0
      %v1175 = vadd.f32 %v835, %v1174
      %1176 = vmatmul.f32.gmra.mxu0 %v975
      %v1177 = vpop.f32.mrf.mxu0
      %v1178 = vadd.f32 %v838, %v1177
      %1179 = vmatmul.f32.gmra.mxu0 %v977
      %v1180 = vpop.f32.mrf.mxu0
      %v1181 = vadd.f32 %v841, %v1180
      %1182 = vmatmul.f32.gmra.mxu0 %v979
      %v1183 = vpop.f32.mrf.mxu0
      %v1184 = vadd.f32 %v844, %v1183
      %1185 = vmatmul.f32.gmra.mxu0 %v981
      %v1186 = vpop.f32.mrf.mxu0
      %v1187 = vadd.f32 %v847, %v1186
      %1188 = vmatmul.f32.gmra.mxu0 %v983
      %v1189 = vpop.f32.mrf.mxu0
      %v1190 = vadd.f32 %v850, %v1189
      %1191 = vmatmul.f32.gmra.mxu0 %v985
      %v1192 = vpop.f32.mrf.mxu0
      %v1193 = vadd.f32 %v853, %v1192
      %1194 = vmatmul.f32.gmra.mxu0 %v987
      %v1195 = vpop.f32.mrf.mxu0
      %v1196 = vadd.f32 %v856, %v1195
      %1197 = vmatmul.f32.gmra.mxu0 %v989
      %v1198 = vpop.f32.mrf.mxu0
      %v1199 = vadd.f32 %v859, %v1198
      %1200 = vmatmul.f32.gmra.mxu0 %v991
      %v1201 = vpop.f32.mrf.mxu0
      %v1202 = vadd.f32 %v862, %v1201
      %1203 = vmatmul.f32.gmra.mxu0 %v993
      %v1204 = vpop.f32.mrf.mxu0
      %v1205 = vadd.f32 %v865, %v1204
      %1206 = vdwg.mxu0
      %vm1207 = vcmask 1045504
      %v1208 = vrot.slane %v208, 2
      %v1209 = vrot.slane %v209, 2
      %v1210 = vsel %vm1207, %v1208, %v1209
      %v1211 = vrot.slane %v210, 2
      %v1212 = vsel %vm1207, %v1209, %v1211
      %v1213 = vrot.slane %v211, 2
      %v1214 = vsel %vm1207, %v1211, %v1213
      %v1215 = vrot.slane %v212, 2
      %v1216 = vsel %vm1207, %v1213, %v1215
      %v1217 = vrot.slane %v213, 2
      %v1218 = vrot.slane %v214, 2
      %v1219 = vsel %vm1207, %v1217, %v1218
      %v1220 = vrot.slane %v215, 2
      %v1221 = vsel %vm1207, %v1218, %v1220
      %v1222 = vrot.slane %v216, 2
      %v1223 = vsel %vm1207, %v1220, %v1222
      %v1224 = vrot.slane %v217, 2
      %v1225 = vsel %vm1207, %v1222, %v1224
      %v1226 = vrot.slane %v218, 2
      %v1227 = vrot.slane %v219, 2
      %v1228 = vsel %vm1207, %v1226, %v1227
      %v1229 = vrot.slane %v220, 2
      %v1230 = vsel %vm1207, %v1227, %v1229
      %v1231 = vrot.slane %v221, 2
      %v1232 = vsel %vm1207, %v1229, %v1231
      %v1233 = vrot.slane %v222, 2
      %v1234 = vsel %vm1207, %v1231, %v1233
      %v1235 = vrot.slane %v223, 2
      %v1236 = vrot.slane %v224, 2
      %v1237 = vsel %vm1207, %v1235, %v1236
      %v1238 = vrot.slane %v225, 2
      %v1239 = vsel %vm1207, %v1236, %v1238
      %v1240 = vrot.slane %v226, 2
      %v1241 = vsel %vm1207, %v1238, %v1240
      %v1242 = vrot.slane %v227, 2
      %v1243 = vsel %vm1207, %v1240, %v1242
      %v1244 = vrot.slane %v228, 2
      %v1245 = vrot.slane %v229, 2
      %v1246 = vsel %vm1207, %v1244, %v1245
      %v1247 = vrot.slane %v230, 2
      %v1248 = vsel %vm1207, %v1245, %v1247
      %v1249 = vrot.slane %v231, 2
      %v1250 = vsel %vm1207, %v1247, %v1249
      %v1251 = vrot.slane %v232, 2
      %v1252 = vsel %vm1207, %v1249, %v1251
      %v1253 = vrot.slane %v233, 2
      %v1254 = vrot.slane %v234, 2
      %v1255 = vsel %vm1207, %v1253, %v1254
      %v1256 = vrot.slane %v235, 2
      %v1257 = vsel %vm1207, %v1254, %v1256
      %v1258 = vrot.slane %v236, 2
      %v1259 = vsel %vm1207, %v1256, %v1258
      %v1260 = vrot.slane %v237, 2
      %v1261 = vsel %vm1207, %v1258, %v1260
      %v1262 = vrot.slane %v238, 2
      %v1263 = vrot.slane %v239, 2
      %v1264 = vsel %vm1207, %v1262, %v1263
      %v1265 = vrot.slane %v240, 2
      %v1266 = vsel %vm1207, %v1263, %v1265
      %v1267 = vrot.slane %v241, 2
      %v1268 = vsel %vm1207, %v1265, %v1267
      %v1269 = vrot.slane %v242, 2
      %v1270 = vsel %vm1207, %v1267, %v1269
      %v1271 = vrot.slane %v243, 2
      %v1272 = vrot.slane %v244, 2
      %v1273 = vsel %vm1207, %v1271, %v1272
      %v1274 = vrot.slane %v245, 2
      %v1275 = vsel %vm1207, %v1272, %v1274
      %v1276 = vrot.slane %v246, 2
      %v1277 = vsel %vm1207, %v1274, %v1276
      %v1278 = vrot.slane %v247, 2
      %v1279 = vsel %vm1207, %v1276, %v1278
      %v1280 = vrot.slane %v248, 2
      %v1281 = vrot.slane %v249, 2
      %v1282 = vsel %vm1207, %v1280, %v1281
      %v1283 = vrot.slane %v250, 2
      %v1284 = vsel %vm1207, %v1281, %v1283
      %v1285 = vrot.slane %v251, 2
      %v1286 = vsel %vm1207, %v1283, %v1285
      %v1287 = vrot.slane %v252, 2
      %v1288 = vsel %vm1207, %v1285, %v1287
      %v1289 = vrot.slane %v253, 2
      %v1290 = vrot.slane %v254, 2
      %v1291 = vsel %vm1207, %v1289, %v1290
      %v1292 = vrot.slane %v255, 2
      %v1293 = vsel %vm1207, %v1290, %v1292
      %v1294 = vrot.slane %v256, 2
      %v1295 = vsel %vm1207, %v1292, %v1294
      %v1296 = vrot.slane %v257, 2
      %v1297 = vsel %vm1207, %v1294, %v1296
      %v1298 = vrot.slane %v258, 2
      %v1299 = vrot.slane %v259, 2
      %v1300 = vsel %vm1207, %v1298, %v1299
      %v1301 = vrot.slane %v260, 2
      %v1302 = vsel %vm1207, %v1299, %v1301
      %v1303 = vrot.slane %v261, 2
      %v1304 = vsel %vm1207, %v1301, %v1303
      %v1305 = vrot.slane %v262, 2
      %v1306 = vsel %vm1207, %v1303, %v1305
      %v1307 = vrot.slane %v263, 2
      %v1308 = vrot.slane %v264, 2
      %v1309 = vsel %vm1207, %v1307, %v1308
      %v1310 = vrot.slane %v265, 2
      %v1311 = vsel %vm1207, %v1308, %v1310
      %v1312 = vrot.slane %v266, 2
      %v1313 = vsel %vm1207, %v1310, %v1312
      %v1314 = vrot.slane %v267, 2
      %v1315 = vsel %vm1207, %v1312, %v1314
      %v1316 = vrot.slane %v268, 2
      %v1317 = vrot.slane %v269, 2
      %v1318 = vsel %vm1207, %v1316, %v1317
      %v1319 = vrot.slane %v270, 2
      %v1320 = vsel %vm1207, %v1317, %v1319
      %v1321 = vrot.slane %v271, 2
      %v1322 = vsel %vm1207, %v1319, %v1321
      %v1323 = vrot.slane %v272, 2
      %v1324 = vsel %vm1207, %v1321, %v1323
      %v1325 = vrot.slane %v273, 2
      %v1326 = vrot.slane %v274, 2
      %v1327 = vsel %vm1207, %v1325, %v1326
      %v1328 = vrot.slane %v275, 2
      %v1329 = vsel %vm1207, %v1326, %v1328
      %v1330 = vrot.slane %v276, 2
      %v1331 = vsel %vm1207, %v1328, %v1330
      %v1332 = vrot.slane %v277, 2
      %v1333 = vsel %vm1207, %v1330, %v1332
      %v1334 = vrot.slane %v278, 2
      %v1335 = vrot.slane %v279, 2
      %v1336 = vsel %vm1207, %v1334, %v1335
      %v1337 = vrot.slane %v280, 2
      %v1338 = vsel %vm1207, %v1335, %v1337
      %v1339 = vrot.slane %v281, 2
      %v1340 = vsel %vm1207, %v1337, %v1339
      %v1341 = vrot.slane %v282, 2
      %v1342 = vsel %vm1207, %v1339, %v1341
      %v1343 = vrot.slane %v283, 2
      %v1344 = vrot.slane %v284, 2
      %v1345 = vsel %vm1207, %v1343, %v1344
      %v1346 = vrot.slane %v285, 2
      %v1347 = vsel %vm1207, %v1344, %v1346
      %v1348 = vrot.slane %v286, 2
      %v1349 = vsel %vm1207, %v1346, %v1348
      %v1350 = vrot.slane %v287, 2
      %v1351 = vsel %vm1207, %v1348, %v1350
      %v1352 = vld [vmem:[%s1 + $0x8] sm:$0xf]
      %v1353 = vsel %vm525, %v1210, 0
      %v1355 = vsel %vm525, %v1212, 0
      %v1357 = vsel %vm525, %v1214, 0
      %v1359 = vsel %vm525, %v1216, 0
      %v1361 = vsel %vm525, %v1219, 0
      %v1363 = vsel %vm525, %v1221, 0
      %v1365 = vsel %vm525, %v1223, 0
      %v1367 = vsel %vm525, %v1225, 0
      %v1369 = vsel %vm525, %v1228, 0
      %v1371 = vsel %vm525, %v1230, 0
      %v1373 = vsel %vm525, %v1232, 0
      %v1375 = vsel %vm525, %v1234, 0
      %v1377 = vsel %vm525, %v1237, 0
      %v1379 = vsel %vm525, %v1239, 0
      %v1381 = vsel %vm525, %v1241, 0
      %v1383 = vsel %vm525, %v1243, 0
      %v1385 = vsel %vm525, %v1246, 0
      %v1387 = vsel %vm525, %v1248, 0
      %v1389 = vsel %vm525, %v1250, 0
      %v1391 = vsel %vm525, %v1252, 0
      %v1393 = vsel %vm525, %v1255, 0
      %v1395 = vsel %vm525, %v1257, 0
      %v1397 = vsel %vm525, %v1259, 0
      %v1399 = vsel %vm525, %v1261, 0
      %v1401 = vsel %vm525, %v1264, 0
      %v1403 = vsel %vm525, %v1266, 0
      %v1405 = vsel %vm525, %v1268, 0
      %v1407 = vsel %vm525, %v1270, 0
      %v1409 = vsel %vm525, %v1273, 0
      %v1411 = vsel %vm525, %v1275, 0
      %v1413 = vsel %vm525, %v1277, 0
      %v1415 = vsel %vm525, %v1279, 0
      %v1417 = vsel %vm525, %v1282, 0
      %v1419 = vsel %vm525, %v1284, 0
      %v1421 = vsel %vm525, %v1286, 0
      %v1423 = vsel %vm525, %v1288, 0
      %v1425 = vsel %vm525, %v1291, 0
      %v1427 = vsel %vm525, %v1293, 0
      %v1429 = vsel %vm525, %v1295, 0
      %v1431 = vsel %vm525, %v1297, 0
      %v1433 = vsel %vm525, %v1300, 0
      %v1435 = vsel %vm525, %v1302, 0
      %v1437 = vsel %vm525, %v1304, 0
      %v1439 = vsel %vm525, %v1306, 0
      %v1441 = vsel %vm525, %v1309, 0
      %v1443 = vsel %vm525, %v1311, 0
      %v1445 = vsel %vm525, %v1313, 0
      %v1447 = vsel %vm525, %v1315, 0
      %v1449 = vsel %vm525, %v1318, 0
      %v1451 = vsel %vm525, %v1320, 0
      %v1453 = vsel %vm525, %v1322, 0
      %v1455 = vsel %vm525, %v1324, 0
      %v1457 = vsel %vm525, %v1327, 0
      %v1459 = vsel %vm525, %v1329, 0
      %v1461 = vsel %vm525, %v1331, 0
      %v1463 = vsel %vm525, %v1333, 0
      %v1465 = vsel %vm525, %v1336, 0
      %v1467 = vsel %vm525, %v1338, 0
      %v1469 = vsel %vm525, %v1340, 0
      %v1471 = vsel %vm525, %v1342, 0
      %v1473 = vsel %vm525, %v1345, 0
      %v1475 = vsel %vm525, %v1347, 0
      %v1477 = vsel %vm525, %v1349, 0
      %v1479 = vsel %vm525, %v1351, 0
      %v1482 = vsel %vm654, %v1352, 0
      %1484 = vmatpush.msra.mxu0 0.0
      %1485 = vmatpush.msra.mxu0 0.0
      %1486 = vmatpush.msra.mxu0 0.0
      %1487 = vmatpush.msra.mxu0 0.0
      %1488 = vmatpush.msra.mxu0 0.0
      %1489 = vmatpush.msra.mxu0 0.0
      %1490 = vmatpush.msra.mxu0 0.0
      %1491 = vmatpush.msra.mxu0 0.0
      %1492 = vmatpush.msra.mxu0 0.0
      %1493 = vmatpush.msra.mxu0 0.0
      %1494 = vmatpush.msra.mxu0 0.0
      %1495 = vmatpush.msra.mxu0 0.0
      %1496 = vmatpush.msra.mxu0 0.0
      %1497 = vmatpush.msra.mxu0 0.0
      %1498 = vmatpush.msra.mxu0 0.0
      %1499 = vmatpush.msra.mxu0 %v1482
      %1500 = vmatmul.f32.gmra.mxu0 %v1353
      %v1501 = vpop.f32.mrf.mxu0
      %v1502 = vadd.f32 0.0, %v1501
      %1503 = vmatmul.f32.gmra.mxu0 %v1355
      %v1504 = vpop.f32.mrf.mxu0
      %v1505 = vadd.f32 0.0, %v1504
      %1506 = vmatmul.f32.gmra.mxu0 %v1357
      %v1507 = vpop.f32.mrf.mxu0
      %v1508 = vadd.f32 0.0, %v1507
      %1509 = vmatmul.f32.gmra.mxu0 %v1359
      %v1510 = vpop.f32.mrf.mxu0
      %v1511 = vadd.f32 0.0, %v1510
      %1512 = vmatmul.f32.gmra.mxu0 %v1361
      %v1513 = vpop.f32.mrf.mxu0
      %v1514 = vadd.f32 0.0, %v1513
      %1515 = vmatmul.f32.gmra.mxu0 %v1363
      %v1516 = vpop.f32.mrf.mxu0
      %v1517 = vadd.f32 0.0, %v1516
      %1518 = vmatmul.f32.gmra.mxu0 %v1365
      %v1519 = vpop.f32.mrf.mxu0
      %v1520 = vadd.f32 0.0, %v1519
      %1521 = vmatmul.f32.gmra.mxu0 %v1367
      %v1522 = vpop.f32.mrf.mxu0
      %v1523 = vadd.f32 0.0, %v1522
      %1524 = vmatmul.f32.gmra.mxu0 %v1369
      %v1525 = vpop.f32.mrf.mxu0
      %v1526 = vadd.f32 0.0, %v1525
      %1527 = vmatmul.f32.gmra.mxu0 %v1371
      %v1528 = vpop.f32.mrf.mxu0
      %v1529 = vadd.f32 0.0, %v1528
      %1530 = vmatmul.f32.gmra.mxu0 %v1373
      %v1531 = vpop.f32.mrf.mxu0
      %v1532 = vadd.f32 0.0, %v1531
      %1533 = vmatmul.f32.gmra.mxu0 %v1375
      %v1534 = vpop.f32.mrf.mxu0
      %v1535 = vadd.f32 0.0, %v1534
      %1536 = vmatmul.f32.gmra.mxu0 %v1377
      %v1537 = vpop.f32.mrf.mxu0
      %v1538 = vadd.f32 0.0, %v1537
      %1539 = vmatmul.f32.gmra.mxu0 %v1379
      %v1540 = vpop.f32.mrf.mxu0
      %v1541 = vadd.f32 0.0, %v1540
      %1542 = vmatmul.f32.gmra.mxu0 %v1381
      %v1543 = vpop.f32.mrf.mxu0
      %v1544 = vadd.f32 0.0, %v1543
      %1545 = vmatmul.f32.gmra.mxu0 %v1383
      %v1546 = vpop.f32.mrf.mxu0
      %v1547 = vadd.f32 0.0, %v1546
      %1548 = vmatmul.f32.gmra.mxu0 %v1385
      %v1549 = vpop.f32.mrf.mxu0
      %v1550 = vadd.f32 0.0, %v1549
      %1551 = vmatmul.f32.gmra.mxu0 %v1387
      %v1552 = vpop.f32.mrf.mxu0
      %v1553 = vadd.f32 0.0, %v1552
      %1554 = vmatmul.f32.gmra.mxu0 %v1389
      %v1555 = vpop.f32.mrf.mxu0
      %v1556 = vadd.f32 0.0, %v1555
      %1557 = vmatmul.f32.gmra.mxu0 %v1391
      %v1558 = vpop.f32.mrf.mxu0
      %v1559 = vadd.f32 0.0, %v1558
      %1560 = vmatmul.f32.gmra.mxu0 %v1393
      %v1561 = vpop.f32.mrf.mxu0
      %v1562 = vadd.f32 0.0, %v1561
      %1563 = vmatmul.f32.gmra.mxu0 %v1395
      %v1564 = vpop.f32.mrf.mxu0
      %v1565 = vadd.f32 0.0, %v1564
      %1566 = vmatmul.f32.gmra.mxu0 %v1397
      %v1567 = vpop.f32.mrf.mxu0
      %v1568 = vadd.f32 0.0, %v1567
      %1569 = vmatmul.f32.gmra.mxu0 %v1399
      %v1570 = vpop.f32.mrf.mxu0
      %v1571 = vadd.f32 0.0, %v1570
      %1572 = vmatmul.f32.gmra.mxu0 %v1401
      %v1573 = vpop.f32.mrf.mxu0
      %v1574 = vadd.f32 0.0, %v1573
      %1575 = vmatmul.f32.gmra.mxu0 %v1403
      %v1576 = vpop.f32.mrf.mxu0
      %v1577 = vadd.f32 0.0, %v1576
      %1578 = vmatmul.f32.gmra.mxu0 %v1405
      %v1579 = vpop.f32.mrf.mxu0
      %v1580 = vadd.f32 0.0, %v1579
      %1581 = vmatmul.f32.gmra.mxu0 %v1407
      %v1582 = vpop.f32.mrf.mxu0
      %v1583 = vadd.f32 0.0, %v1582
      %1584 = vmatmul.f32.gmra.mxu0 %v1409
      %v1585 = vpop.f32.mrf.mxu0
      %v1586 = vadd.f32 0.0, %v1585
      %1587 = vmatmul.f32.gmra.mxu0 %v1411
      %v1588 = vpop.f32.mrf.mxu0
      %v1589 = vadd.f32 0.0, %v1588
      %1590 = vmatmul.f32.gmra.mxu0 %v1413
      %v1591 = vpop.f32.mrf.mxu0
      %v1592 = vadd.f32 0.0, %v1591
      %1593 = vmatmul.f32.gmra.mxu0 %v1415
      %v1594 = vpop.f32.mrf.mxu0
      %v1595 = vadd.f32 0.0, %v1594
      %1596 = vmatmul.f32.gmra.mxu0 %v1417
      %v1597 = vpop.f32.mrf.mxu0
      %v1598 = vadd.f32 0.0, %v1597
      %1599 = vmatmul.f32.gmra.mxu0 %v1419
      %v1600 = vpop.f32.mrf.mxu0
      %v1601 = vadd.f32 0.0, %v1600
      %1602 = vmatmul.f32.gmra.mxu0 %v1421
      %v1603 = vpop.f32.mrf.mxu0
      %v1604 = vadd.f32 0.0, %v1603
      %1605 = vmatmul.f32.gmra.mxu0 %v1423
      %v1606 = vpop.f32.mrf.mxu0
      %v1607 = vadd.f32 0.0, %v1606
      %1608 = vmatmul.f32.gmra.mxu0 %v1425
      %v1609 = vpop.f32.mrf.mxu0
      %v1610 = vadd.f32 0.0, %v1609
      %1611 = vmatmul.f32.gmra.mxu0 %v1427
      %v1612 = vpop.f32.mrf.mxu0
      %v1613 = vadd.f32 0.0, %v1612
      %1614 = vmatmul.f32.gmra.mxu0 %v1429
      %v1615 = vpop.f32.mrf.mxu0
      %v1616 = vadd.f32 0.0, %v1615
      %1617 = vmatmul.f32.gmra.mxu0 %v1431
      %v1618 = vpop.f32.mrf.mxu0
      %v1619 = vadd.f32 0.0, %v1618
      %1620 = vmatmul.f32.gmra.mxu0 %v1433
      %v1621 = vpop.f32.mrf.mxu0
      %v1622 = vadd.f32 0.0, %v1621
      %1623 = vmatmul.f32.gmra.mxu0 %v1435
      %v1624 = vpop.f32.mrf.mxu0
      %v1625 = vadd.f32 0.0, %v1624
      %1626 = vmatmul.f32.gmra.mxu0 %v1437
      %v1627 = vpop.f32.mrf.mxu0
      %v1628 = vadd.f32 0.0, %v1627
      %1629 = vmatmul.f32.gmra.mxu0 %v1439
      %v1630 = vpop.f32.mrf.mxu0
      %v1631 = vadd.f32 0.0, %v1630
      %1632 = vmatmul.f32.gmra.mxu0 %v1441
      %v1633 = vpop.f32.mrf.mxu0
      %v1634 = vadd.f32 0.0, %v1633
      %1635 = vmatmul.f32.gmra.mxu0 %v1443
      %v1636 = vpop.f32.mrf.mxu0
      %v1637 = vadd.f32 0.0, %v1636
      %1638 = vmatmul.f32.gmra.mxu0 %v1445
      %v1639 = vpop.f32.mrf.mxu0
      %v1640 = vadd.f32 0.0, %v1639
      %1641 = vmatmul.f32.gmra.mxu0 %v1447
      %v1642 = vpop.f32.mrf.mxu0
      %v1643 = vadd.f32 0.0, %v1642
      %1644 = vmatmul.f32.gmra.mxu0 %v1449
      %v1645 = vpop.f32.mrf.mxu0
      %v1646 = vadd.f32 0.0, %v1645
      %1647 = vmatmul.f32.gmra.mxu0 %v1451
      %v1648 = vpop.f32.mrf.mxu0
      %v1649 = vadd.f32 0.0, %v1648
      %1650 = vmatmul.f32.gmra.mxu0 %v1453
      %v1651 = vpop.f32.mrf.mxu0
      %v1652 = vadd.f32 0.0, %v1651
      %1653 = vmatmul.f32.gmra.mxu0 %v1455
      %v1654 = vpop.f32.mrf.mxu0
      %v1655 = vadd.f32 0.0, %v1654
      %1656 = vmatmul.f32.gmra.mxu0 %v1457
      %v1657 = vpop.f32.mrf.mxu0
      %v1658 = vadd.f32 0.0, %v1657
      %1659 = vmatmul.f32.gmra.mxu0 %v1459
      %v1660 = vpop.f32.mrf.mxu0
      %v1661 = vadd.f32 0.0, %v1660
      %1662 = vmatmul.f32.gmra.mxu0 %v1461
      %v1663 = vpop.f32.mrf.mxu0
      %v1664 = vadd.f32 0.0, %v1663
      %1665 = vmatmul.f32.gmra.mxu0 %v1463
      %v1666 = vpop.f32.mrf.mxu0
      %v1667 = vadd.f32 0.0, %v1666
      %1668 = vmatmul.f32.gmra.mxu0 %v1465
      %v1669 = vpop.f32.mrf.mxu0
      %v1670 = vadd.f32 0.0, %v1669
      %1671 = vmatmul.f32.gmra.mxu0 %v1467
      %v1672 = vpop.f32.mrf.mxu0
      %v1673 = vadd.f32 0.0, %v1672
      %1674 = vmatmul.f32.gmra.mxu0 %v1469
      %v1675 = vpop.f32.mrf.mxu0
      %v1676 = vadd.f32 0.0, %v1675
      %1677 = vmatmul.f32.gmra.mxu0 %v1471
      %v1678 = vpop.f32.mrf.mxu0
      %v1679 = vadd.f32 0.0, %v1678
      %1680 = vmatmul.f32.gmra.mxu0 %v1473
      %v1681 = vpop.f32.mrf.mxu0
      %v1682 = vadd.f32 0.0, %v1681
      %1683 = vmatmul.f32.gmra.mxu0 %v1475
      %v1684 = vpop.f32.mrf.mxu0
      %v1685 = vadd.f32 0.0, %v1684
      %1686 = vmatmul.f32.gmra.mxu0 %v1477
      %v1687 = vpop.f32.mrf.mxu0
      %v1688 = vadd.f32 0.0, %v1687
      %1689 = vmatmul.f32.gmra.mxu0 %v1479
      %v1690 = vpop.f32.mrf.mxu0
      %v1691 = vadd.f32 0.0, %v1690
      %1692 = vdwg.mxu0
      %v1693 = vadd.f32 %v1016, %v1502
      %v1694 = vadd.f32 %v1019, %v1505
      %v1695 = vadd.f32 %v1022, %v1508
      %v1696 = vadd.f32 %v1025, %v1511
      %v1697 = vadd.f32 %v1028, %v1514
      %v1698 = vadd.f32 %v1031, %v1517
      %v1699 = vadd.f32 %v1034, %v1520
      %v1700 = vadd.f32 %v1037, %v1523
      %v1701 = vadd.f32 %v1040, %v1526
      %v1702 = vadd.f32 %v1043, %v1529
      %v1703 = vadd.f32 %v1046, %v1532
      %v1704 = vadd.f32 %v1049, %v1535
      %v1705 = vadd.f32 %v1052, %v1538
      %v1706 = vadd.f32 %v1055, %v1541
      %v1707 = vadd.f32 %v1058, %v1544
      %v1708 = vadd.f32 %v1061, %v1547
      %v1709 = vadd.f32 %v1064, %v1550
      %v1710 = vadd.f32 %v1067, %v1553
      %v1711 = vadd.f32 %v1070, %v1556
      %v1712 = vadd.f32 %v1073, %v1559
      %v1713 = vadd.f32 %v1076, %v1562
      %v1714 = vadd.f32 %v1079, %v1565
      %v1715 = vadd.f32 %v1082, %v1568
      %v1716 = vadd.f32 %v1085, %v1571
      %v1717 = vadd.f32 %v1088, %v1574
      %v1718 = vadd.f32 %v1091, %v1577
      %v1719 = vadd.f32 %v1094, %v1580
      %v1720 = vadd.f32 %v1097, %v1583
      %v1721 = vadd.f32 %v1100, %v1586
      %v1722 = vadd.f32 %v1103, %v1589
      %v1723 = vadd.f32 %v1106, %v1592
      %v1724 = vadd.f32 %v1109, %v1595
      %v1725 = vadd.f32 %v1112, %v1598
      %v1726 = vadd.f32 %v1115, %v1601
      %v1727 = vadd.f32 %v1118, %v1604
      %v1728 = vadd.f32 %v1121, %v1607
      %v1729 = vadd.f32 %v1124, %v1610
      %v1730 = vadd.f32 %v1127, %v1613
      %v1731 = vadd.f32 %v1130, %v1616
      %v1732 = vadd.f32 %v1133, %v1619
      %v1733 = vadd.f32 %v1136, %v1622
      %v1734 = vadd.f32 %v1139, %v1625
      %v1735 = vadd.f32 %v1142, %v1628
      %v1736 = vadd.f32 %v1145, %v1631
      %v1737 = vadd.f32 %v1148, %v1634
      %v1738 = vadd.f32 %v1151, %v1637
      %v1739 = vadd.f32 %v1154, %v1640
      %v1740 = vadd.f32 %v1157, %v1643
      %v1741 = vadd.f32 %v1160, %v1646
      %v1742 = vadd.f32 %v1163, %v1649
      %v1743 = vadd.f32 %v1166, %v1652
      %v1744 = vadd.f32 %v1169, %v1655
      %v1745 = vadd.f32 %v1172, %v1658
      %v1746 = vadd.f32 %v1175, %v1661
      %v1747 = vadd.f32 %v1178, %v1664
      %v1748 = vadd.f32 %v1181, %v1667
      %v1749 = vadd.f32 %v1184, %v1670
      %v1750 = vadd.f32 %v1187, %v1673
      %v1751 = vadd.f32 %v1190, %v1676
      %v1752 = vadd.f32 %v1193, %v1679
      %v1753 = vadd.f32 %v1196, %v1682
      %v1754 = vadd.f32 %v1199, %v1685
      %v1755 = vadd.f32 %v1202, %v1688
      %v1756 = vadd.f32 %v1205, %v1691
      %v1757 = vld [vmem:[%s1 + $0xc] sm:$0xf]
      %v1759 = vsel %vm525, %v288, 0
      %v1762 = vsel %vm525, %v289, 0
      %v1765 = vsel %vm525, %v290, 0
      %v1768 = vsel %vm525, %v291, 0
      %v1771 = vsel %vm654, %v1757, 0
      %1773 = vmatpush.msra.mxu0 0.0
      %1774 = vmatpush.msra.mxu0 0.0
      %1775 = vmatpush.msra.mxu0 0.0
      %1776 = vmatpush.msra.mxu0 0.0
      %1777 = vmatpush.msra.mxu0 0.0
      %1778 = vmatpush.msra.mxu0 0.0
      %1779 = vmatpush.msra.mxu0 0.0
      %1780 = vmatpush.msra.mxu0 0.0
      %1781 = vmatpush.msra.mxu0 0.0
      %1782 = vmatpush.msra.mxu0 0.0
      %1783 = vmatpush.msra.mxu0 0.0
      %1784 = vmatpush.msra.mxu0 0.0
      %1785 = vmatpush.msra.mxu0 0.0
      %1786 = vmatpush.msra.mxu0 0.0
      %1787 = vmatpush.msra.mxu0 0.0
      %1788 = vmatpush.msra.mxu0 %v1771
      %1789 = vmatmul.f32.gmra.mxu0 %v875
      %v1790 = vpop.f32.mrf.mxu0
      %v1791 = vadd.f32 0.0, %v1790
      %1792 = vmatmul.f32.gmra.mxu0 %v877
      %v1793 = vpop.f32.mrf.mxu0
      %v1794 = vadd.f32 0.0, %v1793
      %1795 = vmatmul.f32.gmra.mxu0 %v879
      %v1796 = vpop.f32.mrf.mxu0
      %v1797 = vadd.f32 0.0, %v1796
      %1798 = vmatmul.f32.gmra.mxu0 %v881
      %v1799 = vpop.f32.mrf.mxu0
      %v1800 = vadd.f32 0.0, %v1799
      %1801 = vmatmul.f32.gmra.mxu0 %v883
      %v1802 = vpop.f32.mrf.mxu0
      %v1803 = vadd.f32 0.0, %v1802
      %1804 = vmatmul.f32.gmra.mxu0 %v885
      %v1805 = vpop.f32.mrf.mxu0
      %v1806 = vadd.f32 0.0, %v1805
      %1807 = vmatmul.f32.gmra.mxu0 %v887
      %v1808 = vpop.f32.mrf.mxu0
      %v1809 = vadd.f32 0.0, %v1808
      %1810 = vmatmul.f32.gmra.mxu0 %v889
      %v1811 = vpop.f32.mrf.mxu0
      %v1812 = vadd.f32 0.0, %v1811
      %1813 = vmatmul.f32.gmra.mxu0 %v891
      %v1814 = vpop.f32.mrf.mxu0
      %v1815 = vadd.f32 0.0, %v1814
      %1816 = vmatmul.f32.gmra.mxu0 %v893
      %v1817 = vpop.f32.mrf.mxu0
      %v1818 = vadd.f32 0.0, %v1817
      %1819 = vmatmul.f32.gmra.mxu0 %v895
      %v1820 = vpop.f32.mrf.mxu0
      %v1821 = vadd.f32 0.0, %v1820
      %1822 = vmatmul.f32.gmra.mxu0 %v897
      %v1823 = vpop.f32.mrf.mxu0
      %v1824 = vadd.f32 0.0, %v1823
      %1825 = vmatmul.f32.gmra.mxu0 %v899
      %v1826 = vpop.f32.mrf.mxu0
      %v1827 = vadd.f32 0.0, %v1826
      %1828 = vmatmul.f32.gmra.mxu0 %v901
      %v1829 = vpop.f32.mrf.mxu0
      %v1830 = vadd.f32 0.0, %v1829
      %1831 = vmatmul.f32.gmra.mxu0 %v903
      %v1832 = vpop.f32.mrf.mxu0
      %v1833 = vadd.f32 0.0, %v1832
      %1834 = vmatmul.f32.gmra.mxu0 %v905
      %v1835 = vpop.f32.mrf.mxu0
      %v1836 = vadd.f32 0.0, %v1835
      %1837 = vmatmul.f32.gmra.mxu0 %v907
      %v1838 = vpop.f32.mrf.mxu0
      %v1839 = vadd.f32 0.0, %v1838
      %1840 = vmatmul.f32.gmra.mxu0 %v909
      %v1841 = vpop.f32.mrf.mxu0
      %v1842 = vadd.f32 0.0, %v1841
      %1843 = vmatmul.f32.gmra.mxu0 %v911
      %v1844 = vpop.f32.mrf.mxu0
      %v1845 = vadd.f32 0.0, %v1844
      %1846 = vmatmul.f32.gmra.mxu0 %v913
      %v1847 = vpop.f32.mrf.mxu0
      %v1848 = vadd.f32 0.0, %v1847
      %1849 = vmatmul.f32.gmra.mxu0 %v915
      %v1850 = vpop.f32.mrf.mxu0
      %v1851 = vadd.f32 0.0, %v1850
      %1852 = vmatmul.f32.gmra.mxu0 %v917
      %v1853 = vpop.f32.mrf.mxu0
      %v1854 = vadd.f32 0.0, %v1853
      %1855 = vmatmul.f32.gmra.mxu0 %v919
      %v1856 = vpop.f32.mrf.mxu0
      %v1857 = vadd.f32 0.0, %v1856
      %1858 = vmatmul.f32.gmra.mxu0 %v921
      %v1859 = vpop.f32.mrf.mxu0
      %v1860 = vadd.f32 0.0, %v1859
      %1861 = vmatmul.f32.gmra.mxu0 %v923
      %v1862 = vpop.f32.mrf.mxu0
      %v1863 = vadd.f32 0.0, %v1862
      %1864 = vmatmul.f32.gmra.mxu0 %v925
      %v1865 = vpop.f32.mrf.mxu0
      %v1866 = vadd.f32 0.0, %v1865
      %1867 = vmatmul.f32.gmra.mxu0 %v927
      %v1868 = vpop.f32.mrf.mxu0
      %v1869 = vadd.f32 0.0, %v1868
      %1870 = vmatmul.f32.gmra.mxu0 %v929
      %v1871 = vpop.f32.mrf.mxu0
      %v1872 = vadd.f32 0.0, %v1871
      %1873 = vmatmul.f32.gmra.mxu0 %v931
      %v1874 = vpop.f32.mrf.mxu0
      %v1875 = vadd.f32 0.0, %v1874
      %1876 = vmatmul.f32.gmra.mxu0 %v933
      %v1877 = vpop.f32.mrf.mxu0
      %v1878 = vadd.f32 0.0, %v1877
      %1879 = vmatmul.f32.gmra.mxu0 %v935
      %v1880 = vpop.f32.mrf.mxu0
      %v1881 = vadd.f32 0.0, %v1880
      %1882 = vmatmul.f32.gmra.mxu0 %v937
      %v1883 = vpop.f32.mrf.mxu0
      %v1884 = vadd.f32 0.0, %v1883
      %1885 = vmatmul.f32.gmra.mxu0 %v939
      %v1886 = vpop.f32.mrf.mxu0
      %v1887 = vadd.f32 0.0, %v1886
      %1888 = vmatmul.f32.gmra.mxu0 %v941
      %v1889 = vpop.f32.mrf.mxu0
      %v1890 = vadd.f32 0.0, %v1889
      %1891 = vmatmul.f32.gmra.mxu0 %v943
      %v1892 = vpop.f32.mrf.mxu0
      %v1893 = vadd.f32 0.0, %v1892
      %1894 = vmatmul.f32.gmra.mxu0 %v945
      %v1895 = vpop.f32.mrf.mxu0
      %v1896 = vadd.f32 0.0, %v1895
      %1897 = vmatmul.f32.gmra.mxu0 %v947
      %v1898 = vpop.f32.mrf.mxu0
      %v1899 = vadd.f32 0.0, %v1898
      %1900 = vmatmul.f32.gmra.mxu0 %v949
      %v1901 = vpop.f32.mrf.mxu0
      %v1902 = vadd.f32 0.0, %v1901
      %1903 = vmatmul.f32.gmra.mxu0 %v951
      %v1904 = vpop.f32.mrf.mxu0
      %v1905 = vadd.f32 0.0, %v1904
      %1906 = vmatmul.f32.gmra.mxu0 %v953
      %v1907 = vpop.f32.mrf.mxu0
      %v1908 = vadd.f32 0.0, %v1907
      %1909 = vmatmul.f32.gmra.mxu0 %v955
      %v1910 = vpop.f32.mrf.mxu0
      %v1911 = vadd.f32 0.0, %v1910
      %1912 = vmatmul.f32.gmra.mxu0 %v957
      %v1913 = vpop.f32.mrf.mxu0
      %v1914 = vadd.f32 0.0, %v1913
      %1915 = vmatmul.f32.gmra.mxu0 %v959
      %v1916 = vpop.f32.mrf.mxu0
      %v1917 = vadd.f32 0.0, %v1916
      %1918 = vmatmul.f32.gmra.mxu0 %v961
      %v1919 = vpop.f32.mrf.mxu0
      %v1920 = vadd.f32 0.0, %v1919
      %1921 = vmatmul.f32.gmra.mxu0 %v963
      %v1922 = vpop.f32.mrf.mxu0
      %v1923 = vadd.f32 0.0, %v1922
      %1924 = vmatmul.f32.gmra.mxu0 %v965
      %v1925 = vpop.f32.mrf.mxu0
      %v1926 = vadd.f32 0.0, %v1925
      %1927 = vmatmul.f32.gmra.mxu0 %v967
      %v1928 = vpop.f32.mrf.mxu0
      %v1929 = vadd.f32 0.0, %v1928
      %1930 = vmatmul.f32.gmra.mxu0 %v969
      %v1931 = vpop.f32.mrf.mxu0
      %v1932 = vadd.f32 0.0, %v1931
      %1933 = vmatmul.f32.gmra.mxu0 %v971
      %v1934 = vpop.f32.mrf.mxu0
      %v1935 = vadd.f32 0.0, %v1934
      %1936 = vmatmul.f32.gmra.mxu0 %v973
      %v1937 = vpop.f32.mrf.mxu0
      %v1938 = vadd.f32 0.0, %v1937
      %1939 = vmatmul.f32.gmra.mxu0 %v975
      %v1940 = vpop.f32.mrf.mxu0
      %v1941 = vadd.f32 0.0, %v1940
      %1942 = vmatmul.f32.gmra.mxu0 %v977
      %v1943 = vpop.f32.mrf.mxu0
      %v1944 = vadd.f32 0.0, %v1943
      %1945 = vmatmul.f32.gmra.mxu0 %v979
      %v1946 = vpop.f32.mrf.mxu0
      %v1947 = vadd.f32 0.0, %v1946
      %1948 = vmatmul.f32.gmra.mxu0 %v981
      %v1949 = vpop.f32.mrf.mxu0
      %v1950 = vadd.f32 0.0, %v1949
      %1951 = vmatmul.f32.gmra.mxu0 %v983
      %v1952 = vpop.f32.mrf.mxu0
      %v1953 = vadd.f32 0.0, %v1952
      %1954 = vmatmul.f32.gmra.mxu0 %v985
      %v1955 = vpop.f32.mrf.mxu0
      %v1956 = vadd.f32 0.0, %v1955
      %1957 = vmatmul.f32.gmra.mxu0 %v987
      %v1958 = vpop.f32.mrf.mxu0
      %v1959 = vadd.f32 0.0, %v1958
      %1960 = vmatmul.f32.gmra.mxu0 %v989
      %v1961 = vpop.f32.mrf.mxu0
      %v1962 = vadd.f32 0.0, %v1961
      %1963 = vmatmul.f32.gmra.mxu0 %v991
      %v1964 = vpop.f32.mrf.mxu0
      %v1965 = vadd.f32 0.0, %v1964
      %1966 = vmatmul.f32.gmra.mxu0 %v993
      %v1967 = vpop.f32.mrf.mxu0
      %v1968 = vadd.f32 0.0, %v1967
      %1969 = vmatmul.f32.gmra.mxu0 %v1759
      %v1970 = vpop.f32.mrf.mxu0
      %v1971 = vadd.f32 0.0, %v1970
      %1972 = vmatmul.f32.gmra.mxu0 %v1762
      %v1973 = vpop.f32.mrf.mxu0
      %v1974 = vadd.f32 0.0, %v1973
      %1975 = vmatmul.f32.gmra.mxu0 %v1765
      %v1976 = vpop.f32.mrf.mxu0
      %v1977 = vadd.f32 0.0, %v1976
      %1978 = vmatmul.f32.gmra.mxu0 %v1768
      %v1979 = vpop.f32.mrf.mxu0
      %v1980 = vadd.f32 0.0, %v1979
      %1981 = vdwg.mxu0
      %v1982 = vadd.f32 %v1693, %v1791
      %v1983 = vadd.f32 %v1694, %v1794
      %v1984 = vadd.f32 %v1695, %v1797
      %v1985 = vadd.f32 %v1696, %v1800
      %v1986 = vadd.f32 %v1697, %v1803
      %v1987 = vadd.f32 %v1698, %v1806
      %v1988 = vadd.f32 %v1699, %v1809
      %v1989 = vadd.f32 %v1700, %v1812
      %v1990 = vadd.f32 %v1701, %v1815
      %v1991 = vadd.f32 %v1702, %v1818
      %v1992 = vadd.f32 %v1703, %v1821
      %v1993 = vadd.f32 %v1704, %v1824
      %v1994 = vadd.f32 %v1705, %v1827
      %v1995 = vadd.f32 %v1706, %v1830
      %v1996 = vadd.f32 %v1707, %v1833
      %v1997 = vadd.f32 %v1708, %v1836
      %v1998 = vadd.f32 %v1709, %v1839
      %v1999 = vadd.f32 %v1710, %v1842
      %v2000 = vadd.f32 %v1711, %v1845
      %v2001 = vadd.f32 %v1712, %v1848
      %v2002 = vadd.f32 %v1713, %v1851
      %v2003 = vadd.f32 %v1714, %v1854
      %v2004 = vadd.f32 %v1715, %v1857
      %v2005 = vadd.f32 %v1716, %v1860
      %v2006 = vadd.f32 %v1717, %v1863
      %v2007 = vadd.f32 %v1718, %v1866
      %v2008 = vadd.f32 %v1719, %v1869
      %v2009 = vadd.f32 %v1720, %v1872
      %v2010 = vadd.f32 %v1721, %v1875
      %v2011 = vadd.f32 %v1722, %v1878
      %v2012 = vadd.f32 %v1723, %v1881
      %v2013 = vadd.f32 %v1724, %v1884
      %v2014 = vadd.f32 %v1725, %v1887
      %v2015 = vadd.f32 %v1726, %v1890
      %v2016 = vadd.f32 %v1727, %v1893
      %v2017 = vadd.f32 %v1728, %v1896
      %v2018 = vadd.f32 %v1729, %v1899
      %v2019 = vadd.f32 %v1730, %v1902
      %v2020 = vadd.f32 %v1731, %v1905
      %v2021 = vadd.f32 %v1732, %v1908
      %v2022 = vadd.f32 %v1733, %v1911
      %v2023 = vadd.f32 %v1734, %v1914
      %v2024 = vadd.f32 %v1735, %v1917
      %v2025 = vadd.f32 %v1736, %v1920
      %v2026 = vadd.f32 %v1737, %v1923
      %v2027 = vadd.f32 %v1738, %v1926
      %v2028 = vadd.f32 %v1739, %v1929
      %v2029 = vadd.f32 %v1740, %v1932
      %v2030 = vadd.f32 %v1741, %v1935
      %v2031 = vadd.f32 %v1742, %v1938
      %v2032 = vadd.f32 %v1743, %v1941
      %v2033 = vadd.f32 %v1744, %v1944
      %v2034 = vadd.f32 %v1745, %v1947
      %v2035 = vadd.f32 %v1746, %v1950
      %v2036 = vadd.f32 %v1747, %v1953
      %v2037 = vadd.f32 %v1748, %v1956
      %v2038 = vadd.f32 %v1749, %v1959
      %v2039 = vadd.f32 %v1750, %v1962
      %v2040 = vadd.f32 %v1751, %v1965
      %v2041 = vadd.f32 %v1752, %v1968
      %v2042 = vadd.f32 %v1753, %v1971
      %v2043 = vadd.f32 %v1754, %v1974
      %v2044 = vadd.f32 %v1755, %v1977
      %v2045 = vadd.f32 %v1756, %v1980
      %v2047 = vrot.slane %v288, 1
      %v2048 = vrot.slane %v289, 1
      %v2049 = vsel %vm379, %v2047, %v2048
      %v2050 = vrot.slane %v290, 1
      %v2051 = vsel %vm379, %v2048, %v2050
      %v2052 = vrot.slane %v291, 1
      %v2053 = vsel %vm379, %v2050, %v2052
      %v2054 = vrot.slane %v292, 1
      %v2055 = vsel %vm379, %v2052, %v2054
      %v2056 = vld [vmem:[%s1 + $0x10] sm:$0xf]
      %v2057 = vsel %vm525, %v2049, 0
      %v2059 = vsel %vm525, %v2051, 0
      %v2061 = vsel %vm525, %v2053, 0
      %v2063 = vsel %vm525, %v2055, 0
      %v2066 = vsel %vm654, %v2056, 0
      %2068 = vmatpush.msra.mxu0 0.0
      %2069 = vmatpush.msra.mxu0 0.0
      %2070 = vmatpush.msra.mxu0 0.0
      %2071 = vmatpush.msra.mxu0 0.0
      %2072 = vmatpush.msra.mxu0 0.0
      %2073 = vmatpush.msra.mxu0 0.0
      %2074 = vmatpush.msra.mxu0 0.0
      %2075 = vmatpush.msra.mxu0 0.0
      %2076 = vmatpush.msra.mxu0 0.0
      %2077 = vmatpush.msra.mxu0 0.0
      %2078 = vmatpush.msra.mxu0 0.0
      %2079 = vmatpush.msra.mxu0 0.0
      %2080 = vmatpush.msra.mxu0 0.0
      %2081 = vmatpush.msra.mxu0 0.0
      %2082 = vmatpush.msra.mxu0 0.0
      %2083 = vmatpush.msra.mxu0 %v2066
      %2084 = vmatmul.f32.gmra.mxu0 %v534
      %v2085 = vpop.f32.mrf.mxu0
      %v2086 = vadd.f32 0.0, %v2085
      %2087 = vmatmul.f32.gmra.mxu0 %v536
      %v2088 = vpop.f32.mrf.mxu0
      %v2089 = vadd.f32 0.0, %v2088
      %2090 = vmatmul.f32.gmra.mxu0 %v538
      %v2091 = vpop.f32.mrf.mxu0
      %v2092 = vadd.f32 0.0, %v2091
      %2093 = vmatmul.f32.gmra.mxu0 %v540
      %v2094 = vpop.f32.mrf.mxu0
      %v2095 = vadd.f32 0.0, %v2094
      %2096 = vmatmul.f32.gmra.mxu0 %v542
      %v2097 = vpop.f32.mrf.mxu0
      %v2098 = vadd.f32 0.0, %v2097
      %2099 = vmatmul.f32.gmra.mxu0 %v544
      %v2100 = vpop.f32.mrf.mxu0
      %v2101 = vadd.f32 0.0, %v2100
      %2102 = vmatmul.f32.gmra.mxu0 %v546
      %v2103 = vpop.f32.mrf.mxu0
      %v2104 = vadd.f32 0.0, %v2103
      %2105 = vmatmul.f32.gmra.mxu0 %v548
      %v2106 = vpop.f32.mrf.mxu0
      %v2107 = vadd.f32 0.0, %v2106
      %2108 = vmatmul.f32.gmra.mxu0 %v550
      %v2109 = vpop.f32.mrf.mxu0
      %v2110 = vadd.f32 0.0, %v2109
      %2111 = vmatmul.f32.gmra.mxu0 %v552
      %v2112 = vpop.f32.mrf.mxu0
      %v2113 = vadd.f32 0.0, %v2112
      %2114 = vmatmul.f32.gmra.mxu0 %v554
      %v2115 = vpop.f32.mrf.mxu0
      %v2116 = vadd.f32 0.0, %v2115
      %2117 = vmatmul.f32.gmra.mxu0 %v556
      %v2118 = vpop.f32.mrf.mxu0
      %v2119 = vadd.f32 0.0, %v2118
      %2120 = vmatmul.f32.gmra.mxu0 %v558
      %v2121 = vpop.f32.mrf.mxu0
      %v2122 = vadd.f32 0.0, %v2121
      %2123 = vmatmul.f32.gmra.mxu0 %v560
      %v2124 = vpop.f32.mrf.mxu0
      %v2125 = vadd.f32 0.0, %v2124
      %2126 = vmatmul.f32.gmra.mxu0 %v562
      %v2127 = vpop.f32.mrf.mxu0
      %v2128 = vadd.f32 0.0, %v2127
      %2129 = vmatmul.f32.gmra.mxu0 %v564
      %v2130 = vpop.f32.mrf.mxu0
      %v2131 = vadd.f32 0.0, %v2130
      %2132 = vmatmul.f32.gmra.mxu0 %v566
      %v2133 = vpop.f32.mrf.mxu0
      %v2134 = vadd.f32 0.0, %v2133
      %2135 = vmatmul.f32.gmra.mxu0 %v568
      %v2136 = vpop.f32.mrf.mxu0
      %v2137 = vadd.f32 0.0, %v2136
      %2138 = vmatmul.f32.gmra.mxu0 %v570
      %v2139 = vpop.f32.mrf.mxu0
      %v2140 = vadd.f32 0.0, %v2139
      %2141 = vmatmul.f32.gmra.mxu0 %v572
      %v2142 = vpop.f32.mrf.mxu0
      %v2143 = vadd.f32 0.0, %v2142
      %2144 = vmatmul.f32.gmra.mxu0 %v574
      %v2145 = vpop.f32.mrf.mxu0
      %v2146 = vadd.f32 0.0, %v2145
      %2147 = vmatmul.f32.gmra.mxu0 %v576
      %v2148 = vpop.f32.mrf.mxu0
      %v2149 = vadd.f32 0.0, %v2148
      %2150 = vmatmul.f32.gmra.mxu0 %v578
      %v2151 = vpop.f32.mrf.mxu0
      %v2152 = vadd.f32 0.0, %v2151
      %2153 = vmatmul.f32.gmra.mxu0 %v580
      %v2154 = vpop.f32.mrf.mxu0
      %v2155 = vadd.f32 0.0, %v2154
      %2156 = vmatmul.f32.gmra.mxu0 %v582
      %v2157 = vpop.f32.mrf.mxu0
      %v2158 = vadd.f32 0.0, %v2157
      %2159 = vmatmul.f32.gmra.mxu0 %v584
      %v2160 = vpop.f32.mrf.mxu0
      %v2161 = vadd.f32 0.0, %v2160
      %2162 = vmatmul.f32.gmra.mxu0 %v586
      %v2163 = vpop.f32.mrf.mxu0
      %v2164 = vadd.f32 0.0, %v2163
      %2165 = vmatmul.f32.gmra.mxu0 %v588
      %v2166 = vpop.f32.mrf.mxu0
      %v2167 = vadd.f32 0.0, %v2166
      %2168 = vmatmul.f32.gmra.mxu0 %v590
      %v2169 = vpop.f32.mrf.mxu0
      %v2170 = vadd.f32 0.0, %v2169
      %2171 = vmatmul.f32.gmra.mxu0 %v592
      %v2172 = vpop.f32.mrf.mxu0
      %v2173 = vadd.f32 0.0, %v2172
      %2174 = vmatmul.f32.gmra.mxu0 %v594
      %v2175 = vpop.f32.mrf.mxu0
      %v2176 = vadd.f32 0.0, %v2175
      %2177 = vmatmul.f32.gmra.mxu0 %v596
      %v2178 = vpop.f32.mrf.mxu0
      %v2179 = vadd.f32 0.0, %v2178
      %2180 = vmatmul.f32.gmra.mxu0 %v598
      %v2181 = vpop.f32.mrf.mxu0
      %v2182 = vadd.f32 0.0, %v2181
      %2183 = vmatmul.f32.gmra.mxu0 %v600
      %v2184 = vpop.f32.mrf.mxu0
      %v2185 = vadd.f32 0.0, %v2184
      %2186 = vmatmul.f32.gmra.mxu0 %v602
      %v2187 = vpop.f32.mrf.mxu0
      %v2188 = vadd.f32 0.0, %v2187
      %2189 = vmatmul.f32.gmra.mxu0 %v604
      %v2190 = vpop.f32.mrf.mxu0
      %v2191 = vadd.f32 0.0, %v2190
      %2192 = vmatmul.f32.gmra.mxu0 %v606
      %v2193 = vpop.f32.mrf.mxu0
      %v2194 = vadd.f32 0.0, %v2193
      %2195 = vmatmul.f32.gmra.mxu0 %v608
      %v2196 = vpop.f32.mrf.mxu0
      %v2197 = vadd.f32 0.0, %v2196
      %2198 = vmatmul.f32.gmra.mxu0 %v610
      %v2199 = vpop.f32.mrf.mxu0
      %v2200 = vadd.f32 0.0, %v2199
      %2201 = vmatmul.f32.gmra.mxu0 %v612
      %v2202 = vpop.f32.mrf.mxu0
      %v2203 = vadd.f32 0.0, %v2202
      %2204 = vmatmul.f32.gmra.mxu0 %v614
      %v2205 = vpop.f32.mrf.mxu0
      %v2206 = vadd.f32 0.0, %v2205
      %2207 = vmatmul.f32.gmra.mxu0 %v616
      %v2208 = vpop.f32.mrf.mxu0
      %v2209 = vadd.f32 0.0, %v2208
      %2210 = vmatmul.f32.gmra.mxu0 %v618
      %v2211 = vpop.f32.mrf.mxu0
      %v2212 = vadd.f32 0.0, %v2211
      %2213 = vmatmul.f32.gmra.mxu0 %v620
      %v2214 = vpop.f32.mrf.mxu0
      %v2215 = vadd.f32 0.0, %v2214
      %2216 = vmatmul.f32.gmra.mxu0 %v622
      %v2217 = vpop.f32.mrf.mxu0
      %v2218 = vadd.f32 0.0, %v2217
      %2219 = vmatmul.f32.gmra.mxu0 %v624
      %v2220 = vpop.f32.mrf.mxu0
      %v2221 = vadd.f32 0.0, %v2220
      %2222 = vmatmul.f32.gmra.mxu0 %v626
      %v2223 = vpop.f32.mrf.mxu0
      %v2224 = vadd.f32 0.0, %v2223
      %2225 = vmatmul.f32.gmra.mxu0 %v628
      %v2226 = vpop.f32.mrf.mxu0
      %v2227 = vadd.f32 0.0, %v2226
      %2228 = vmatmul.f32.gmra.mxu0 %v630
      %v2229 = vpop.f32.mrf.mxu0
      %v2230 = vadd.f32 0.0, %v2229
      %2231 = vmatmul.f32.gmra.mxu0 %v632
      %v2232 = vpop.f32.mrf.mxu0
      %v2233 = vadd.f32 0.0, %v2232
      %2234 = vmatmul.f32.gmra.mxu0 %v634
      %v2235 = vpop.f32.mrf.mxu0
      %v2236 = vadd.f32 0.0, %v2235
      %2237 = vmatmul.f32.gmra.mxu0 %v636
      %v2238 = vpop.f32.mrf.mxu0
      %v2239 = vadd.f32 0.0, %v2238
      %2240 = vmatmul.f32.gmra.mxu0 %v638
      %v2241 = vpop.f32.mrf.mxu0
      %v2242 = vadd.f32 0.0, %v2241
      %2243 = vmatmul.f32.gmra.mxu0 %v640
      %v2244 = vpop.f32.mrf.mxu0
      %v2245 = vadd.f32 0.0, %v2244
      %2246 = vmatmul.f32.gmra.mxu0 %v642
      %v2247 = vpop.f32.mrf.mxu0
      %v2248 = vadd.f32 0.0, %v2247
      %2249 = vmatmul.f32.gmra.mxu0 %v644
      %v2250 = vpop.f32.mrf.mxu0
      %v2251 = vadd.f32 0.0, %v2250
      %2252 = vmatmul.f32.gmra.mxu0 %v646
      %v2253 = vpop.f32.mrf.mxu0
      %v2254 = vadd.f32 0.0, %v2253
      %2255 = vmatmul.f32.gmra.mxu0 %v648
      %v2256 = vpop.f32.mrf.mxu0
      %v2257 = vadd.f32 0.0, %v2256
      %2258 = vmatmul.f32.gmra.mxu0 %v650
      %v2259 = vpop.f32.mrf.mxu0
      %v2260 = vadd.f32 0.0, %v2259
      %2261 = vmatmul.f32.gmra.mxu0 %v652
      %v2262 = vpop.f32.mrf.mxu0
      %v2263 = vadd.f32 0.0, %v2262
      %2264 = vmatmul.f32.gmra.mxu0 %v2057
      %v2265 = vpop.f32.mrf.mxu0
      %v2266 = vadd.f32 0.0, %v2265
      %2267 = vmatmul.f32.gmra.mxu0 %v2059
      %v2268 = vpop.f32.mrf.mxu0
      %v2269 = vadd.f32 0.0, %v2268
      %2270 = vmatmul.f32.gmra.mxu0 %v2061
      %v2271 = vpop.f32.mrf.mxu0
      %v2272 = vadd.f32 0.0, %v2271
      %2273 = vmatmul.f32.gmra.mxu0 %v2063
      %v2274 = vpop.f32.mrf.mxu0
      %v2275 = vadd.f32 0.0, %v2274
      %2276 = vdwg.mxu0
      %v2277 = vadd.f32 %v1982, %v2086
      %v2278 = vadd.f32 %v1983, %v2089
      %v2279 = vadd.f32 %v1984, %v2092
      %v2280 = vadd.f32 %v1985, %v2095
      %v2281 = vadd.f32 %v1986, %v2098
      %v2282 = vadd.f32 %v1987, %v2101
      %v2283 = vadd.f32 %v1988, %v2104
      %v2284 = vadd.f32 %v1989, %v2107
      %v2285 = vadd.f32 %v1990, %v2110
      %v2286 = vadd.f32 %v1991, %v2113
      %v2287 = vadd.f32 %v1992, %v2116
      %v2288 = vadd.f32 %v1993, %v2119
      %v2289 = vadd.f32 %v1994, %v2122
      %v2290 = vadd.f32 %v1995, %v2125
      %v2291 = vadd.f32 %v1996, %v2128
      %v2292 = vadd.f32 %v1997, %v2131
      %v2293 = vadd.f32 %v1998, %v2134
      %v2294 = vadd.f32 %v1999, %v2137
      %v2295 = vadd.f32 %v2000, %v2140
      %v2296 = vadd.f32 %v2001, %v2143
      %v2297 = vadd.f32 %v2002, %v2146
      %v2298 = vadd.f32 %v2003, %v2149
      %v2299 = vadd.f32 %v2004, %v2152
      %v2300 = vadd.f32 %v2005, %v2155
      %v2301 = vadd.f32 %v2006, %v2158
      %v2302 = vadd.f32 %v2007, %v2161
      %v2303 = vadd.f32 %v2008, %v2164
      %v2304 = vadd.f32 %v2009, %v2167
      %v2305 = vadd.f32 %v2010, %v2170
      %v2306 = vadd.f32 %v2011, %v2173
      %v2307 = vadd.f32 %v2012, %v2176
      %v2308 = vadd.f32 %v2013, %v2179
      %v2309 = vadd.f32 %v2014, %v2182
      %v2310 = vadd.f32 %v2015, %v2185
      %v2311 = vadd.f32 %v2016, %v2188
      %v2312 = vadd.f32 %v2017, %v2191
      %v2313 = vadd.f32 %v2018, %v2194
      %v2314 = vadd.f32 %v2019, %v2197
      %v2315 = vadd.f32 %v2020, %v2200
      %v2316 = vadd.f32 %v2021, %v2203
      %v2317 = vadd.f32 %v2022, %v2206
      %v2318 = vadd.f32 %v2023, %v2209
      %v2319 = vadd.f32 %v2024, %v2212
      %v2320 = vadd.f32 %v2025, %v2215
      %v2321 = vadd.f32 %v2026, %v2218
      %v2322 = vadd.f32 %v2027, %v2221
      %v2323 = vadd.f32 %v2028, %v2224
      %v2324 = vadd.f32 %v2029, %v2227
      %v2325 = vadd.f32 %v2030, %v2230
      %v2326 = vadd.f32 %v2031, %v2233
      %v2327 = vadd.f32 %v2032, %v2236
      %v2328 = vadd.f32 %v2033, %v2239
      %v2329 = vadd.f32 %v2034, %v2242
      %v2330 = vadd.f32 %v2035, %v2245
      %v2331 = vadd.f32 %v2036, %v2248
      %v2332 = vadd.f32 %v2037, %v2251
      %v2333 = vadd.f32 %v2038, %v2254
      %v2334 = vadd.f32 %v2039, %v2257
      %v2335 = vadd.f32 %v2040, %v2260
      %v2336 = vadd.f32 %v2041, %v2263
      %v2337 = vadd.f32 %v2042, %v2266
      %v2338 = vadd.f32 %v2043, %v2269
      %v2339 = vadd.f32 %v2044, %v2272
      %v2340 = vadd.f32 %v2045, %v2275
      %v2341 = vrot.slane %v288, 2
      %v2342 = vrot.slane %v289, 2
      %v2343 = vsel %vm1207, %v2341, %v2342
      %v2344 = vrot.slane %v290, 2
      %v2345 = vsel %vm1207, %v2342, %v2344
      %v2346 = vrot.slane %v291, 2
      %v2347 = vsel %vm1207, %v2344, %v2346
      %v2348 = vrot.slane %v292, 2
      %v2349 = vsel %vm1207, %v2346, %v2348
      %v2350 = vld [vmem:[%s1 + $0x14] sm:$0xf]
      %v2351 = vsel %vm525, %v2343, 0
      %v2353 = vsel %vm525, %v2345, 0
      %v2355 = vsel %vm525, %v2347, 0
      %v2357 = vsel %vm525, %v2349, 0
      %v2360 = vsel %vm654, %v2350, 0
      %2362 = vmatpush.msra.mxu0 0.0
      %2363 = vmatpush.msra.mxu0 0.0
      %2364 = vmatpush.msra.mxu0 0.0
      %2365 = vmatpush.msra.mxu0 0.0
      %2366 = vmatpush.msra.mxu0 0.0
      %2367 = vmatpush.msra.mxu0 0.0
      %2368 = vmatpush.msra.mxu0 0.0
      %2369 = vmatpush.msra.mxu0 0.0
      %2370 = vmatpush.msra.mxu0 0.0
      %2371 = vmatpush.msra.mxu0 0.0
      %2372 = vmatpush.msra.mxu0 0.0
      %2373 = vmatpush.msra.mxu0 0.0
      %2374 = vmatpush.msra.mxu0 0.0
      %2375 = vmatpush.msra.mxu0 0.0
      %2376 = vmatpush.msra.mxu0 0.0
      %2377 = vmatpush.msra.mxu0 %v2360
      %2378 = vmatmul.f32.gmra.mxu0 %v1361
      %v2379 = vpop.f32.mrf.mxu0
      %v2380 = vadd.f32 0.0, %v2379
      %2381 = vmatmul.f32.gmra.mxu0 %v1363
      %v2382 = vpop.f32.mrf.mxu0
      %v2383 = vadd.f32 0.0, %v2382
      %2384 = vmatmul.f32.gmra.mxu0 %v1365
      %v2385 = vpop.f32.mrf.mxu0
      %v2386 = vadd.f32 0.0, %v2385
      %2387 = vmatmul.f32.gmra.mxu0 %v1367
      %v2388 = vpop.f32.mrf.mxu0
      %v2389 = vadd.f32 0.0, %v2388
      %2390 = vmatmul.f32.gmra.mxu0 %v1369
      %v2391 = vpop.f32.mrf.mxu0
      %v2392 = vadd.f32 0.0, %v2391
      %2393 = vmatmul.f32.gmra.mxu0 %v1371
      %v2394 = vpop.f32.mrf.mxu0
      %v2395 = vadd.f32 0.0, %v2394
      %2396 = vmatmul.f32.gmra.mxu0 %v1373
      %v2397 = vpop.f32.mrf.mxu0
      %v2398 = vadd.f32 0.0, %v2397
      %2399 = vmatmul.f32.gmra.mxu0 %v1375
      %v2400 = vpop.f32.mrf.mxu0
      %v2401 = vadd.f32 0.0, %v2400
      %2402 = vmatmul.f32.gmra.mxu0 %v1377
      %v2403 = vpop.f32.mrf.mxu0
      %v2404 = vadd.f32 0.0, %v2403
      %2405 = vmatmul.f32.gmra.mxu0 %v1379
      %v2406 = vpop.f32.mrf.mxu0
      %v2407 = vadd.f32 0.0, %v2406
      %2408 = vmatmul.f32.gmra.mxu0 %v1381
      %v2409 = vpop.f32.mrf.mxu0
      %v2410 = vadd.f32 0.0, %v2409
      %2411 = vmatmul.f32.gmra.mxu0 %v1383
      %v2412 = vpop.f32.mrf.mxu0
      %v2413 = vadd.f32 0.0, %v2412
      %2414 = vmatmul.f32.gmra.mxu0 %v1385
      %v2415 = vpop.f32.mrf.mxu0
      %v2416 = vadd.f32 0.0, %v2415
      %2417 = vmatmul.f32.gmra.mxu0 %v1387
      %v2418 = vpop.f32.mrf.mxu0
      %v2419 = vadd.f32 0.0, %v2418
      %2420 = vmatmul.f32.gmra.mxu0 %v1389
      %v2421 = vpop.f32.mrf.mxu0
      %v2422 = vadd.f32 0.0, %v2421
      %2423 = vmatmul.f32.gmra.mxu0 %v1391
      %v2424 = vpop.f32.mrf.mxu0
      %v2425 = vadd.f32 0.0, %v2424
      %2426 = vmatmul.f32.gmra.mxu0 %v1393
      %v2427 = vpop.f32.mrf.mxu0
      %v2428 = vadd.f32 0.0, %v2427
      %2429 = vmatmul.f32.gmra.mxu0 %v1395
      %v2430 = vpop.f32.mrf.mxu0
      %v2431 = vadd.f32 0.0, %v2430
      %2432 = vmatmul.f32.gmra.mxu0 %v1397
      %v2433 = vpop.f32.mrf.mxu0
      %v2434 = vadd.f32 0.0, %v2433
      %2435 = vmatmul.f32.gmra.mxu0 %v1399
      %v2436 = vpop.f32.mrf.mxu0
      %v2437 = vadd.f32 0.0, %v2436
      %2438 = vmatmul.f32.gmra.mxu0 %v1401
      %v2439 = vpop.f32.mrf.mxu0
      %v2440 = vadd.f32 0.0, %v2439
      %2441 = vmatmul.f32.gmra.mxu0 %v1403
      %v2442 = vpop.f32.mrf.mxu0
      %v2443 = vadd.f32 0.0, %v2442
      %2444 = vmatmul.f32.gmra.mxu0 %v1405
      %v2445 = vpop.f32.mrf.mxu0
      %v2446 = vadd.f32 0.0, %v2445
      %2447 = vmatmul.f32.gmra.mxu0 %v1407
      %v2448 = vpop.f32.mrf.mxu0
      %v2449 = vadd.f32 0.0, %v2448
      %2450 = vmatmul.f32.gmra.mxu0 %v1409
      %v2451 = vpop.f32.mrf.mxu0
      %v2452 = vadd.f32 0.0, %v2451
      %2453 = vmatmul.f32.gmra.mxu0 %v1411
      %v2454 = vpop.f32.mrf.mxu0
      %v2455 = vadd.f32 0.0, %v2454
      %2456 = vmatmul.f32.gmra.mxu0 %v1413
      %v2457 = vpop.f32.mrf.mxu0
      %v2458 = vadd.f32 0.0, %v2457
      %2459 = vmatmul.f32.gmra.mxu0 %v1415
      %v2460 = vpop.f32.mrf.mxu0
      %v2461 = vadd.f32 0.0, %v2460
      %2462 = vmatmul.f32.gmra.mxu0 %v1417
      %v2463 = vpop.f32.mrf.mxu0
      %v2464 = vadd.f32 0.0, %v2463
      %2465 = vmatmul.f32.gmra.mxu0 %v1419
      %v2466 = vpop.f32.mrf.mxu0
      %v2467 = vadd.f32 0.0, %v2466
      %2468 = vmatmul.f32.gmra.mxu0 %v1421
      %v2469 = vpop.f32.mrf.mxu0
      %v2470 = vadd.f32 0.0, %v2469
      %2471 = vmatmul.f32.gmra.mxu0 %v1423
      %v2472 = vpop.f32.mrf.mxu0
      %v2473 = vadd.f32 0.0, %v2472
      %2474 = vmatmul.f32.gmra.mxu0 %v1425
      %v2475 = vpop.f32.mrf.mxu0
      %v2476 = vadd.f32 0.0, %v2475
      %2477 = vmatmul.f32.gmra.mxu0 %v1427
      %v2478 = vpop.f32.mrf.mxu0
      %v2479 = vadd.f32 0.0, %v2478
      %2480 = vmatmul.f32.gmra.mxu0 %v1429
      %v2481 = vpop.f32.mrf.mxu0
      %v2482 = vadd.f32 0.0, %v2481
      %2483 = vmatmul.f32.gmra.mxu0 %v1431
      %v2484 = vpop.f32.mrf.mxu0
      %v2485 = vadd.f32 0.0, %v2484
      %2486 = vmatmul.f32.gmra.mxu0 %v1433
      %v2487 = vpop.f32.mrf.mxu0
      %v2488 = vadd.f32 0.0, %v2487
      %2489 = vmatmul.f32.gmra.mxu0 %v1435
      %v2490 = vpop.f32.mrf.mxu0
      %v2491 = vadd.f32 0.0, %v2490
      %2492 = vmatmul.f32.gmra.mxu0 %v1437
      %v2493 = vpop.f32.mrf.mxu0
      %v2494 = vadd.f32 0.0, %v2493
      %2495 = vmatmul.f32.gmra.mxu0 %v1439
      %v2496 = vpop.f32.mrf.mxu0
      %v2497 = vadd.f32 0.0, %v2496
      %2498 = vmatmul.f32.gmra.mxu0 %v1441
      %v2499 = vpop.f32.mrf.mxu0
      %v2500 = vadd.f32 0.0, %v2499
      %2501 = vmatmul.f32.gmra.mxu0 %v1443
      %v2502 = vpop.f32.mrf.mxu0
      %v2503 = vadd.f32 0.0, %v2502
      %2504 = vmatmul.f32.gmra.mxu0 %v1445
      %v2505 = vpop.f32.mrf.mxu0
      %v2506 = vadd.f32 0.0, %v2505
      %2507 = vmatmul.f32.gmra.mxu0 %v1447
      %v2508 = vpop.f32.mrf.mxu0
      %v2509 = vadd.f32 0.0, %v2508
      %2510 = vmatmul.f32.gmra.mxu0 %v1449
      %v2511 = vpop.f32.mrf.mxu0
      %v2512 = vadd.f32 0.0, %v2511
      %2513 = vmatmul.f32.gmra.mxu0 %v1451
      %v2514 = vpop.f32.mrf.mxu0
      %v2515 = vadd.f32 0.0, %v2514
      %2516 = vmatmul.f32.gmra.mxu0 %v1453
      %v2517 = vpop.f32.mrf.mxu0
      %v2518 = vadd.f32 0.0, %v2517
      %2519 = vmatmul.f32.gmra.mxu0 %v1455
      %v2520 = vpop.f32.mrf.mxu0
      %v2521 = vadd.f32 0.0, %v2520
      %2522 = vmatmul.f32.gmra.mxu0 %v1457
      %v2523 = vpop.f32.mrf.mxu0
      %v2524 = vadd.f32 0.0, %v2523
      %2525 = vmatmul.f32.gmra.mxu0 %v1459
      %v2526 = vpop.f32.mrf.mxu0
      %v2527 = vadd.f32 0.0, %v2526
      %2528 = vmatmul.f32.gmra.mxu0 %v1461
      %v2529 = vpop.f32.mrf.mxu0
      %v2530 = vadd.f32 0.0, %v2529
      %2531 = vmatmul.f32.gmra.mxu0 %v1463
      %v2532 = vpop.f32.mrf.mxu0
      %v2533 = vadd.f32 0.0, %v2532
      %2534 = vmatmul.f32.gmra.mxu0 %v1465
      %v2535 = vpop.f32.mrf.mxu0
      %v2536 = vadd.f32 0.0, %v2535
      %2537 = vmatmul.f32.gmra.mxu0 %v1467
      %v2538 = vpop.f32.mrf.mxu0
      %v2539 = vadd.f32 0.0, %v2538
      %2540 = vmatmul.f32.gmra.mxu0 %v1469
      %v2541 = vpop.f32.mrf.mxu0
      %v2542 = vadd.f32 0.0, %v2541
      %2543 = vmatmul.f32.gmra.mxu0 %v1471
      %v2544 = vpop.f32.mrf.mxu0
      %v2545 = vadd.f32 0.0, %v2544
      %2546 = vmatmul.f32.gmra.mxu0 %v1473
      %v2547 = vpop.f32.mrf.mxu0
      %v2548 = vadd.f32 0.0, %v2547
      %2549 = vmatmul.f32.gmra.mxu0 %v1475
      %v2550 = vpop.f32.mrf.mxu0
      %v2551 = vadd.f32 0.0, %v2550
      %2552 = vmatmul.f32.gmra.mxu0 %v1477
      %v2553 = vpop.f32.mrf.mxu0
      %v2554 = vadd.f32 0.0, %v2553
      %2555 = vmatmul.f32.gmra.mxu0 %v1479
      %v2556 = vpop.f32.mrf.mxu0
      %v2557 = vadd.f32 0.0, %v2556
      %2558 = vmatmul.f32.gmra.mxu0 %v2351
      %v2559 = vpop.f32.mrf.mxu0
      %v2560 = vadd.f32 0.0, %v2559
      %2561 = vmatmul.f32.gmra.mxu0 %v2353
      %v2562 = vpop.f32.mrf.mxu0
      %v2563 = vadd.f32 0.0, %v2562
      %2564 = vmatmul.f32.gmra.mxu0 %v2355
      %v2565 = vpop.f32.mrf.mxu0
      %v2566 = vadd.f32 0.0, %v2565
      %2567 = vmatmul.f32.gmra.mxu0 %v2357
      %v2568 = vpop.f32.mrf.mxu0
      %v2569 = vadd.f32 0.0, %v2568
      %2570 = vdwg.mxu0
      %v2571 = vadd.f32 %v2277, %v2380
      %v2572 = vadd.f32 %v2278, %v2383
      %v2573 = vadd.f32 %v2279, %v2386
      %v2574 = vadd.f32 %v2280, %v2389
      %v2575 = vadd.f32 %v2281, %v2392
      %v2576 = vadd.f32 %v2282, %v2395
      %v2577 = vadd.f32 %v2283, %v2398
      %v2578 = vadd.f32 %v2284, %v2401
      %v2579 = vadd.f32 %v2285, %v2404
      %v2580 = vadd.f32 %v2286, %v2407
      %v2581 = vadd.f32 %v2287, %v2410
      %v2582 = vadd.f32 %v2288, %v2413
      %v2583 = vadd.f32 %v2289, %v2416
      %v2584 = vadd.f32 %v2290, %v2419
      %v2585 = vadd.f32 %v2291, %v2422
      %v2586 = vadd.f32 %v2292, %v2425
      %v2587 = vadd.f32 %v2293, %v2428
      %v2588 = vadd.f32 %v2294, %v2431
      %v2589 = vadd.f32 %v2295, %v2434
      %v2590 = vadd.f32 %v2296, %v2437
      %v2591 = vadd.f32 %v2297, %v2440
      %v2592 = vadd.f32 %v2298, %v2443
      %v2593 = vadd.f32 %v2299, %v2446
      %v2594 = vadd.f32 %v2300, %v2449
      %v2595 = vadd.f32 %v2301, %v2452
      %v2596 = vadd.f32 %v2302, %v2455
      %v2597 = vadd.f32 %v2303, %v2458
      %v2598 = vadd.f32 %v2304, %v2461
      %v2599 = vadd.f32 %v2305, %v2464
      %v2600 = vadd.f32 %v2306, %v2467
      %v2601 = vadd.f32 %v2307, %v2470
      %v2602 = vadd.f32 %v2308, %v2473
      %v2603 = vadd.f32 %v2309, %v2476
      %v2604 = vadd.f32 %v2310, %v2479
      %v2605 = vadd.f32 %v2311, %v2482
      %v2606 = vadd.f32 %v2312, %v2485
      %v2607 = vadd.f32 %v2313, %v2488
      %v2608 = vadd.f32 %v2314, %v2491
      %v2609 = vadd.f32 %v2315, %v2494
      %v2610 = vadd.f32 %v2316, %v2497
      %v2611 = vadd.f32 %v2317, %v2500
      %v2612 = vadd.f32 %v2318, %v2503
      %v2613 = vadd.f32 %v2319, %v2506
      %v2614 = vadd.f32 %v2320, %v2509
      %v2615 = vadd.f32 %v2321, %v2512
      %v2616 = vadd.f32 %v2322, %v2515
      %v2617 = vadd.f32 %v2323, %v2518
      %v2618 = vadd.f32 %v2324, %v2521
      %v2619 = vadd.f32 %v2325, %v2524
      %v2620 = vadd.f32 %v2326, %v2527
      %v2621 = vadd.f32 %v2327, %v2530
      %v2622 = vadd.f32 %v2328, %v2533
      %v2623 = vadd.f32 %v2329, %v2536
      %v2624 = vadd.f32 %v2330, %v2539
      %v2625 = vadd.f32 %v2331, %v2542
      %v2626 = vadd.f32 %v2332, %v2545
      %v2627 = vadd.f32 %v2333, %v2548
      %v2628 = vadd.f32 %v2334, %v2551
      %v2629 = vadd.f32 %v2335, %v2554
      %v2630 = vadd.f32 %v2336, %v2557
      %v2631 = vadd.f32 %v2337, %v2560
      %v2632 = vadd.f32 %v2338, %v2563
      %v2633 = vadd.f32 %v2339, %v2566
      %v2634 = vadd.f32 %v2340, %v2569
      %v2635 = vld [vmem:[%s1 + $0x18] sm:$0xf]
      %v2637 = vsel %vm525, %v293, 0
      %v2640 = vsel %vm525, %v294, 0
      %v2643 = vsel %vm525, %v295, 0
      %v2646 = vsel %vm525, %v296, 0
      %v2649 = vsel %vm654, %v2635, 0
      %2651 = vmatpush.msra.mxu0 0.0
      %2652 = vmatpush.msra.mxu0 0.0
      %2653 = vmatpush.msra.mxu0 0.0
      %2654 = vmatpush.msra.mxu0 0.0
      %2655 = vmatpush.msra.mxu0 0.0
      %2656 = vmatpush.msra.mxu0 0.0
      %2657 = vmatpush.msra.mxu0 0.0
      %2658 = vmatpush.msra.mxu0 0.0
      %2659 = vmatpush.msra.mxu0 0.0
      %2660 = vmatpush.msra.mxu0 0.0
      %2661 = vmatpush.msra.mxu0 0.0
      %2662 = vmatpush.msra.mxu0 0.0
      %2663 = vmatpush.msra.mxu0 0.0
      %2664 = vmatpush.msra.mxu0 0.0
      %2665 = vmatpush.msra.mxu0 0.0
      %2666 = vmatpush.msra.mxu0 %v2649
      %2667 = vmatmul.f32.gmra.mxu0 %v883
      %v2668 = vpop.f32.mrf.mxu0
      %v2669 = vadd.f32 0.0, %v2668
      %2670 = vmatmul.f32.gmra.mxu0 %v885
      %v2671 = vpop.f32.mrf.mxu0
      %v2672 = vadd.f32 0.0, %v2671
      %2673 = vmatmul.f32.gmra.mxu0 %v887
      %v2674 = vpop.f32.mrf.mxu0
      %v2675 = vadd.f32 0.0, %v2674
      %2676 = vmatmul.f32.gmra.mxu0 %v889
      %v2677 = vpop.f32.mrf.mxu0
      %v2678 = vadd.f32 0.0, %v2677
      %2679 = vmatmul.f32.gmra.mxu0 %v891
      %v2680 = vpop.f32.mrf.mxu0
      %v2681 = vadd.f32 0.0, %v2680
      %2682 = vmatmul.f32.gmra.mxu0 %v893
      %v2683 = vpop.f32.mrf.mxu0
      %v2684 = vadd.f32 0.0, %v2683
      %2685 = vmatmul.f32.gmra.mxu0 %v895
      %v2686 = vpop.f32.mrf.mxu0
      %v2687 = vadd.f32 0.0, %v2686
      %2688 = vmatmul.f32.gmra.mxu0 %v897
      %v2689 = vpop.f32.mrf.mxu0
      %v2690 = vadd.f32 0.0, %v2689
      %2691 = vmatmul.f32.gmra.mxu0 %v899
      %v2692 = vpop.f32.mrf.mxu0
      %v2693 = vadd.f32 0.0, %v2692
      %2694 = vmatmul.f32.gmra.mxu0 %v901
      %v2695 = vpop.f32.mrf.mxu0
      %v2696 = vadd.f32 0.0, %v2695
      %2697 = vmatmul.f32.gmra.mxu0 %v903
      %v2698 = vpop.f32.mrf.mxu0
      %v2699 = vadd.f32 0.0, %v2698
      %2700 = vmatmul.f32.gmra.mxu0 %v905
      %v2701 = vpop.f32.mrf.mxu0
      %v2702 = vadd.f32 0.0, %v2701
      %2703 = vmatmul.f32.gmra.mxu0 %v907
      %v2704 = vpop.f32.mrf.mxu0
      %v2705 = vadd.f32 0.0, %v2704
      %2706 = vmatmul.f32.gmra.mxu0 %v909
      %v2707 = vpop.f32.mrf.mxu0
      %v2708 = vadd.f32 0.0, %v2707
      %2709 = vmatmul.f32.gmra.mxu0 %v911
      %v2710 = vpop.f32.mrf.mxu0
      %v2711 = vadd.f32 0.0, %v2710
      %2712 = vmatmul.f32.gmra.mxu0 %v913
      %v2713 = vpop.f32.mrf.mxu0
      %v2714 = vadd.f32 0.0, %v2713
      %2715 = vmatmul.f32.gmra.mxu0 %v915
      %v2716 = vpop.f32.mrf.mxu0
      %v2717 = vadd.f32 0.0, %v2716
      %2718 = vmatmul.f32.gmra.mxu0 %v917
      %v2719 = vpop.f32.mrf.mxu0
      %v2720 = vadd.f32 0.0, %v2719
      %2721 = vmatmul.f32.gmra.mxu0 %v919
      %v2722 = vpop.f32.mrf.mxu0
      %v2723 = vadd.f32 0.0, %v2722
      %2724 = vmatmul.f32.gmra.mxu0 %v921
      %v2725 = vpop.f32.mrf.mxu0
      %v2726 = vadd.f32 0.0, %v2725
      %2727 = vmatmul.f32.gmra.mxu0 %v923
      %v2728 = vpop.f32.mrf.mxu0
      %v2729 = vadd.f32 0.0, %v2728
      %2730 = vmatmul.f32.gmra.mxu0 %v925
      %v2731 = vpop.f32.mrf.mxu0
      %v2732 = vadd.f32 0.0, %v2731
      %2733 = vmatmul.f32.gmra.mxu0 %v927
      %v2734 = vpop.f32.mrf.mxu0
      %v2735 = vadd.f32 0.0, %v2734
      %2736 = vmatmul.f32.gmra.mxu0 %v929
      %v2737 = vpop.f32.mrf.mxu0
      %v2738 = vadd.f32 0.0, %v2737
      %2739 = vmatmul.f32.gmra.mxu0 %v931
      %v2740 = vpop.f32.mrf.mxu0
      %v2741 = vadd.f32 0.0, %v2740
      %2742 = vmatmul.f32.gmra.mxu0 %v933
      %v2743 = vpop.f32.mrf.mxu0
      %v2744 = vadd.f32 0.0, %v2743
      %2745 = vmatmul.f32.gmra.mxu0 %v935
      %v2746 = vpop.f32.mrf.mxu0
      %v2747 = vadd.f32 0.0, %v2746
      %2748 = vmatmul.f32.gmra.mxu0 %v937
      %v2749 = vpop.f32.mrf.mxu0
      %v2750 = vadd.f32 0.0, %v2749
      %2751 = vmatmul.f32.gmra.mxu0 %v939
      %v2752 = vpop.f32.mrf.mxu0
      %v2753 = vadd.f32 0.0, %v2752
      %2754 = vmatmul.f32.gmra.mxu0 %v941
      %v2755 = vpop.f32.mrf.mxu0
      %v2756 = vadd.f32 0.0, %v2755
      %2757 = vmatmul.f32.gmra.mxu0 %v943
      %v2758 = vpop.f32.mrf.mxu0
      %v2759 = vadd.f32 0.0, %v2758
      %2760 = vmatmul.f32.gmra.mxu0 %v945
      %v2761 = vpop.f32.mrf.mxu0
      %v2762 = vadd.f32 0.0, %v2761
      %2763 = vmatmul.f32.gmra.mxu0 %v947
      %v2764 = vpop.f32.mrf.mxu0
      %v2765 = vadd.f32 0.0, %v2764
      %2766 = vmatmul.f32.gmra.mxu0 %v949
      %v2767 = vpop.f32.mrf.mxu0
      %v2768 = vadd.f32 0.0, %v2767
      %2769 = vmatmul.f32.gmra.mxu0 %v951
      %v2770 = vpop.f32.mrf.mxu0
      %v2771 = vadd.f32 0.0, %v2770
      %2772 = vmatmul.f32.gmra.mxu0 %v953
      %v2773 = vpop.f32.mrf.mxu0
      %v2774 = vadd.f32 0.0, %v2773
      %2775 = vmatmul.f32.gmra.mxu0 %v955
      %v2776 = vpop.f32.mrf.mxu0
      %v2777 = vadd.f32 0.0, %v2776
      %2778 = vmatmul.f32.gmra.mxu0 %v957
      %v2779 = vpop.f32.mrf.mxu0
      %v2780 = vadd.f32 0.0, %v2779
      %2781 = vmatmul.f32.gmra.mxu0 %v959
      %v2782 = vpop.f32.mrf.mxu0
      %v2783 = vadd.f32 0.0, %v2782
      %2784 = vmatmul.f32.gmra.mxu0 %v961
      %v2785 = vpop.f32.mrf.mxu0
      %v2786 = vadd.f32 0.0, %v2785
      %2787 = vmatmul.f32.gmra.mxu0 %v963
      %v2788 = vpop.f32.mrf.mxu0
      %v2789 = vadd.f32 0.0, %v2788
      %2790 = vmatmul.f32.gmra.mxu0 %v965
      %v2791 = vpop.f32.mrf.mxu0
      %v2792 = vadd.f32 0.0, %v2791
      %2793 = vmatmul.f32.gmra.mxu0 %v967
      %v2794 = vpop.f32.mrf.mxu0
      %v2795 = vadd.f32 0.0, %v2794
      %2796 = vmatmul.f32.gmra.mxu0 %v969
      %v2797 = vpop.f32.mrf.mxu0
      %v2798 = vadd.f32 0.0, %v2797
      %2799 = vmatmul.f32.gmra.mxu0 %v971
      %v2800 = vpop.f32.mrf.mxu0
      %v2801 = vadd.f32 0.0, %v2800
      %2802 = vmatmul.f32.gmra.mxu0 %v973
      %v2803 = vpop.f32.mrf.mxu0
      %v2804 = vadd.f32 0.0, %v2803
      %2805 = vmatmul.f32.gmra.mxu0 %v975
      %v2806 = vpop.f32.mrf.mxu0
      %v2807 = vadd.f32 0.0, %v2806
      %2808 = vmatmul.f32.gmra.mxu0 %v977
      %v2809 = vpop.f32.mrf.mxu0
      %v2810 = vadd.f32 0.0, %v2809
      %2811 = vmatmul.f32.gmra.mxu0 %v979
      %v2812 = vpop.f32.mrf.mxu0
      %v2813 = vadd.f32 0.0, %v2812
      %2814 = vmatmul.f32.gmra.mxu0 %v981
      %v2815 = vpop.f32.mrf.mxu0
      %v2816 = vadd.f32 0.0, %v2815
      %2817 = vmatmul.f32.gmra.mxu0 %v983
      %v2818 = vpop.f32.mrf.mxu0
      %v2819 = vadd.f32 0.0, %v2818
      %2820 = vmatmul.f32.gmra.mxu0 %v985
      %v2821 = vpop.f32.mrf.mxu0
      %v2822 = vadd.f32 0.0, %v2821
      %2823 = vmatmul.f32.gmra.mxu0 %v987
      %v2824 = vpop.f32.mrf.mxu0
      %v2825 = vadd.f32 0.0, %v2824
      %2826 = vmatmul.f32.gmra.mxu0 %v989
      %v2827 = vpop.f32.mrf.mxu0
      %v2828 = vadd.f32 0.0, %v2827
      %2829 = vmatmul.f32.gmra.mxu0 %v991
      %v2830 = vpop.f32.mrf.mxu0
      %v2831 = vadd.f32 0.0, %v2830
      %2832 = vmatmul.f32.gmra.mxu0 %v993
      %v2833 = vpop.f32.mrf.mxu0
      %v2834 = vadd.f32 0.0, %v2833
      %2835 = vmatmul.f32.gmra.mxu0 %v1759
      %v2836 = vpop.f32.mrf.mxu0
      %v2837 = vadd.f32 0.0, %v2836
      %2838 = vmatmul.f32.gmra.mxu0 %v1762
      %v2839 = vpop.f32.mrf.mxu0
      %v2840 = vadd.f32 0.0, %v2839
      %2841 = vmatmul.f32.gmra.mxu0 %v1765
      %v2842 = vpop.f32.mrf.mxu0
      %v2843 = vadd.f32 0.0, %v2842
      %2844 = vmatmul.f32.gmra.mxu0 %v1768
      %v2845 = vpop.f32.mrf.mxu0
      %v2846 = vadd.f32 0.0, %v2845
      %2847 = vmatmul.f32.gmra.mxu0 %v2637
      %v2848 = vpop.f32.mrf.mxu0
      %v2849 = vadd.f32 0.0, %v2848
      %2850 = vmatmul.f32.gmra.mxu0 %v2640
      %v2851 = vpop.f32.mrf.mxu0
      %v2852 = vadd.f32 0.0, %v2851
      %2853 = vmatmul.f32.gmra.mxu0 %v2643
      %v2854 = vpop.f32.mrf.mxu0
      %v2855 = vadd.f32 0.0, %v2854
      %2856 = vmatmul.f32.gmra.mxu0 %v2646
      %v2857 = vpop.f32.mrf.mxu0
      %v2858 = vadd.f32 0.0, %v2857
      %2859 = vdwg.mxu0
      %v2860 = vadd.f32 %v2571, %v2669
      %v2861 = vadd.f32 %v2572, %v2672
      %v2862 = vadd.f32 %v2573, %v2675
      %v2863 = vadd.f32 %v2574, %v2678
      %v2864 = vadd.f32 %v2575, %v2681
      %v2865 = vadd.f32 %v2576, %v2684
      %v2866 = vadd.f32 %v2577, %v2687
      %v2867 = vadd.f32 %v2578, %v2690
      %v2868 = vadd.f32 %v2579, %v2693
      %v2869 = vadd.f32 %v2580, %v2696
      %v2870 = vadd.f32 %v2581, %v2699
      %v2871 = vadd.f32 %v2582, %v2702
      %v2872 = vadd.f32 %v2583, %v2705
      %v2873 = vadd.f32 %v2584, %v2708
      %v2874 = vadd.f32 %v2585, %v2711
      %v2875 = vadd.f32 %v2586, %v2714
      %v2876 = vadd.f32 %v2587, %v2717
      %v2877 = vadd.f32 %v2588, %v2720
      %v2878 = vadd.f32 %v2589, %v2723
      %v2879 = vadd.f32 %v2590, %v2726
      %v2880 = vadd.f32 %v2591, %v2729
      %v2881 = vadd.f32 %v2592, %v2732
      %v2882 = vadd.f32 %v2593, %v2735
      %v2883 = vadd.f32 %v2594, %v2738
      %v2884 = vadd.f32 %v2595, %v2741
      %v2885 = vadd.f32 %v2596, %v2744
      %v2886 = vadd.f32 %v2597, %v2747
      %v2887 = vadd.f32 %v2598, %v2750
      %v2888 = vadd.f32 %v2599, %v2753
      %v2889 = vadd.f32 %v2600, %v2756
      %v2890 = vadd.f32 %v2601, %v2759
      %v2891 = vadd.f32 %v2602, %v2762
      %v2892 = vadd.f32 %v2603, %v2765
      %v2893 = vadd.f32 %v2604, %v2768
      %v2894 = vadd.f32 %v2605, %v2771
      %v2895 = vadd.f32 %v2606, %v2774
      %v2896 = vadd.f32 %v2607, %v2777
      %v2897 = vadd.f32 %v2608, %v2780
      %v2898 = vadd.f32 %v2609, %v2783
      %v2899 = vadd.f32 %v2610, %v2786
      %v2900 = vadd.f32 %v2611, %v2789
      %v2901 = vadd.f32 %v2612, %v2792
      %v2902 = vadd.f32 %v2613, %v2795
      %v2903 = vadd.f32 %v2614, %v2798
      %v2904 = vadd.f32 %v2615, %v2801
      %v2905 = vadd.f32 %v2616, %v2804
      %v2906 = vadd.f32 %v2617, %v2807
      %v2907 = vadd.f32 %v2618, %v2810
      %v2908 = vadd.f32 %v2619, %v2813
      %v2909 = vadd.f32 %v2620, %v2816
      %v2910 = vadd.f32 %v2621, %v2819
      %v2911 = vadd.f32 %v2622, %v2822
      %v2912 = vadd.f32 %v2623, %v2825
      %v2913 = vadd.f32 %v2624, %v2828
      %v2914 = vadd.f32 %v2625, %v2831
      %v2915 = vadd.f32 %v2626, %v2834
      %v2916 = vadd.f32 %v2627, %v2837
      %v2917 = vadd.f32 %v2628, %v2840
      %v2918 = vadd.f32 %v2629, %v2843
      %v2919 = vadd.f32 %v2630, %v2846
      %v2920 = vadd.f32 %v2631, %v2849
      %v2921 = vadd.f32 %v2632, %v2852
      %v2922 = vadd.f32 %v2633, %v2855
      %v2923 = vadd.f32 %v2634, %v2858
      %v2925 = vrot.slane %v293, 1
      %v2926 = vrot.slane %v294, 1
      %v2927 = vsel %vm379, %v2925, %v2926
      %v2928 = vrot.slane %v295, 1
      %v2929 = vsel %vm379, %v2926, %v2928
      %v2930 = vrot.slane %v296, 1
      %v2931 = vsel %vm379, %v2928, %v2930
      %v2932 = vrot.slane %v297, 1
      %v2933 = vsel %vm379, %v2930, %v2932
      %v2934 = vld [vmem:[%s1 + $0x1c] sm:$0xf]
      %v2935 = vsel %vm525, %v2927, 0
      %v2937 = vsel %vm525, %v2929, 0
      %v2939 = vsel %vm525, %v2931, 0
      %v2941 = vsel %vm525, %v2933, 0
      %v2944 = vsel %vm654, %v2934, 0
      %2946 = vmatpush.msra.mxu0 0.0
      %2947 = vmatpush.msra.mxu0 0.0
      %2948 = vmatpush.msra.mxu0 0.0
      %2949 = vmatpush.msra.mxu0 0.0
      %2950 = vmatpush.msra.mxu0 0.0
      %2951 = vmatpush.msra.mxu0 0.0
      %2952 = vmatpush.msra.mxu0 0.0
      %2953 = vmatpush.msra.mxu0 0.0
      %2954 = vmatpush.msra.mxu0 0.0
      %2955 = vmatpush.msra.mxu0 0.0
      %2956 = vmatpush.msra.mxu0 0.0
      %2957 = vmatpush.msra.mxu0 0.0
      %2958 = vmatpush.msra.mxu0 0.0
      %2959 = vmatpush.msra.mxu0 0.0
      %2960 = vmatpush.msra.mxu0 0.0
      %2961 = vmatpush.msra.mxu0 %v2944
      %2962 = vmatmul.f32.gmra.mxu0 %v542
      %v2963 = vpop.f32.mrf.mxu0
      %v2964 = vadd.f32 0.0, %v2963
      %2965 = vmatmul.f32.gmra.mxu0 %v544
      %v2966 = vpop.f32.mrf.mxu0
      %v2967 = vadd.f32 0.0, %v2966
      %2968 = vmatmul.f32.gmra.mxu0 %v546
      %v2969 = vpop.f32.mrf.mxu0
      %v2970 = vadd.f32 0.0, %v2969
      %2971 = vmatmul.f32.gmra.mxu0 %v548
      %v2972 = vpop.f32.mrf.mxu0
      %v2973 = vadd.f32 0.0, %v2972
      %2974 = vmatmul.f32.gmra.mxu0 %v550
      %v2975 = vpop.f32.mrf.mxu0
      %v2976 = vadd.f32 0.0, %v2975
      %2977 = vmatmul.f32.gmra.mxu0 %v552
      %v2978 = vpop.f32.mrf.mxu0
      %v2979 = vadd.f32 0.0, %v2978
      %2980 = vmatmul.f32.gmra.mxu0 %v554
      %v2981 = vpop.f32.mrf.mxu0
      %v2982 = vadd.f32 0.0, %v2981
      %2983 = vmatmul.f32.gmra.mxu0 %v556
      %v2984 = vpop.f32.mrf.mxu0
      %v2985 = vadd.f32 0.0, %v2984
      %2986 = vmatmul.f32.gmra.mxu0 %v558
      %v2987 = vpop.f32.mrf.mxu0
      %v2988 = vadd.f32 0.0, %v2987
      %2989 = vmatmul.f32.gmra.mxu0 %v560
      %v2990 = vpop.f32.mrf.mxu0
      %v2991 = vadd.f32 0.0, %v2990
      %2992 = vmatmul.f32.gmra.mxu0 %v562
      %v2993 = vpop.f32.mrf.mxu0
      %v2994 = vadd.f32 0.0, %v2993
      %2995 = vmatmul.f32.gmra.mxu0 %v564
      %v2996 = vpop.f32.mrf.mxu0
      %v2997 = vadd.f32 0.0, %v2996
      %2998 = vmatmul.f32.gmra.mxu0 %v566
      %v2999 = vpop.f32.mrf.mxu0
      %v3000 = vadd.f32 0.0, %v2999
      %3001 = vmatmul.f32.gmra.mxu0 %v568
      %v3002 = vpop.f32.mrf.mxu0
      %v3003 = vadd.f32 0.0, %v3002
      %3004 = vmatmul.f32.gmra.mxu0 %v570
      %v3005 = vpop.f32.mrf.mxu0
      %v3006 = vadd.f32 0.0, %v3005
      %3007 = vmatmul.f32.gmra.mxu0 %v572
      %v3008 = vpop.f32.mrf.mxu0
      %v3009 = vadd.f32 0.0, %v3008
      %3010 = vmatmul.f32.gmra.mxu0 %v574
      %v3011 = vpop.f32.mrf.mxu0
      %v3012 = vadd.f32 0.0, %v3011
      %3013 = vmatmul.f32.gmra.mxu0 %v576
      %v3014 = vpop.f32.mrf.mxu0
      %v3015 = vadd.f32 0.0, %v3014
      %3016 = vmatmul.f32.gmra.mxu0 %v578
      %v3017 = vpop.f32.mrf.mxu0
      %v3018 = vadd.f32 0.0, %v3017
      %3019 = vmatmul.f32.gmra.mxu0 %v580
      %v3020 = vpop.f32.mrf.mxu0
      %v3021 = vadd.f32 0.0, %v3020
      %3022 = vmatmul.f32.gmra.mxu0 %v582
      %v3023 = vpop.f32.mrf.mxu0
      %v3024 = vadd.f32 0.0, %v3023
      %3025 = vmatmul.f32.gmra.mxu0 %v584
      %v3026 = vpop.f32.mrf.mxu0
      %v3027 = vadd.f32 0.0, %v3026
      %3028 = vmatmul.f32.gmra.mxu0 %v586
      %v3029 = vpop.f32.mrf.mxu0
      %v3030 = vadd.f32 0.0, %v3029
      %3031 = vmatmul.f32.gmra.mxu0 %v588
      %v3032 = vpop.f32.mrf.mxu0
      %v3033 = vadd.f32 0.0, %v3032
      %3034 = vmatmul.f32.gmra.mxu0 %v590
      %v3035 = vpop.f32.mrf.mxu0
      %v3036 = vadd.f32 0.0, %v3035
      %3037 = vmatmul.f32.gmra.mxu0 %v592
      %v3038 = vpop.f32.mrf.mxu0
      %v3039 = vadd.f32 0.0, %v3038
      %3040 = vmatmul.f32.gmra.mxu0 %v594
      %v3041 = vpop.f32.mrf.mxu0
      %v3042 = vadd.f32 0.0, %v3041
      %3043 = vmatmul.f32.gmra.mxu0 %v596
      %v3044 = vpop.f32.mrf.mxu0
      %v3045 = vadd.f32 0.0, %v3044
      %3046 = vmatmul.f32.gmra.mxu0 %v598
      %v3047 = vpop.f32.mrf.mxu0
      %v3048 = vadd.f32 0.0, %v3047
      %3049 = vmatmul.f32.gmra.mxu0 %v600
      %v3050 = vpop.f32.mrf.mxu0
      %v3051 = vadd.f32 0.0, %v3050
      %3052 = vmatmul.f32.gmra.mxu0 %v602
      %v3053 = vpop.f32.mrf.mxu0
      %v3054 = vadd.f32 0.0, %v3053
      %3055 = vmatmul.f32.gmra.mxu0 %v604
      %v3056 = vpop.f32.mrf.mxu0
      %v3057 = vadd.f32 0.0, %v3056
      %3058 = vmatmul.f32.gmra.mxu0 %v606
      %v3059 = vpop.f32.mrf.mxu0
      %v3060 = vadd.f32 0.0, %v3059
      %3061 = vmatmul.f32.gmra.mxu0 %v608
      %v3062 = vpop.f32.mrf.mxu0
      %v3063 = vadd.f32 0.0, %v3062
      %3064 = vmatmul.f32.gmra.mxu0 %v610
      %v3065 = vpop.f32.mrf.mxu0
      %v3066 = vadd.f32 0.0, %v3065
      %3067 = vmatmul.f32.gmra.mxu0 %v612
      %v3068 = vpop.f32.mrf.mxu0
      %v3069 = vadd.f32 0.0, %v3068
      %3070 = vmatmul.f32.gmra.mxu0 %v614
      %v3071 = vpop.f32.mrf.mxu0
      %v3072 = vadd.f32 0.0, %v3071
      %3073 = vmatmul.f32.gmra.mxu0 %v616
      %v3074 = vpop.f32.mrf.mxu0
      %v3075 = vadd.f32 0.0, %v3074
      %3076 = vmatmul.f32.gmra.mxu0 %v618
      %v3077 = vpop.f32.mrf.mxu0
      %v3078 = vadd.f32 0.0, %v3077
      %3079 = vmatmul.f32.gmra.mxu0 %v620
      %v3080 = vpop.f32.mrf.mxu0
      %v3081 = vadd.f32 0.0, %v3080
      %3082 = vmatmul.f32.gmra.mxu0 %v622
      %v3083 = vpop.f32.mrf.mxu0
      %v3084 = vadd.f32 0.0, %v3083
      %3085 = vmatmul.f32.gmra.mxu0 %v624
      %v3086 = vpop.f32.mrf.mxu0
      %v3087 = vadd.f32 0.0, %v3086
      %3088 = vmatmul.f32.gmra.mxu0 %v626
      %v3089 = vpop.f32.mrf.mxu0
      %v3090 = vadd.f32 0.0, %v3089
      %3091 = vmatmul.f32.gmra.mxu0 %v628
      %v3092 = vpop.f32.mrf.mxu0
      %v3093 = vadd.f32 0.0, %v3092
      %3094 = vmatmul.f32.gmra.mxu0 %v630
      %v3095 = vpop.f32.mrf.mxu0
      %v3096 = vadd.f32 0.0, %v3095
      %3097 = vmatmul.f32.gmra.mxu0 %v632
      %v3098 = vpop.f32.mrf.mxu0
      %v3099 = vadd.f32 0.0, %v3098
      %3100 = vmatmul.f32.gmra.mxu0 %v634
      %v3101 = vpop.f32.mrf.mxu0
      %v3102 = vadd.f32 0.0, %v3101
      %3103 = vmatmul.f32.gmra.mxu0 %v636
      %v3104 = vpop.f32.mrf.mxu0
      %v3105 = vadd.f32 0.0, %v3104
      %3106 = vmatmul.f32.gmra.mxu0 %v638
      %v3107 = vpop.f32.mrf.mxu0
      %v3108 = vadd.f32 0.0, %v3107
      %3109 = vmatmul.f32.gmra.mxu0 %v640
      %v3110 = vpop.f32.mrf.mxu0
      %v3111 = vadd.f32 0.0, %v3110
      %3112 = vmatmul.f32.gmra.mxu0 %v642
      %v3113 = vpop.f32.mrf.mxu0
      %v3114 = vadd.f32 0.0, %v3113
      %3115 = vmatmul.f32.gmra.mxu0 %v644
      %v3116 = vpop.f32.mrf.mxu0
      %v3117 = vadd.f32 0.0, %v3116
      %3118 = vmatmul.f32.gmra.mxu0 %v646
      %v3119 = vpop.f32.mrf.mxu0
      %v3120 = vadd.f32 0.0, %v3119
      %3121 = vmatmul.f32.gmra.mxu0 %v648
      %v3122 = vpop.f32.mrf.mxu0
      %v3123 = vadd.f32 0.0, %v3122
      %3124 = vmatmul.f32.gmra.mxu0 %v650
      %v3125 = vpop.f32.mrf.mxu0
      %v3126 = vadd.f32 0.0, %v3125
      %3127 = vmatmul.f32.gmra.mxu0 %v652
      %v3128 = vpop.f32.mrf.mxu0
      %v3129 = vadd.f32 0.0, %v3128
      %3130 = vmatmul.f32.gmra.mxu0 %v2057
      %v3131 = vpop.f32.mrf.mxu0
      %v3132 = vadd.f32 0.0, %v3131
      %3133 = vmatmul.f32.gmra.mxu0 %v2059
      %v3134 = vpop.f32.mrf.mxu0
      %v3135 = vadd.f32 0.0, %v3134
      %3136 = vmatmul.f32.gmra.mxu0 %v2061
      %v3137 = vpop.f32.mrf.mxu0
      %v3138 = vadd.f32 0.0, %v3137
      %3139 = vmatmul.f32.gmra.mxu0 %v2063
      %v3140 = vpop.f32.mrf.mxu0
      %v3141 = vadd.f32 0.0, %v3140
      %3142 = vmatmul.f32.gmra.mxu0 %v2935
      %v3143 = vpop.f32.mrf.mxu0
      %v3144 = vadd.f32 0.0, %v3143
      %3145 = vmatmul.f32.gmra.mxu0 %v2937
      %v3146 = vpop.f32.mrf.mxu0
      %v3147 = vadd.f32 0.0, %v3146
      %3148 = vmatmul.f32.gmra.mxu0 %v2939
      %v3149 = vpop.f32.mrf.mxu0
      %v3150 = vadd.f32 0.0, %v3149
      %3151 = vmatmul.f32.gmra.mxu0 %v2941
      %v3152 = vpop.f32.mrf.mxu0
      %v3153 = vadd.f32 0.0, %v3152
      %3154 = vdwg.mxu0
      %v3155 = vadd.f32 %v2860, %v2964
      %v3156 = vadd.f32 %v2861, %v2967
      %v3157 = vadd.f32 %v2862, %v2970
      %v3158 = vadd.f32 %v2863, %v2973
      %v3159 = vadd.f32 %v2864, %v2976
      %v3160 = vadd.f32 %v2865, %v2979
      %v3161 = vadd.f32 %v2866, %v2982
      %v3162 = vadd.f32 %v2867, %v2985
      %v3163 = vadd.f32 %v2868, %v2988
      %v3164 = vadd.f32 %v2869, %v2991
      %v3165 = vadd.f32 %v2870, %v2994
      %v3166 = vadd.f32 %v2871, %v2997
      %v3167 = vadd.f32 %v2872, %v3000
      %v3168 = vadd.f32 %v2873, %v3003
      %v3169 = vadd.f32 %v2874, %v3006
      %v3170 = vadd.f32 %v2875, %v3009
      %v3171 = vadd.f32 %v2876, %v3012
      %v3172 = vadd.f32 %v2877, %v3015
      %v3173 = vadd.f32 %v2878, %v3018
      %v3174 = vadd.f32 %v2879, %v3021
      %v3175 = vadd.f32 %v2880, %v3024
      %v3176 = vadd.f32 %v2881, %v3027
      %v3177 = vadd.f32 %v2882, %v3030
      %v3178 = vadd.f32 %v2883, %v3033
      %v3179 = vadd.f32 %v2884, %v3036
      %v3180 = vadd.f32 %v2885, %v3039
      %v3181 = vadd.f32 %v2886, %v3042
      %v3182 = vadd.f32 %v2887, %v3045
      %v3183 = vadd.f32 %v2888, %v3048
      %v3184 = vadd.f32 %v2889, %v3051
      %v3185 = vadd.f32 %v2890, %v3054
      %v3186 = vadd.f32 %v2891, %v3057
      %v3187 = vadd.f32 %v2892, %v3060
      %v3188 = vadd.f32 %v2893, %v3063
      %v3189 = vadd.f32 %v2894, %v3066
      %v3190 = vadd.f32 %v2895, %v3069
      %v3191 = vadd.f32 %v2896, %v3072
      %v3192 = vadd.f32 %v2897, %v3075
      %v3193 = vadd.f32 %v2898, %v3078
      %v3194 = vadd.f32 %v2899, %v3081
      %v3195 = vadd.f32 %v2900, %v3084
      %v3196 = vadd.f32 %v2901, %v3087
      %v3197 = vadd.f32 %v2902, %v3090
      %v3198 = vadd.f32 %v2903, %v3093
      %v3199 = vadd.f32 %v2904, %v3096
      %v3200 = vadd.f32 %v2905, %v3099
      %v3201 = vadd.f32 %v2906, %v3102
      %v3202 = vadd.f32 %v2907, %v3105
      %v3203 = vadd.f32 %v2908, %v3108
      %v3204 = vadd.f32 %v2909, %v3111
      %v3205 = vadd.f32 %v2910, %v3114
      %v3206 = vadd.f32 %v2911, %v3117
      %v3207 = vadd.f32 %v2912, %v3120
      %v3208 = vadd.f32 %v2913, %v3123
      %v3209 = vadd.f32 %v2914, %v3126
      %v3210 = vadd.f32 %v2915, %v3129
      %v3211 = vadd.f32 %v2916, %v3132
      %v3212 = vadd.f32 %v2917, %v3135
      %v3213 = vadd.f32 %v2918, %v3138
      %v3214 = vadd.f32 %v2919, %v3141
      %v3215 = vadd.f32 %v2920, %v3144
      %v3216 = vadd.f32 %v2921, %v3147
      %v3217 = vadd.f32 %v2922, %v3150
      %v3218 = vadd.f32 %v2923, %v3153
      %v3219 = vrot.slane %v293, 2
      %v3220 = vrot.slane %v294, 2
      %v3221 = vsel %vm1207, %v3219, %v3220
      %v3222 = vrot.slane %v295, 2
      %v3223 = vsel %vm1207, %v3220, %v3222
      %v3224 = vrot.slane %v296, 2
      %v3225 = vsel %vm1207, %v3222, %v3224
      %v3226 = vrot.slane %v297, 2
      %v3227 = vsel %vm1207, %v3224, %v3226
      %v3228 = vld [vmem:[%s1 + $0x20] sm:$0xf]
      %v3229 = vsel %vm525, %v3221, 0
      %v3231 = vsel %vm525, %v3223, 0
      %v3233 = vsel %vm525, %v3225, 0
      %v3235 = vsel %vm525, %v3227, 0
      %v3238 = vsel %vm654, %v3228, 0
      %3240 = vmatpush.msra.mxu0 0.0
      %3241 = vmatpush.msra.mxu0 0.0
      %3242 = vmatpush.msra.mxu0 0.0
      %3243 = vmatpush.msra.mxu0 0.0
      %3244 = vmatpush.msra.mxu0 0.0
      %3245 = vmatpush.msra.mxu0 0.0
      %3246 = vmatpush.msra.mxu0 0.0
      %3247 = vmatpush.msra.mxu0 0.0
      %3248 = vmatpush.msra.mxu0 0.0
      %3249 = vmatpush.msra.mxu0 0.0
      %3250 = vmatpush.msra.mxu0 0.0
      %3251 = vmatpush.msra.mxu0 0.0
      %3252 = vmatpush.msra.mxu0 0.0
      %3253 = vmatpush.msra.mxu0 0.0
      %3254 = vmatpush.msra.mxu0 0.0
      %3255 = vmatpush.msra.mxu0 %v3238
      %3256 = vmatmul.f32.gmra.mxu0 %v1369
      %v3257 = vpop.f32.mrf.mxu0
      %v3258 = vadd.f32 0.0, %v3257
      %3259 = vmatmul.f32.gmra.mxu0 %v1371
      %v3260 = vpop.f32.mrf.mxu0
      %v3261 = vadd.f32 0.0, %v3260
      %3262 = vmatmul.f32.gmra.mxu0 %v1373
      %v3263 = vpop.f32.mrf.mxu0
      %v3264 = vadd.f32 0.0, %v3263
      %3265 = vmatmul.f32.gmra.mxu0 %v1375
      %v3266 = vpop.f32.mrf.mxu0
      %v3267 = vadd.f32 0.0, %v3266
      %3268 = vmatmul.f32.gmra.mxu0 %v1377
      %v3269 = vpop.f32.mrf.mxu0
      %v3270 = vadd.f32 0.0, %v3269
      %3271 = vmatmul.f32.gmra.mxu0 %v1379
      %v3272 = vpop.f32.mrf.mxu0
      %v3273 = vadd.f32 0.0, %v3272
      %3274 = vmatmul.f32.gmra.mxu0 %v1381
      %v3275 = vpop.f32.mrf.mxu0
      %v3276 = vadd.f32 0.0, %v3275
      %3277 = vmatmul.f32.gmra.mxu0 %v1383
      %v3278 = vpop.f32.mrf.mxu0
      %v3279 = vadd.f32 0.0, %v3278
      %3280 = vmatmul.f32.gmra.mxu0 %v1385
      %v3281 = vpop.f32.mrf.mxu0
      %v3282 = vadd.f32 0.0, %v3281
      %3283 = vmatmul.f32.gmra.mxu0 %v1387
      %v3284 = vpop.f32.mrf.mxu0
      %v3285 = vadd.f32 0.0, %v3284
      %3286 = vmatmul.f32.gmra.mxu0 %v1389
      %v3287 = vpop.f32.mrf.mxu0
      %v3288 = vadd.f32 0.0, %v3287
      %3289 = vmatmul.f32.gmra.mxu0 %v1391
      %v3290 = vpop.f32.mrf.mxu0
      %v3291 = vadd.f32 0.0, %v3290
      %3292 = vmatmul.f32.gmra.mxu0 %v1393
      %v3293 = vpop.f32.mrf.mxu0
      %v3294 = vadd.f32 0.0, %v3293
      %3295 = vmatmul.f32.gmra.mxu0 %v1395
      %v3296 = vpop.f32.mrf.mxu0
      %v3297 = vadd.f32 0.0, %v3296
      %3298 = vmatmul.f32.gmra.mxu0 %v1397
      %v3299 = vpop.f32.mrf.mxu0
      %v3300 = vadd.f32 0.0, %v3299
      %3301 = vmatmul.f32.gmra.mxu0 %v1399
      %v3302 = vpop.f32.mrf.mxu0
      %v3303 = vadd.f32 0.0, %v3302
      %3304 = vmatmul.f32.gmra.mxu0 %v1401
      %v3305 = vpop.f32.mrf.mxu0
      %v3306 = vadd.f32 0.0, %v3305
      %3307 = vmatmul.f32.gmra.mxu0 %v1403
      %v3308 = vpop.f32.mrf.mxu0
      %v3309 = vadd.f32 0.0, %v3308
      %3310 = vmatmul.f32.gmra.mxu0 %v1405
      %v3311 = vpop.f32.mrf.mxu0
      %v3312 = vadd.f32 0.0, %v3311
      %3313 = vmatmul.f32.gmra.mxu0 %v1407
      %v3314 = vpop.f32.mrf.mxu0
      %v3315 = vadd.f32 0.0, %v3314
      %3316 = vmatmul.f32.gmra.mxu0 %v1409
      %v3317 = vpop.f32.mrf.mxu0
      %v3318 = vadd.f32 0.0, %v3317
      %3319 = vmatmul.f32.gmra.mxu0 %v1411
      %v3320 = vpop.f32.mrf.mxu0
      %v3321 = vadd.f32 0.0, %v3320
      %3322 = vmatmul.f32.gmra.mxu0 %v1413
      %v3323 = vpop.f32.mrf.mxu0
      %v3324 = vadd.f32 0.0, %v3323
      %3325 = vmatmul.f32.gmra.mxu0 %v1415
      %v3326 = vpop.f32.mrf.mxu0
      %v3327 = vadd.f32 0.0, %v3326
      %3328 = vmatmul.f32.gmra.mxu0 %v1417
      %v3329 = vpop.f32.mrf.mxu0
      %v3330 = vadd.f32 0.0, %v3329
      %3331 = vmatmul.f32.gmra.mxu0 %v1419
      %v3332 = vpop.f32.mrf.mxu0
      %v3333 = vadd.f32 0.0, %v3332
      %3334 = vmatmul.f32.gmra.mxu0 %v1421
      %v3335 = vpop.f32.mrf.mxu0
      %v3336 = vadd.f32 0.0, %v3335
      %3337 = vmatmul.f32.gmra.mxu0 %v1423
      %v3338 = vpop.f32.mrf.mxu0
      %v3339 = vadd.f32 0.0, %v3338
      %3340 = vmatmul.f32.gmra.mxu0 %v1425
      %v3341 = vpop.f32.mrf.mxu0
      %v3342 = vadd.f32 0.0, %v3341
      %3343 = vmatmul.f32.gmra.mxu0 %v1427
      %v3344 = vpop.f32.mrf.mxu0
      %v3345 = vadd.f32 0.0, %v3344
      %3346 = vmatmul.f32.gmra.mxu0 %v1429
      %v3347 = vpop.f32.mrf.mxu0
      %v3348 = vadd.f32 0.0, %v3347
      %3349 = vmatmul.f32.gmra.mxu0 %v1431
      %v3350 = vpop.f32.mrf.mxu0
      %v3351 = vadd.f32 0.0, %v3350
      %3352 = vmatmul.f32.gmra.mxu0 %v1433
      %v3353 = vpop.f32.mrf.mxu0
      %v3354 = vadd.f32 0.0, %v3353
      %3355 = vmatmul.f32.gmra.mxu0 %v1435
      %v3356 = vpop.f32.mrf.mxu0
      %v3357 = vadd.f32 0.0, %v3356
      %3358 = vmatmul.f32.gmra.mxu0 %v1437
      %v3359 = vpop.f32.mrf.mxu0
      %v3360 = vadd.f32 0.0, %v3359
      %3361 = vmatmul.f32.gmra.mxu0 %v1439
      %v3362 = vpop.f32.mrf.mxu0
      %v3363 = vadd.f32 0.0, %v3362
      %3364 = vmatmul.f32.gmra.mxu0 %v1441
      %v3365 = vpop.f32.mrf.mxu0
      %v3366 = vadd.f32 0.0, %v3365
      %3367 = vmatmul.f32.gmra.mxu0 %v1443
      %v3368 = vpop.f32.mrf.mxu0
      %v3369 = vadd.f32 0.0, %v3368
      %3370 = vmatmul.f32.gmra.mxu0 %v1445
      %v3371 = vpop.f32.mrf.mxu0
      %v3372 = vadd.f32 0.0, %v3371
      %3373 = vmatmul.f32.gmra.mxu0 %v1447
      %v3374 = vpop.f32.mrf.mxu0
      %v3375 = vadd.f32 0.0, %v3374
      %3376 = vmatmul.f32.gmra.mxu0 %v1449
      %v3377 = vpop.f32.mrf.mxu0
      %v3378 = vadd.f32 0.0, %v3377
      %3379 = vmatmul.f32.gmra.mxu0 %v1451
      %v3380 = vpop.f32.mrf.mxu0
      %v3381 = vadd.f32 0.0, %v3380
      %3382 = vmatmul.f32.gmra.mxu0 %v1453
      %v3383 = vpop.f32.mrf.mxu0
      %v3384 = vadd.f32 0.0, %v3383
      %3385 = vmatmul.f32.gmra.mxu0 %v1455
      %v3386 = vpop.f32.mrf.mxu0
      %v3387 = vadd.f32 0.0, %v3386
      %3388 = vmatmul.f32.gmra.mxu0 %v1457
      %v3389 = vpop.f32.mrf.mxu0
      %v3390 = vadd.f32 0.0, %v3389
      %3391 = vmatmul.f32.gmra.mxu0 %v1459
      %v3392 = vpop.f32.mrf.mxu0
      %v3393 = vadd.f32 0.0, %v3392
      %3394 = vmatmul.f32.gmra.mxu0 %v1461
      %v3395 = vpop.f32.mrf.mxu0
      %v3396 = vadd.f32 0.0, %v3395
      %3397 = vmatmul.f32.gmra.mxu0 %v1463
      %v3398 = vpop.f32.mrf.mxu0
      %v3399 = vadd.f32 0.0, %v3398
      %3400 = vmatmul.f32.gmra.mxu0 %v1465
      %v3401 = vpop.f32.mrf.mxu0
      %v3402 = vadd.f32 0.0, %v3401
      %3403 = vmatmul.f32.gmra.mxu0 %v1467
      %v3404 = vpop.f32.mrf.mxu0
      %v3405 = vadd.f32 0.0, %v3404
      %3406 = vmatmul.f32.gmra.mxu0 %v1469
      %v3407 = vpop.f32.mrf.mxu0
      %v3408 = vadd.f32 0.0, %v3407
      %3409 = vmatmul.f32.gmra.mxu0 %v1471
      %v3410 = vpop.f32.mrf.mxu0
      %v3411 = vadd.f32 0.0, %v3410
      %3412 = vmatmul.f32.gmra.mxu0 %v1473
      %v3413 = vpop.f32.mrf.mxu0
      %v3414 = vadd.f32 0.0, %v3413
      %3415 = vmatmul.f32.gmra.mxu0 %v1475
      %v3416 = vpop.f32.mrf.mxu0
      %v3417 = vadd.f32 0.0, %v3416
      %3418 = vmatmul.f32.gmra.mxu0 %v1477
      %v3419 = vpop.f32.mrf.mxu0
      %v3420 = vadd.f32 0.0, %v3419
      %3421 = vmatmul.f32.gmra.mxu0 %v1479
      %v3422 = vpop.f32.mrf.mxu0
      %v3423 = vadd.f32 0.0, %v3422
      %3424 = vmatmul.f32.gmra.mxu0 %v2351
      %v3425 = vpop.f32.mrf.mxu0
      %v3426 = vadd.f32 0.0, %v3425
      %3427 = vmatmul.f32.gmra.mxu0 %v2353
      %v3428 = vpop.f32.mrf.mxu0
      %v3429 = vadd.f32 0.0, %v3428
      %3430 = vmatmul.f32.gmra.mxu0 %v2355
      %v3431 = vpop.f32.mrf.mxu0
      %v3432 = vadd.f32 0.0, %v3431
      %3433 = vmatmul.f32.gmra.mxu0 %v2357
      %v3434 = vpop.f32.mrf.mxu0
      %v3435 = vadd.f32 0.0, %v3434
      %3436 = vmatmul.f32.gmra.mxu0 %v3229
      %v3437 = vpop.f32.mrf.mxu0
      %v3438 = vadd.f32 0.0, %v3437
      %3439 = vmatmul.f32.gmra.mxu0 %v3231
      %v3440 = vpop.f32.mrf.mxu0
      %v3441 = vadd.f32 0.0, %v3440
      %3442 = vmatmul.f32.gmra.mxu0 %v3233
      %v3443 = vpop.f32.mrf.mxu0
      %v3444 = vadd.f32 0.0, %v3443
      %3445 = vmatmul.f32.gmra.mxu0 %v3235
      %v3446 = vpop.f32.mrf.mxu0
      %v3447 = vadd.f32 0.0, %v3446
      %3448 = vdwg.mxu0
      %v3449 = vadd.f32 %v3155, %v3258
      %v3450 = vadd.f32 %v3156, %v3261
      %v3451 = vadd.f32 %v3157, %v3264
      %v3452 = vadd.f32 %v3158, %v3267
      %v3453 = vadd.f32 %v3159, %v3270
      %v3454 = vadd.f32 %v3160, %v3273
      %v3455 = vadd.f32 %v3161, %v3276
      %v3456 = vadd.f32 %v3162, %v3279
      %v3457 = vadd.f32 %v3163, %v3282
      %v3458 = vadd.f32 %v3164, %v3285
      %v3459 = vadd.f32 %v3165, %v3288
      %v3460 = vadd.f32 %v3166, %v3291
      %v3461 = vadd.f32 %v3167, %v3294
      %v3462 = vadd.f32 %v3168, %v3297
      %v3463 = vadd.f32 %v3169, %v3300
      %v3464 = vadd.f32 %v3170, %v3303
      %v3465 = vadd.f32 %v3171, %v3306
      %v3466 = vadd.f32 %v3172, %v3309
      %v3467 = vadd.f32 %v3173, %v3312
      %v3468 = vadd.f32 %v3174, %v3315
      %v3469 = vadd.f32 %v3175, %v3318
      %v3470 = vadd.f32 %v3176, %v3321
      %v3471 = vadd.f32 %v3177, %v3324
      %v3472 = vadd.f32 %v3178, %v3327
      %v3473 = vadd.f32 %v3179, %v3330
      %v3474 = vadd.f32 %v3180, %v3333
      %v3475 = vadd.f32 %v3181, %v3336
      %v3476 = vadd.f32 %v3182, %v3339
      %v3477 = vadd.f32 %v3183, %v3342
      %v3478 = vadd.f32 %v3184, %v3345
      %v3479 = vadd.f32 %v3185, %v3348
      %v3480 = vadd.f32 %v3186, %v3351
      %v3481 = vadd.f32 %v3187, %v3354
      %v3482 = vadd.f32 %v3188, %v3357
      %v3483 = vadd.f32 %v3189, %v3360
      %v3484 = vadd.f32 %v3190, %v3363
      %v3485 = vadd.f32 %v3191, %v3366
      %v3486 = vadd.f32 %v3192, %v3369
      %v3487 = vadd.f32 %v3193, %v3372
      %v3488 = vadd.f32 %v3194, %v3375
      %v3489 = vadd.f32 %v3195, %v3378
      %v3490 = vadd.f32 %v3196, %v3381
      %v3491 = vadd.f32 %v3197, %v3384
      %v3492 = vadd.f32 %v3198, %v3387
      %v3493 = vadd.f32 %v3199, %v3390
      %v3494 = vadd.f32 %v3200, %v3393
      %v3495 = vadd.f32 %v3201, %v3396
      %v3496 = vadd.f32 %v3202, %v3399
      %v3497 = vadd.f32 %v3203, %v3402
      %v3498 = vadd.f32 %v3204, %v3405
      %v3499 = vadd.f32 %v3205, %v3408
      %v3500 = vadd.f32 %v3206, %v3411
      %v3501 = vadd.f32 %v3207, %v3414
      %v3502 = vadd.f32 %v3208, %v3417
      %v3503 = vadd.f32 %v3209, %v3420
      %v3504 = vadd.f32 %v3210, %v3423
      %v3505 = vadd.f32 %v3211, %v3426
      %v3506 = vadd.f32 %v3212, %v3429
      %v3507 = vadd.f32 %v3213, %v3432
      %v3508 = vadd.f32 %v3214, %v3435
      %v3509 = vadd.f32 %v3215, %v3438
      %v3510 = vadd.f32 %v3216, %v3441
      %v3511 = vadd.f32 %v3217, %v3444
      %v3512 = vadd.f32 %v3218, %v3447
      %v3513 = vld [vmem:[%s2] sm:$0x1]
      %v3515 = vperm.slane %v3513, 0
      %v3517 = vadd.f32 %v3449, %v3515
      %v3518 = vadd.f32 %v3450, %v3515
      %v3519 = vadd.f32 %v3451, %v3515
      %v3520 = vadd.f32 %v3452, %v3515
      %v3521 = vadd.f32 %v3453, %v3515
      %v3522 = vadd.f32 %v3454, %v3515
      %v3523 = vadd.f32 %v3455, %v3515
      %v3524 = vadd.f32 %v3456, %v3515
      %v3525 = vadd.f32 %v3457, %v3515
      %v3526 = vadd.f32 %v3458, %v3515
      %v3527 = vadd.f32 %v3459, %v3515
      %v3528 = vadd.f32 %v3460, %v3515
      %v3529 = vadd.f32 %v3461, %v3515
      %v3530 = vadd.f32 %v3462, %v3515
      %v3531 = vadd.f32 %v3463, %v3515
      %v3532 = vadd.f32 %v3464, %v3515
      %v3533 = vadd.f32 %v3465, %v3515
      %v3534 = vadd.f32 %v3466, %v3515
      %v3535 = vadd.f32 %v3467, %v3515
      %v3536 = vadd.f32 %v3468, %v3515
      %v3537 = vadd.f32 %v3469, %v3515
      %v3538 = vadd.f32 %v3470, %v3515
      %v3539 = vadd.f32 %v3471, %v3515
      %v3540 = vadd.f32 %v3472, %v3515
      %v3541 = vadd.f32 %v3473, %v3515
      %v3542 = vadd.f32 %v3474, %v3515
      %v3543 = vadd.f32 %v3475, %v3515
      %v3544 = vadd.f32 %v3476, %v3515
      %v3545 = vadd.f32 %v3477, %v3515
      %v3546 = vadd.f32 %v3478, %v3515
      %v3547 = vadd.f32 %v3479, %v3515
      %v3548 = vadd.f32 %v3480, %v3515
      %v3549 = vadd.f32 %v3481, %v3515
      %v3550 = vadd.f32 %v3482, %v3515
      %v3551 = vadd.f32 %v3483, %v3515
      %v3552 = vadd.f32 %v3484, %v3515
      %v3553 = vadd.f32 %v3485, %v3515
      %v3554 = vadd.f32 %v3486, %v3515
      %v3555 = vadd.f32 %v3487, %v3515
      %v3556 = vadd.f32 %v3488, %v3515
      %v3557 = vadd.f32 %v3489, %v3515
      %v3558 = vadd.f32 %v3490, %v3515
      %v3559 = vadd.f32 %v3491, %v3515
      %v3560 = vadd.f32 %v3492, %v3515
      %v3561 = vadd.f32 %v3493, %v3515
      %v3562 = vadd.f32 %v3494, %v3515
      %v3563 = vadd.f32 %v3495, %v3515
      %v3564 = vadd.f32 %v3496, %v3515
      %v3565 = vadd.f32 %v3497, %v3515
      %v3566 = vadd.f32 %v3498, %v3515
      %v3567 = vadd.f32 %v3499, %v3515
      %v3568 = vadd.f32 %v3500, %v3515
      %v3569 = vadd.f32 %v3501, %v3515
      %v3570 = vadd.f32 %v3502, %v3515
      %v3571 = vadd.f32 %v3503, %v3515
      %v3572 = vadd.f32 %v3504, %v3515
      %v3573 = vadd.f32 %v3505, %v3515
      %v3574 = vadd.f32 %v3506, %v3515
      %v3575 = vadd.f32 %v3507, %v3515
      %v3576 = vadd.f32 %v3508, %v3515
      %v3577 = vadd.f32 %v3509, %v3515
      %v3578 = vadd.f32 %v3510, %v3515
      %v3579 = vadd.f32 %v3511, %v3515
      %v3580 = vadd.f32 %v3512, %v3515
      %vm3581 = vcmask 64512
      %3582 = vst.msk [vmem:[%s206] sm:$0xff] %vm3581, %v3517
      %3583 = vst.msk [vmem:[%s206 + $0x8] sm:$0xff] %vm3581, %v3518
      %3584 = vst.msk [vmem:[%s206 + $0x10] sm:$0xff] %vm3581, %v3519
      %3585 = vst.msk [vmem:[%s206 + $0x18] sm:$0xff] %vm3581, %v3520
      %3586 = vst.msk [vmem:[%s206 + $0x20] sm:$0xff] %vm3581, %v3521
      %3587 = vst.msk [vmem:[%s206 + $0x28] sm:$0xff] %vm3581, %v3522
      %3588 = vst.msk [vmem:[%s206 + $0x30] sm:$0xff] %vm3581, %v3523
      %3589 = vst.msk [vmem:[%s206 + $0x38] sm:$0xff] %vm3581, %v3524
      %3590 = vst.msk [vmem:[%s206 + $0x40] sm:$0xff] %vm3581, %v3525
      %3591 = vst.msk [vmem:[%s206 + $0x48] sm:$0xff] %vm3581, %v3526
      %3592 = vst.msk [vmem:[%s206 + $0x50] sm:$0xff] %vm3581, %v3527
      %3593 = vst.msk [vmem:[%s206 + $0x58] sm:$0xff] %vm3581, %v3528
      %3594 = vst.msk [vmem:[%s206 + $0x60] sm:$0xff] %vm3581, %v3529
      %3595 = vst.msk [vmem:[%s206 + $0x68] sm:$0xff] %vm3581, %v3530
      %3596 = vst.msk [vmem:[%s206 + $0x70] sm:$0xff] %vm3581, %v3531
      %3597 = vst.msk [vmem:[%s206 + $0x78] sm:$0xff] %vm3581, %v3532
      %3598 = vst.msk [vmem:[%s206 + $0x80] sm:$0xff] %vm3581, %v3533
      %3599 = vst.msk [vmem:[%s206 + $0x88] sm:$0xff] %vm3581, %v3534
      %3600 = vst.msk [vmem:[%s206 + $0x90] sm:$0xff] %vm3581, %v3535
      %3601 = vst.msk [vmem:[%s206 + $0x98] sm:$0xff] %vm3581, %v3536
      %3602 = vst.msk [vmem:[%s206 + $0xa0] sm:$0xff] %vm3581, %v3537
      %3603 = vst.msk [vmem:[%s206 + $0xa8] sm:$0xff] %vm3581, %v3538
      %3604 = vst.msk [vmem:[%s206 + $0xb0] sm:$0xff] %vm3581, %v3539
      %3605 = vst.msk [vmem:[%s206 + $0xb8] sm:$0xff] %vm3581, %v3540
      %3606 = vst.msk [vmem:[%s206 + $0xc0] sm:$0xff] %vm3581, %v3541
      %3607 = vst.msk [vmem:[%s206 + $0xc8] sm:$0xff] %vm3581, %v3542
      %3608 = vst.msk [vmem:[%s206 + $0xd0] sm:$0xff] %vm3581, %v3543
      %3609 = vst.msk [vmem:[%s206 + $0xd8] sm:$0xff] %vm3581, %v3544
      %3610 = vst.msk [vmem:[%s206 + $0xe0] sm:$0xff] %vm3581, %v3545
      %3611 = vst.msk [vmem:[%s206 + $0xe8] sm:$0xff] %vm3581, %v3546
      %3612 = vst.msk [vmem:[%s206 + $0xf0] sm:$0xff] %vm3581, %v3547
      %3613 = vst.msk [vmem:[%s206 + $0xf8] sm:$0xff] %vm3581, %v3548
      %3614 = vst.msk [vmem:[%s206 + $0x100] sm:$0xff] %vm3581, %v3549
      %3615 = vst.msk [vmem:[%s206 + $0x108] sm:$0xff] %vm3581, %v3550
      %3616 = vst.msk [vmem:[%s206 + $0x110] sm:$0xff] %vm3581, %v3551
      %3617 = vst.msk [vmem:[%s206 + $0x118] sm:$0xff] %vm3581, %v3552
      %3618 = vst.msk [vmem:[%s206 + $0x120] sm:$0xff] %vm3581, %v3553
      %3619 = vst.msk [vmem:[%s206 + $0x128] sm:$0xff] %vm3581, %v3554
      %3620 = vst.msk [vmem:[%s206 + $0x130] sm:$0xff] %vm3581, %v3555
      %3621 = vst.msk [vmem:[%s206 + $0x138] sm:$0xff] %vm3581, %v3556
      %3622 = vst.msk [vmem:[%s206 + $0x140] sm:$0xff] %vm3581, %v3557
      %3623 = vst.msk [vmem:[%s206 + $0x148] sm:$0xff] %vm3581, %v3558
      %3624 = vst.msk [vmem:[%s206 + $0x150] sm:$0xff] %vm3581, %v3559
      %3625 = vst.msk [vmem:[%s206 + $0x158] sm:$0xff] %vm3581, %v3560
      %3626 = vst.msk [vmem:[%s206 + $0x160] sm:$0xff] %vm3581, %v3561
      %3627 = vst.msk [vmem:[%s206 + $0x168] sm:$0xff] %vm3581, %v3562
      %3628 = vst.msk [vmem:[%s206 + $0x170] sm:$0xff] %vm3581, %v3563
      %3629 = vst.msk [vmem:[%s206 + $0x178] sm:$0xff] %vm3581, %v3564
      %3630 = vst.msk [vmem:[%s206 + $0x180] sm:$0xff] %vm3581, %v3565
      %3631 = vst.msk [vmem:[%s206 + $0x188] sm:$0xff] %vm3581, %v3566
      %3632 = vst.msk [vmem:[%s206 + $0x190] sm:$0xff] %vm3581, %v3567
      %3633 = vst.msk [vmem:[%s206 + $0x198] sm:$0xff] %vm3581, %v3568
      %3634 = vst.msk [vmem:[%s206 + $0x1a0] sm:$0xff] %vm3581, %v3569
      %3635 = vst.msk [vmem:[%s206 + $0x1a8] sm:$0xff] %vm3581, %v3570
      %3636 = vst.msk [vmem:[%s206 + $0x1b0] sm:$0xff] %vm3581, %v3571
      %3637 = vst.msk [vmem:[%s206 + $0x1b8] sm:$0xff] %vm3581, %v3572
      %3638 = vst.msk [vmem:[%s206 + $0x1c0] sm:$0xff] %vm3581, %v3573
      %3639 = vst.msk [vmem:[%s206 + $0x1c8] sm:$0xff] %vm3581, %v3574
      %3640 = vst.msk [vmem:[%s206 + $0x1d0] sm:$0xff] %vm3581, %v3575
      %3641 = vst.msk [vmem:[%s206 + $0x1d8] sm:$0xff] %vm3581, %v3576
      %3642 = vst.msk [vmem:[%s206 + $0x1e0] sm:$0xff] %vm3581, %v3577
      %3643 = vst.msk [vmem:[%s206 + $0x1e8] sm:$0xff] %vm3581, %v3578
      %3644 = vst.msk [vmem:[%s206 + $0x1f0] sm:$0xff] %vm3581, %v3579
      %3645 = vst.msk [vmem:[%s206 + $0x1f8] sm:$0xff] %vm3581, %v3580
      %s3646 = smul.u32 64, %s19
      %p3647 = scmp.lt.s32.totalorder %s18, 1
      %s3648 = scalar_select %p3647, %s18, 1
      %p3649 = scmp.lt.s32.totalorder %s3646, 127
      %s3650 = scalar_select %p3649, %s3646, 127
      %s3651 = smul.addr %s3648, 128
      %s3652 = sadd.s32 %s3650, %s3651
      %s3653 = smul.addr %s3652, 8
      %s3654 = scalar_lea.vmem %s3, %s3653
      // Predicated region
      $region33: #{tpu_custom_call.1} parent=31 // pred_check
        %p3655 = pneg %p118
      $region34: #{tpu_custom_call.1} parent=31 // pred_check_branch
        %3657 = sbr.rel (%p3655) target = $region36
      $region35: #{tpu_custom_call.1} parent=31 // pred_region
        %s3658 = smul.u32 64, %s19
      $region36: #{tpu_custom_call.1} parent=31 // pred_fallthru
        _
    $region32: #{tpu_custom_call.1} parent=5 // pred_fallthru
      _
    %p3659 = scmp.le.s32.totalorder 2, %s9
    // Predicated region
    $region37: #{tpu_custom_call.1} parent=5 // pred_check
      %p3660 = pneg %p3659
    $region38: #{tpu_custom_call.1} parent=5 // pred_check_branch
      %3662 = sbr.rel (%p3660) target = $region40
    $region39: #{tpu_custom_call.1} parent=5 // pred_region
      %s3663 = ssub.s32 %s9, 2
      // Predicated region
      $region41: #{tpu_custom_call.1} parent=39 // pred_check
        %p3664 = pneg %p124
      $region42: #{tpu_custom_call.1} parent=39 // pred_check_branch
        %3666 = sbr.rel (%p3664) target = $region44
      $region43: #{tpu_custom_call.1} parent=39 // pred_region
        %s3667 = smul.u32 64, %s21
        %p3668 = scmp.lt.s32.totalorder %s20, 1
        %s3669 = scalar_select %p3668, %s20, 1
        %p3670 = scmp.lt.s32.totalorder %s3667, 127
        %s3671 = scalar_select %p3670, %s3667, 127
        %s3672 = smul.addr %s3669, 128
        %s3673 = sadd.s32 %s3671, %s3672
        %s3674 = smul.addr %s3673, 8
        %s3675 = scalar_lea.vmem %s3, %s3674
      $region44: #{tpu_custom_call.1} parent=39 // pred_fallthru
        _
    $region40: #{tpu_custom_call.1} parent=5 // pred_fallthru
      _
  $region6: #{tpu_custom_call.1} parent=0 // loop_footer
    %s13 = sadd.s32 1, %s9
  $region7: #{tpu_custom_call.1} parent=0 // loop_footer_branch
    %8 = sbr.rel target = $region3
  $region8: #{tpu_custom_call.1} parent=0 // loop_exit
    _

</llo_original>
